<compile_context>
chip_gen: v7x
topology: tpu7x:2x2x1
jax: 0.10.0
libtpu: 0.0.40
codegen_flags: <defaults>
</compile_context>

<pallas_src>
import functools

import jax
import jax.numpy as jnp
from jax.experimental import pallas as pl
from jax.experimental.pallas import tpu as pltpu


def _round_up(x, m):
    return ((x + m - 1) // m) * m


# ------------------------------------------------------------------ kernel ---
def _fused_forward_kernel(idx_ref, src_ref, thick_ref, thin_ref,
                          w1_ref, w4_ref, w7_ref,
                          o_ref, buf_ref, patch_ref, *, N, H, W, PADL):
    """Fused concat -> 3x(conv3x3 'same' + BN + ReLU) -> channel softmax.

    Internal layout: channels on sublanes, pixels (M = N*H*W) on lanes.
      activation : (C, M) float32 values; matmul inputs in patch_ref.dtype
      conv       : (Cout, 9*Cin_pad) @ (9*Cin_pad, M) single im2col MXU matmul
      'same' pad : shifted lane-slices of a lane-padded activation scratch,
                   out-of-image pixels masked to zero (no NHWC pad buffers)
    """
    M = src_ref.shape[-1]
    HW = H * W
    mmt = patch_ref.dtype                    # matmul input dtype (f32 or bf16)

    # (h, w) coordinate of every flattened pixel (constant-folded in XLA) ->
    # the four border masks, computed once and reused by all three layers.
    h_idx = idx_ref[0:1, :]
    w_idx = idx_ref[1:2, :]
    edge = {
        (-1, 0): h_idx >= 1,          # reading row h-1 is inside the image
        (+1, 0): h_idx <= H - 2,      # reading row h+1 is inside the image
        (0, -1): w_idx >= 1,          # reading col w-1 is inside the image
        (0, +1): w_idx <= W - 2,      # reading col w+1 is inside the image
    }

    # One memset covers the lane halo AND the zero-padded input channels (3->8).
    buf_ref[...] = jnp.zeros_like(buf_ref)

    def conv_bn_relu(cin_rows, w_ref):
        """3x3 'same' conv as one im2col matmul, then batch-stat BN + ReLU.

        Reads the (cin_rows, M) activation stored at buf_ref[:cin_rows,
        PADL:PADL+M]; returns the (Cout, M) float32 normalized activation.
        """
        # Build the (9*cin_rows, M) patch matrix band-by-band: each band is a
        # statically shifted lane-slice of the activation, border-masked.
        for dh in range(3):
            for dw in range(3):
                r, c = dh - 1, dw - 1
                shift = r * W + c                              # flat pixel shift
                band = buf_ref[0:cin_rows, pl.ds(PADL + shift, M)]
                mask = None
                for key in ((r, 0), (0, c)):
                    m = edge.get(key)
                    if m is not None:
                        mask = m if mask is None else jnp.logical_and(mask, m)
                if mask is not None:
                    band = jnp.where(mask, band, jnp.zeros_like(band))
                row0 = (dh * 3 + dw) * cin_rows                # sublane-aligned
                patch_ref[pl.ds(row0, cin_rows), :] = band
        patches = patch_ref[pl.ds(0, 9 * cin_rows), :]
        y = jnp.dot(w_ref[...], patches,
                    preferred_element_type=jnp.float32)        # (Cout, M) f32
        # Single-pass batch statistics: mean and E[y^2] (biased var, eps=1e-5).
        inv_m = 1.0 / M
        mean = jnp.sum(y, axis=1, keepdims=True) * inv_m
        var = jnp.sum(y * y, axis=1, keepdims=True) * inv_m - mean * mean
        return jnp.maximum((y - mean) * jax.lax.rsqrt(var + 1e-5), 0.0)

    # Layer 0 activation: rows 0..2 = (src, thick, thin); pad rows stay zero.
    buf_ref[0:1, pl.ds(PADL, M)] = src_ref[...].astype(mmt)
    buf_ref[1:2, pl.ds(PADL, M)] = thick_ref[...].astype(mmt)
    buf_ref[2:3, pl.ds(PADL, M)] = thin_ref[...].astype(mmt)

    cin0 = w1_ref.shape[1] // 9
    a1 = conv_bn_relu(cin0, w1_ref)                    # (C1, M)

    c1 = w4_ref.shape[1] // 9
    buf_ref[0:c1, pl.ds(PADL, M)] = a1.astype(mmt)
    a4 = conv_bn_relu(c1, w4_ref)                      # (C2, M)

    c2 = w7_ref.shape[1] // 9
    buf_ref[0:c2, pl.ds(PADL, M)] = a4.astype(mmt)
    # conv7 bias dropped: a per-channel constant added right before a BatchNorm
    # (gamma=1, beta=0, batch statistics) is removed exactly by the mean.
    a7 = conv_bn_relu(c2, w7_ref)                      # (P, M)

    # Channel softmax (channels on sublanes) with an exact f32 divide.
    mx = jnp.max(a7, axis=0, keepdims=True)
    e = jnp.exp(a7 - mx)
    probs = e * (1.0 / jnp.sum(e, axis=0, keepdims=True))

    # Lane-dense output (N, P, H*W): last dim is a multiple of 128, and the
    # per-sample column slices of probs are 128-aligned.
    for n in range(N):
        o_ref[n, :, :] = probs[:, n * HW:(n + 1) * HW].astype(o_ref.dtype)


# ----------------------------------------------------------------- wrapper ---
def _flatten_conv_weight(w_oihw, cin_pad, dtype):
    """OIHW (Cout, Cin, 3, 3) -> (Cout, 9*cin_pad), flattened (dh, dw, cin)."""
    cout, cin, kh, kw = w_oihw.shape
    w = jnp.transpose(w_oihw, (0, 2, 3, 1))              # (Cout, kh, kw, Cin)
    if cin_pad != cin:
        w = jnp.pad(w, ((0, 0), (0, 0), (0, 0), (0, cin_pad - cin)))
    return w.reshape(cout, kh * kw * cin_pad).astype(dtype)


@functools.partial(jax.jit, static_argnames=("matmul_dtype",))
def base_forward(input_src, input_thick, input_thin,
                 conv1_w, conv4_w, conv7_w, conv7_b=None,
                 matmul_dtype=jnp.float32):
    """Forward pass of `base` (NCHW in / NCHW out), conv weights in OIHW.

    conv7_b is accepted for interface parity but unused: a per-channel bias
    added immediately before BatchNorm (batch stats, beta=0) cancels exactly.
    Use matmul_dtype=jnp.bfloat16 on v6e / v7x to feed the MXU in bf16
    (accumulation, BN and softmax stay in float32).
    """
    del conv7_b
    N, cin_src, H, W = input_src.shape
    assert cin_src == 1
    assert input_thick.shape == input_src.shape and input_thin.shape == input_src.shape
    M = N * H * W
    C1, C2, P = conv1_w.shape[0], conv4_w.shape[0], conv7_w.shape[0]
    assert conv1_w.shape[1] == 3 and conv4_w.shape[1] == C1 and conv7_w.shape[1] == C2
    assert C1 % 8 == 0 and C2 % 8 == 0, "channel counts must be sublane multiples"

    cin0_pad = 8                               # pad the 3 input channels to 8 rows
    cp_max = max(cin0_pad, C1, C2)
    padl = _round_up(W + 1, 128)               # lane halo; keeps the main slab aligned

    w1 = _flatten_conv_weight(conv1_w, cin0_pad, matmul_dtype)
    w4 = _flatten_conv_weight(conv4_w, C1, matmul_dtype)
    w7 = _flatten_conv_weight(conv7_w, C2, matmul_dtype)

    # (N,1,H,W) -> (1, N*H*W): free row-major reshapes, no concat / transpose pass.
    src = input_src.reshape(1, M).astype(jnp.float32)
    thick = input_thick.reshape(1, M).astype(jnp.float32)
    thin = input_thin.reshape(1, M).astype(jnp.float32)

    # (h, w) coordinates per flattened pixel; shape-only, constant-folded by XLA.
    hw_idx = jnp.stack([
        jnp.tile(jnp.repeat(jnp.arange(H, dtype=jnp.int32), W), N),
        jnp.tile(jnp.arange(W, dtype=jnp.int32), N * H),
    ])

    mm_bytes = jnp.dtype(matmul_dtype).itemsize
    # Explicit VMEM budget: scratch + operands + f32 transients, 2x headroom.
    est = 2 * (cp_max * (M + 2 * padl) * mm_bytes           # activation scratch
               + 9 * cp_max * M * mm_bytes                  # im2col scratch
               + (5 + P) * M * 4                            # idx / inputs / output
               + (w1.size + w4.size + w7.size) * mm_bytes   # flattened weights
               + 3 * (C1 + C2 + 2 * P) * M * 4)             # BN / softmax transients
    vmem_limit = int(min(max(est, 16 << 20) + (8 << 20), 112 << 20))

    kernel = functools.partial(_fused_forward_kernel, N=N, H=H, W=W, PADL=padl)
    out = pl.pallas_call(
        kernel,
        out_shape=jax.ShapeDtypeStruct((N, P, H * W), jnp.float32),
        in_specs=[pl.BlockSpec(memory_space=pltpu.MemorySpace.VMEM)] * 7,
        out_specs=pl.BlockSpec(memory_space=pltpu.MemorySpace.VMEM),
        scratch_shapes=[
            pltpu.VMEM((cp_max, M + 2 * padl), matmul_dtype),   # lane-padded acts
            pltpu.VMEM((9 * cp_max, M), matmul_dtype),          # im2col patches
        ],
        compiler_params=pltpu.CompilerParams(vmem_limit_bytes=vmem_limit),
    )(hw_idx, src, thick, thin, w1, w4, w7)

    # The kernel already emitted a lane-dense NCHW-ordered slab; reshape is free.
    return out.reshape(N, P, H, W)


# -------------------------------------------------------------------- main ---
if __name__ == "__main__":
    N, H, W = 2, 16, 16
    channels, pn_size, ksize, std = 8, 5, 3, 0.1   # small "channels" for the demo
    P = pn_size * pn_size

    key = jax.random.PRNGKey(0)
    k1, k2, k3, k4, kx1, kx2, kx3 = jax.random.split(key, 7)

    # create_conv_kernel: N(0, std) init, OIHW layout (PyTorch convention).
    conv1_w = std * jax.random.normal(k1, (channels, 3, ksize, ksize), jnp.float32)
    conv4_w = std * jax.random.normal(k2, (2 * channels, channels, ksize, ksize), jnp.float32)
    conv7_w = std * jax.random.normal(k3, (P, 2 * channels, ksize, ksize), jnp.float32)
    # create_conv_bias: zeros with a single 1.0 in the middle channel (odd count).
    assert P % 2 == 1
    conv7_b = jnp.zeros((P,), jnp.float32).at[P // 2].set(1.0)
    # conv9_kernel exists in the PyTorch __init__ but is unused in forward().
    _conv9_w = std * jax.random.normal(k4, (P, 3, 1, 1), jnp.float32)

    input_src = jax.random.normal(kx1, (N, 1, H, W), jnp.float32)
    input_thick = jax.random.normal(kx2, (N, 1, H, W), jnp.float32)
    input_thin = jax.random.normal(kx3, (N, 1, H, W), jnp.float32)

    # Pure-XLA reference (includes conv7 bias) for validation.
    def reference(cast_to=None):
        x = jnp.concatenate([input_src, input_thick, input_thin], axis=1)

        def conv(v, w, b=None):
            lhs, rhs = (v, w) if cast_to is None else (v.astype(cast_to), w.astype(cast_to))
            y = jax.lax.conv_general_dilated(
                lhs, rhs, window_strides=(1, 1), padding="SAME",
                dimension_numbers=("NCHW", "OIHW", "NCHW"),
                preferred_element_type=jnp.float32,
                precision=None if cast_to is not None else jax.lax.Precision.HIGHEST)
            return y if b is None else y + b[None, :, None, None]

        def bn_relu(v):
            mu = jnp.mean(v, axis=(0, 2, 3), keepdims=True)
            var = jnp.mean(jnp.square(v - mu), axis=(0, 2, 3), keepdims=True)
            return jnp.maximum((v - mu) * jax.lax.rsqrt(var + 1e-5), 0.0)

        a = bn_relu(conv(x, conv1_w))
        a = bn_relu(conv(a, conv4_w))
        a = bn_relu(conv(a, conv7_w, conv7_b))
        return jax.nn.softmax(a, axis=1)

    # --- f32 MXU-input path (v5e default), validated against the f32 reference.
    out = jax.block_until_ready(
        base_forward(input_src, input_thick, input_thin,
                     conv1_w, conv4_w, conv7_w, conv7_b))
    assert out.shape == (N, P, H, W)
    assert bool(jnp.allclose(jnp.sum(out, axis=1), 1.0, atol=1e-3))
    ref = jax.block_until_ready(reference())
    err = float(jnp.max(jnp.abs(out - ref)))
    assert err < 5e-3, f"f32 path mismatch: {err}"

    # --- bf16 MXU-input path (v6e / v7x), checked against a bf16-cast reference.
    out_bf = jax.block_until_ready(
        base_forward(input_src, input_thick, input_thin,
                     conv1_w, conv4_w, conv7_w, conv7_b,
                     matmul_dtype=jnp.bfloat16))
    assert out_bf.shape == (N, P, H, W)
    assert bool(jnp.allclose(jnp.sum(out_bf, axis=1), 1.0, atol=1e-3))
    ref_bf = jax.block_until_ready(reference(cast_to=jnp.bfloat16))
    err_bf = float(jnp.max(jnp.abs(out_bf - ref_bf)))
    assert err_bf < 2e-2, f"bf16 path mismatch: {err_bf}"

    print("KERNEL_OK")
</pallas_src>

<mosaic_0001>
module attributes {stable_mosaic.version = 11 : i64} {
  func.func @_fused_forward_kernel(%arg0: memref<2x512xi32, #tpu.memory_space<vmem>>, %arg1: memref<1x512xf32, #tpu.memory_space<vmem>>, %arg2: memref<1x512xf32, #tpu.memory_space<vmem>>, %arg3: memref<1x512xf32, #tpu.memory_space<vmem>>, %arg4: memref<8x72xf32, #tpu.memory_space<vmem>>, %arg5: memref<16x72xf32, #tpu.memory_space<vmem>>, %arg6: memref<25x144xf32, #tpu.memory_space<vmem>>, %arg7: memref<2x25x256xf32, #tpu.memory_space<vmem>>, %arg8: memref<16x768xf32, #tpu.memory_space<vmem>>, %arg9: memref<144x512xf32, #tpu.memory_space<vmem>>) attributes {dimension_semantics = [], scalar_prefetch = 0 : i64, scratch_operands = 2 : i64, tpu.core_type = #tpu.core_type<tc>} {
    %c0 = arith.constant 0 : index
    %c0_0 = arith.constant 0 : index
    %0 = vector.load %arg0[%c0, %c0_0] : memref<2x512xi32, #tpu.memory_space<vmem>>, vector<1x512xi32>
    %c1 = arith.constant 1 : index
    %c0_1 = arith.constant 0 : index
    %1 = vector.load %arg0[%c1, %c0_1] : memref<2x512xi32, #tpu.memory_space<vmem>>, vector<1x512xi32>
    %c1_i32 = arith.constant 1 : i32
    %2 = vector.broadcast %c1_i32 : i32 to vector<1x512xi32>
    %3 = arith.cmpi sge, %0, %2 : vector<1x512xi32>
    %c14_i32 = arith.constant 14 : i32
    %4 = vector.broadcast %c14_i32 : i32 to vector<1x512xi32>
    %5 = arith.cmpi sle, %0, %4 : vector<1x512xi32>
    %c1_i32_2 = arith.constant 1 : i32
    %6 = vector.broadcast %c1_i32_2 : i32 to vector<1x512xi32>
    %7 = arith.cmpi sge, %1, %6 : vector<1x512xi32>
    %c14_i32_3 = arith.constant 14 : i32
    %8 = vector.broadcast %c14_i32_3 : i32 to vector<1x512xi32>
    %9 = arith.cmpi sle, %1, %8 : vector<1x512xi32>
    %cst = arith.constant 0.000000e+00 : f32
    %10 = vector.broadcast %cst : f32 to vector<16x768xf32>
    %c0_4 = arith.constant 0 : index
    %c0_5 = arith.constant 0 : index
    %11 = vector.load %arg8[%c0_4, %c0_5] : memref<16x768xf32, #tpu.memory_space<vmem>>, vector<16x768xf32>
    tpu.vector_store %arg8[%c0_4, %c0_5], %10 {strides = array<i32>} : memref<16x768xf32, #tpu.memory_space<vmem>>, vector<16x768xf32>,
    %c0_6 = arith.constant 0 : index
    %c0_7 = arith.constant 0 : index
    %12 = vector.load %arg1[%c0_6, %c0_7] : memref<1x512xf32, #tpu.memory_space<vmem>>, vector<1x512xf32>
    %c0_8 = arith.constant 0 : index
    %c128 = arith.constant 128 : index
    %13 = vector.load %arg8[%c0_8, %c128] : memref<16x768xf32, #tpu.memory_space<vmem>>, vector<1x512xf32>
    tpu.vector_store %arg8[%c0_8, %c128], %12 {strides = array<i32>} : memref<16x768xf32, #tpu.memory_space<vmem>>, vector<1x512xf32>,
    %c0_9 = arith.constant 0 : index
    %c0_10 = arith.constant 0 : index
    %14 = vector.load %arg2[%c0_9, %c0_10] : memref<1x512xf32, #tpu.memory_space<vmem>>, vector<1x512xf32>
    %c1_11 = arith.constant 1 : index
    %c128_12 = arith.constant 128 : index
    %15 = vector.load %arg8[%c1_11, %c128_12] : memref<16x768xf32, #tpu.memory_space<vmem>>, vector<1x512xf32>
    tpu.vector_store %arg8[%c1_11, %c128_12], %14 {strides = array<i32>} : memref<16x768xf32, #tpu.memory_space<vmem>>, vector<1x512xf32>,
    %c0_13 = arith.constant 0 : index
    %c0_14 = arith.constant 0 : index
    %16 = vector.load %arg3[%c0_13, %c0_14] : memref<1x512xf32, #tpu.memory_space<vmem>>, vector<1x512xf32>
    %c2 = arith.constant 2 : index
    %c128_15 = arith.constant 128 : index
    %17 = vector.load %arg8[%c2, %c128_15] : memref<16x768xf32, #tpu.memory_space<vmem>>, vector<1x512xf32>
    tpu.vector_store %arg8[%c2, %c128_15], %16 {strides = array<i32>} : memref<16x768xf32, #tpu.memory_space<vmem>>, vector<1x512xf32>,
    %c0_16 = arith.constant 0 : index
    %c111 = arith.constant 111 : index
    %18 = vector.load %arg8[%c0_16, %c111] : memref<16x768xf32, #tpu.memory_space<vmem>>, vector<8x512xf32>
    %19 = arith.andi %3, %7 : vector<1x512xi1>
    %cst_17 = arith.constant 0.000000e+00 : f32
    %20 = vector.broadcast %cst_17 : f32 to vector<8x512xf32>
    %21 = vector.shape_cast %19 : vector<1x512xi1> to vector<1x512xi1>
    %22 = vector.broadcast %21 : vector<1x512xi1> to vector<8x512xi1>
    %23 = arith.select %22, %18, %20 : vector<8x512xi1>, vector<8x512xf32>
    %c0_18 = arith.constant 0 : index
    %c0_19 = arith.constant 0 : index
    %24 = vector.load %arg9[%c0_18, %c0_19] : memref<144x512xf32, #tpu.memory_space<vmem>>, vector<8x512xf32>
    tpu.vector_store %arg9[%c0_18, %c0_19], %23 {strides = array<i32>} : memref<144x512xf32, #tpu.memory_space<vmem>>, vector<8x512xf32>,
    %c0_20 = arith.constant 0 : index
    %c112 = arith.constant 112 : index
    %25 = vector.load %arg8[%c0_20, %c112] : memref<16x768xf32, #tpu.memory_space<vmem>>, vector<8x512xf32>
    %cst_21 = arith.constant 0.000000e+00 : f32
    %26 = vector.broadcast %cst_21 : f32 to vector<8x512xf32>
    %27 = vector.shape_cast %3 : vector<1x512xi1> to vector<1x512xi1>
    %28 = vector.broadcast %27 : vector<1x512xi1> to vector<8x512xi1>
    %29 = arith.select %28, %25, %26 : vector<8x512xi1>, vector<8x512xf32>
    %c8 = arith.constant 8 : index
    %c0_22 = arith.constant 0 : index
    %30 = vector.load %arg9[%c8, %c0_22] : memref<144x512xf32, #tpu.memory_space<vmem>>, vector<8x512xf32>
    tpu.vector_store %arg9[%c8, %c0_22], %29 {strides = array<i32>} : memref<144x512xf32, #tpu.memory_space<vmem>>, vector<8x512xf32>,
    %c0_23 = arith.constant 0 : index
    %c113 = arith.constant 113 : index
    %31 = vector.load %arg8[%c0_23, %c113] : memref<16x768xf32, #tpu.memory_space<vmem>>, vector<8x512xf32>
    %32 = arith.andi %3, %9 : vector<1x512xi1>
    %cst_24 = arith.constant 0.000000e+00 : f32
    %33 = vector.broadcast %cst_24 : f32 to vector<8x512xf32>
    %34 = vector.shape_cast %32 : vector<1x512xi1> to vector<1x512xi1>
    %35 = vector.broadcast %34 : vector<1x512xi1> to vector<8x512xi1>
    %36 = arith.select %35, %31, %33 : vector<8x512xi1>, vector<8x512xf32>
    %c16 = arith.constant 16 : index
    %c0_25 = arith.constant 0 : index
    %37 = vector.load %arg9[%c16, %c0_25] : memref<144x512xf32, #tpu.memory_space<vmem>>, vector<8x512xf32>
    tpu.vector_store %arg9[%c16, %c0_25], %36 {strides = array<i32>} : memref<144x512xf32, #tpu.memory_space<vmem>>, vector<8x512xf32>,
    %c0_26 = arith.constant 0 : index
    %c127 = arith.constant 127 : index
    %38 = vector.load %arg8[%c0_26, %c127] : memref<16x768xf32, #tpu.memory_space<vmem>>, vector<8x512xf32>
    %cst_27 = arith.constant 0.000000e+00 : f32
    %39 = vector.broadcast %cst_27 : f32 to vector<8x512xf32>
    %40 = vector.shape_cast %7 : vector<1x512xi1> to vector<1x512xi1>
    %41 = vector.broadcast %40 : vector<1x512xi1> to vector<8x512xi1>
    %42 = arith.select %41, %38, %39 : vector<8x512xi1>, vector<8x512xf32>
    %c24 = arith.constant 24 : index
    %c0_28 = arith.constant 0 : index
    %43 = vector.load %arg9[%c24, %c0_28] : memref<144x512xf32, #tpu.memory_space<vmem>>, vector<8x512xf32>
    tpu.vector_store %arg9[%c24, %c0_28], %42 {strides = array<i32>} : memref<144x512xf32, #tpu.memory_space<vmem>>, vector<8x512xf32>,
    %c0_29 = arith.constant 0 : index
    %c128_30 = arith.constant 128 : index
    %44 = vector.load %arg8[%c0_29, %c128_30] : memref<16x768xf32, #tpu.memory_space<vmem>>, vector<8x512xf32>
    %c32 = arith.constant 32 : index
    %c0_31 = arith.constant 0 : index
    %45 = vector.load %arg9[%c32, %c0_31] : memref<144x512xf32, #tpu.memory_space<vmem>>, vector<8x512xf32>
    tpu.vector_store %arg9[%c32, %c0_31], %44 {strides = array<i32>} : memref<144x512xf32, #tpu.memory_space<vmem>>, vector<8x512xf32>,
    %c0_32 = arith.constant 0 : index
    %c129 = arith.constant 129 : index
    %46 = vector.load %arg8[%c0_32, %c129] : memref<16x768xf32, #tpu.memory_space<vmem>>, vector<8x512xf32>
    %cst_33 = arith.constant 0.000000e+00 : f32
    %47 = vector.broadcast %cst_33 : f32 to vector<8x512xf32>
    %48 = vector.shape_cast %9 : vector<1x512xi1> to vector<1x512xi1>
    %49 = vector.broadcast %48 : vector<1x512xi1> to vector<8x512xi1>
    %50 = arith.select %49, %46, %47 : vector<8x512xi1>, vector<8x512xf32>
    %c40 = arith.constant 40 : index
    %c0_34 = arith.constant 0 : index
    %51 = vector.load %arg9[%c40, %c0_34] : memref<144x512xf32, #tpu.memory_space<vmem>>, vector<8x512xf32>
    tpu.vector_store %arg9[%c40, %c0_34], %50 {strides = array<i32>} : memref<144x512xf32, #tpu.memory_space<vmem>>, vector<8x512xf32>,
    %c0_35 = arith.constant 0 : index
    %c143 = arith.constant 143 : index
    %52 = vector.load %arg8[%c0_35, %c143] : memref<16x768xf32, #tpu.memory_space<vmem>>, vector<8x512xf32>
    %53 = arith.andi %5, %7 : vector<1x512xi1>
    %cst_36 = arith.constant 0.000000e+00 : f32
    %54 = vector.broadcast %cst_36 : f32 to vector<8x512xf32>
    %55 = vector.shape_cast %53 : vector<1x512xi1> to vector<1x512xi1>
    %56 = vector.broadcast %55 : vector<1x512xi1> to vector<8x512xi1>
    %57 = arith.select %56, %52, %54 : vector<8x512xi1>, vector<8x512xf32>
    %c48 = arith.constant 48 : index
    %c0_37 = arith.constant 0 : index
    %58 = vector.load %arg9[%c48, %c0_37] : memref<144x512xf32, #tpu.memory_space<vmem>>, vector<8x512xf32>
    tpu.vector_store %arg9[%c48, %c0_37], %57 {strides = array<i32>} : memref<144x512xf32, #tpu.memory_space<vmem>>, vector<8x512xf32>,
    %c0_38 = arith.constant 0 : index
    %c144 = arith.constant 144 : index
    %59 = vector.load %arg8[%c0_38, %c144] : memref<16x768xf32, #tpu.memory_space<vmem>>, vector<8x512xf32>
    %cst_39 = arith.constant 0.000000e+00 : f32
    %60 = vector.broadcast %cst_39 : f32 to vector<8x512xf32>
    %61 = vector.shape_cast %5 : vector<1x512xi1> to vector<1x512xi1>
    %62 = vector.broadcast %61 : vector<1x512xi1> to vector<8x512xi1>
    %63 = arith.select %62, %59, %60 : vector<8x512xi1>, vector<8x512xf32>
    %c56 = arith.constant 56 : index
    %c0_40 = arith.constant 0 : index
    %64 = vector.load %arg9[%c56, %c0_40] : memref<144x512xf32, #tpu.memory_space<vmem>>, vector<8x512xf32>
    tpu.vector_store %arg9[%c56, %c0_40], %63 {strides = array<i32>} : memref<144x512xf32, #tpu.memory_space<vmem>>, vector<8x512xf32>,
    %c0_41 = arith.constant 0 : index
    %c145 = arith.constant 145 : index
    %65 = vector.load %arg8[%c0_41, %c145] : memref<16x768xf32, #tpu.memory_space<vmem>>, vector<8x512xf32>
    %66 = arith.andi %5, %9 : vector<1x512xi1>
    %cst_42 = arith.constant 0.000000e+00 : f32
    %67 = vector.broadcast %cst_42 : f32 to vector<8x512xf32>
    %68 = vector.shape_cast %66 : vector<1x512xi1> to vector<1x512xi1>
    %69 = vector.broadcast %68 : vector<1x512xi1> to vector<8x512xi1>
    %70 = arith.select %69, %65, %67 : vector<8x512xi1>, vector<8x512xf32>
    %c64 = arith.constant 64 : index
    %c0_43 = arith.constant 0 : index
    %71 = vector.load %arg9[%c64, %c0_43] : memref<144x512xf32, #tpu.memory_space<vmem>>, vector<8x512xf32>
    tpu.vector_store %arg9[%c64, %c0_43], %70 {strides = array<i32>} : memref<144x512xf32, #tpu.memory_space<vmem>>, vector<8x512xf32>,
    %c0_44 = arith.constant 0 : index
    %c0_45 = arith.constant 0 : index
    %72 = vector.load %arg9[%c0_44, %c0_45] : memref<144x512xf32, #tpu.memory_space<vmem>>, vector<72x512xf32>
    %c0_46 = arith.constant 0 : index
    %c0_47 = arith.constant 0 : index
    %73 = vector.load %arg4[%c0_46, %c0_47] : memref<8x72xf32, #tpu.memory_space<vmem>>, vector<8x72xf32>
    %cst_48 = arith.constant dense<0.000000e+00> : vector<8x512xf32>
    %74 = tpu.matmul %73, %72, %cst_48 {dimension_numbers = #tpu.dot_dimension_numbers<[1], [0], [0], [1], [0, 0, 1, 1], [], []>} : vector<8x72xf32>, vector<72x512xf32>, vector<8x512xf32> -> vector<8x512xf32>
    %cst_49 = arith.constant dense<0.000000e+00> : vector<8xf32>
    %75 = vector.multi_reduction <add>, %74, %cst_49 [1] : vector<8x512xf32> to vector<8xf32>
    %76 = vector.shape_cast %75 : vector<8xf32> to vector<8x1xf32>
    %cst_50 = arith.constant 0.001953125 : f32
    %77 = vector.broadcast %cst_50 : f32 to vector<8x1xf32>
    %78 = arith.mulf %76, %77 : vector<8x1xf32>
    %79 = arith.mulf %74, %74 : vector<8x512xf32>
    %cst_51 = arith.constant dense<0.000000e+00> : vector<8xf32>
    %80 = vector.multi_reduction <add>, %79, %cst_51 [1] : vector<8x512xf32> to vector<8xf32>
    %81 = vector.shape_cast %80 : vector<8xf32> to vector<8x1xf32>
    %cst_52 = arith.constant 0.001953125 : f32
    %82 = vector.broadcast %cst_52 : f32 to vector<8x1xf32>
    %83 = arith.mulf %81, %82 : vector<8x1xf32>
    %84 = arith.mulf %78, %78 : vector<8x1xf32>
    %85 = arith.subf %83, %84 : vector<8x1xf32>
    %86 = vector.broadcast %78 : vector<8x1xf32> to vector<8x512xf32>
    %87 = arith.subf %74, %86 : vector<8x512xf32>
    %cst_53 = arith.constant 9.99999974E-6 : f32
    %88 = vector.broadcast %cst_53 : f32 to vector<8x1xf32>
    %89 = arith.addf %85, %88 : vector<8x1xf32>
    %90 = math.rsqrt %89 : vector<8x1xf32>
    %91 = vector.broadcast %90 : vector<8x1xf32> to vector<8x512xf32>
    %92 = arith.mulf %87, %91 : vector<8x512xf32>
    %cst_54 = arith.constant 0.000000e+00 : f32
    %93 = vector.broadcast %cst_54 : f32 to vector<8x512xf32>
    %94 = arith.maximumf %92, %93 : vector<8x512xf32>
    %c0_55 = arith.constant 0 : index
    %c128_56 = arith.constant 128 : index
    %95 = vector.load %arg8[%c0_55, %c128_56] : memref<16x768xf32, #tpu.memory_space<vmem>>, vector<8x512xf32>
    tpu.vector_store %arg8[%c0_55, %c128_56], %94 {strides = array<i32>} : memref<16x768xf32, #tpu.memory_space<vmem>>, vector<8x512xf32>,
    %c0_57 = arith.constant 0 : index
    %c111_58 = arith.constant 111 : index
    %96 = vector.load %arg8[%c0_57, %c111_58] : memref<16x768xf32, #tpu.memory_space<vmem>>, vector<8x512xf32>
    %97 = arith.andi %3, %7 : vector<1x512xi1>
    %cst_59 = arith.constant 0.000000e+00 : f32
    %98 = vector.broadcast %cst_59 : f32 to vector<8x512xf32>
    %99 = vector.shape_cast %97 : vector<1x512xi1> to vector<1x512xi1>
    %100 = vector.broadcast %99 : vector<1x512xi1> to vector<8x512xi1>
    %101 = arith.select %100, %96, %98 : vector<8x512xi1>, vector<8x512xf32>
    %c0_60 = arith.constant 0 : index
    %c0_61 = arith.constant 0 : index
    %102 = vector.load %arg9[%c0_60, %c0_61] : memref<144x512xf32, #tpu.memory_space<vmem>>, vector<8x512xf32>
    tpu.vector_store %arg9[%c0_60, %c0_61], %101 {strides = array<i32>} : memref<144x512xf32, #tpu.memory_space<vmem>>, vector<8x512xf32>,
    %c0_62 = arith.constant 0 : index
    %c112_63 = arith.constant 112 : index
    %103 = vector.load %arg8[%c0_62, %c112_63] : memref<16x768xf32, #tpu.memory_space<vmem>>, vector<8x512xf32>
    %cst_64 = arith.constant 0.000000e+00 : f32
    %104 = vector.broadcast %cst_64 : f32 to vector<8x512xf32>
    %105 = vector.shape_cast %3 : vector<1x512xi1> to vector<1x512xi1>
    %106 = vector.broadcast %105 : vector<1x512xi1> to vector<8x512xi1>
    %107 = arith.select %106, %103, %104 : vector<8x512xi1>, vector<8x512xf32>
    %c8_65 = arith.constant 8 : index
    %c0_66 = arith.constant 0 : index
    %108 = vector.load %arg9[%c8_65, %c0_66] : memref<144x512xf32, #tpu.memory_space<vmem>>, vector<8x512xf32>
    tpu.vector_store %arg9[%c8_65, %c0_66], %107 {strides = array<i32>} : memref<144x512xf32, #tpu.memory_space<vmem>>, vector<8x512xf32>,
    %c0_67 = arith.constant 0 : index
    %c113_68 = arith.constant 113 : index
    %109 = vector.load %arg8[%c0_67, %c113_68] : memref<16x768xf32, #tpu.memory_space<vmem>>, vector<8x512xf32>
    %110 = arith.andi %3, %9 : vector<1x512xi1>
    %cst_69 = arith.constant 0.000000e+00 : f32
    %111 = vector.broadcast %cst_69 : f32 to vector<8x512xf32>
    %112 = vector.shape_cast %110 : vector<1x512xi1> to vector<1x512xi1>
    %113 = vector.broadcast %112 : vector<1x512xi1> to vector<8x512xi1>
    %114 = arith.select %113, %109, %111 : vector<8x512xi1>, vector<8x512xf32>
    %c16_70 = arith.constant 16 : index
    %c0_71 = arith.constant 0 : index
    %115 = vector.load %arg9[%c16_70, %c0_71] : memref<144x512xf32, #tpu.memory_space<vmem>>, vector<8x512xf32>
    tpu.vector_store %arg9[%c16_70, %c0_71], %114 {strides = array<i32>} : memref<144x512xf32, #tpu.memory_space<vmem>>, vector<8x512xf32>,
    %c0_72 = arith.constant 0 : index
    %c127_73 = arith.constant 127 : index
    %116 = vector.load %arg8[%c0_72, %c127_73] : memref<16x768xf32, #tpu.memory_space<vmem>>, vector<8x512xf32>
    %cst_74 = arith.constant 0.000000e+00 : f32
    %117 = vector.broadcast %cst_74 : f32 to vector<8x512xf32>
    %118 = vector.shape_cast %7 : vector<1x512xi1> to vector<1x512xi1>
    %119 = vector.broadcast %118 : vector<1x512xi1> to vector<8x512xi1>
    %120 = arith.select %119, %116, %117 : vector<8x512xi1>, vector<8x512xf32>
    %c24_75 = arith.constant 24 : index
    %c0_76 = arith.constant 0 : index
    %121 = vector.load %arg9[%c24_75, %c0_76] : memref<144x512xf32, #tpu.memory_space<vmem>>, vector<8x512xf32>
    tpu.vector_store %arg9[%c24_75, %c0_76], %120 {strides = array<i32>} : memref<144x512xf32, #tpu.memory_space<vmem>>, vector<8x512xf32>,
    %c0_77 = arith.constant 0 : index
    %c128_78 = arith.constant 128 : index
    %122 = vector.load %arg8[%c0_77, %c128_78] : memref<16x768xf32, #tpu.memory_space<vmem>>, vector<8x512xf32>
    %c32_79 = arith.constant 32 : index
    %c0_80 = arith.constant 0 : index
    %123 = vector.load %arg9[%c32_79, %c0_80] : memref<144x512xf32, #tpu.memory_space<vmem>>, vector<8x512xf32>
    tpu.vector_store %arg9[%c32_79, %c0_80], %122 {strides = array<i32>} : memref<144x512xf32, #tpu.memory_space<vmem>>, vector<8x512xf32>,
    %c0_81 = arith.constant 0 : index
    %c129_82 = arith.constant 129 : index
    %124 = vector.load %arg8[%c0_81, %c129_82] : memref<16x768xf32, #tpu.memory_space<vmem>>, vector<8x512xf32>
    %cst_83 = arith.constant 0.000000e+00 : f32
    %125 = vector.broadcast %cst_83 : f32 to vector<8x512xf32>
    %126 = vector.shape_cast %9 : vector<1x512xi1> to vector<1x512xi1>
    %127 = vector.broadcast %126 : vector<1x512xi1> to vector<8x512xi1>
    %128 = arith.select %127, %124, %125 : vector<8x512xi1>, vector<8x512xf32>
    %c40_84 = arith.constant 40 : index
    %c0_85 = arith.constant 0 : index
    %129 = vector.load %arg9[%c40_84, %c0_85] : memref<144x512xf32, #tpu.memory_space<vmem>>, vector<8x512xf32>
    tpu.vector_store %arg9[%c40_84, %c0_85], %128 {strides = array<i32>} : memref<144x512xf32, #tpu.memory_space<vmem>>, vector<8x512xf32>,
    %c0_86 = arith.constant 0 : index
    %c143_87 = arith.constant 143 : index
    %130 = vector.load %arg8[%c0_86, %c143_87] : memref<16x768xf32, #tpu.memory_space<vmem>>, vector<8x512xf32>
    %131 = arith.andi %5, %7 : vector<1x512xi1>
    %cst_88 = arith.constant 0.000000e+00 : f32
    %132 = vector.broadcast %cst_88 : f32 to vector<8x512xf32>
    %133 = vector.shape_cast %131 : vector<1x512xi1> to vector<1x512xi1>
    %134 = vector.broadcast %133 : vector<1x512xi1> to vector<8x512xi1>
    %135 = arith.select %134, %130, %132 : vector<8x512xi1>, vector<8x512xf32>
    %c48_89 = arith.constant 48 : index
    %c0_90 = arith.constant 0 : index
    %136 = vector.load %arg9[%c48_89, %c0_90] : memref<144x512xf32, #tpu.memory_space<vmem>>, vector<8x512xf32>
    tpu.vector_store %arg9[%c48_89, %c0_90], %135 {strides = array<i32>} : memref<144x512xf32, #tpu.memory_space<vmem>>, vector<8x512xf32>,
    %c0_91 = arith.constant 0 : index
    %c144_92 = arith.constant 144 : index
    %137 = vector.load %arg8[%c0_91, %c144_92] : memref<16x768xf32, #tpu.memory_space<vmem>>, vector<8x512xf32>
    %cst_93 = arith.constant 0.000000e+00 : f32
    %138 = vector.broadcast %cst_93 : f32 to vector<8x512xf32>
    %139 = vector.shape_cast %5 : vector<1x512xi1> to vector<1x512xi1>
    %140 = vector.broadcast %139 : vector<1x512xi1> to vector<8x512xi1>
    %141 = arith.select %140, %137, %138 : vector<8x512xi1>, vector<8x512xf32>
    %c56_94 = arith.constant 56 : index
    %c0_95 = arith.constant 0 : index
    %142 = vector.load %arg9[%c56_94, %c0_95] : memref<144x512xf32, #tpu.memory_space<vmem>>, vector<8x512xf32>
    tpu.vector_store %arg9[%c56_94, %c0_95], %141 {strides = array<i32>} : memref<144x512xf32, #tpu.memory_space<vmem>>, vector<8x512xf32>,
    %c0_96 = arith.constant 0 : index
    %c145_97 = arith.constant 145 : index
    %143 = vector.load %arg8[%c0_96, %c145_97] : memref<16x768xf32, #tpu.memory_space<vmem>>, vector<8x512xf32>
    %144 = arith.andi %5, %9 : vector<1x512xi1>
    %cst_98 = arith.constant 0.000000e+00 : f32
    %145 = vector.broadcast %cst_98 : f32 to vector<8x512xf32>
    %146 = vector.shape_cast %144 : vector<1x512xi1> to vector<1x512xi1>
    %147 = vector.broadcast %146 : vector<1x512xi1> to vector<8x512xi1>
    %148 = arith.select %147, %143, %145 : vector<8x512xi1>, vector<8x512xf32>
    %c64_99 = arith.constant 64 : index
    %c0_100 = arith.constant 0 : index
    %149 = vector.load %arg9[%c64_99, %c0_100] : memref<144x512xf32, #tpu.memory_space<vmem>>, vector<8x512xf32>
    tpu.vector_store %arg9[%c64_99, %c0_100], %148 {strides = array<i32>} : memref<144x512xf32, #tpu.memory_space<vmem>>, vector<8x512xf32>,
    %c0_101 = arith.constant 0 : index
    %c0_102 = arith.constant 0 : index
    %150 = vector.load %arg9[%c0_101, %c0_102] : memref<144x512xf32, #tpu.memory_space<vmem>>, vector<72x512xf32>
    %c0_103 = arith.constant 0 : index
    %c0_104 = arith.constant 0 : index
    %151 = vector.load %arg5[%c0_103, %c0_104] : memref<16x72xf32, #tpu.memory_space<vmem>>, vector<16x72xf32>
    %cst_105 = arith.constant dense<0.000000e+00> : vector<16x512xf32>
    %152 = tpu.matmul %151, %150, %cst_105 {dimension_numbers = #tpu.dot_dimension_numbers<[1], [0], [0], [1], [0, 0, 1, 1], [], []>} : vector<16x72xf32>, vector<72x512xf32>, vector<16x512xf32> -> vector<16x512xf32>
    %cst_106 = arith.constant dense<0.000000e+00> : vector<16xf32>
    %153 = vector.multi_reduction <add>, %152, %cst_106 [1] : vector<16x512xf32> to vector<16xf32>
    %154 = vector.shape_cast %153 : vector<16xf32> to vector<16x1xf32>
    %cst_107 = arith.constant 0.001953125 : f32
    %155 = vector.broadcast %cst_107 : f32 to vector<16x1xf32>
    %156 = arith.mulf %154, %155 : vector<16x1xf32>
    %157 = arith.mulf %152, %152 : vector<16x512xf32>
    %cst_108 = arith.constant dense<0.000000e+00> : vector<16xf32>
    %158 = vector.multi_reduction <add>, %157, %cst_108 [1] : vector<16x512xf32> to vector<16xf32>
    %159 = vector.shape_cast %158 : vector<16xf32> to vector<16x1xf32>
    %cst_109 = arith.constant 0.001953125 : f32
    %160 = vector.broadcast %cst_109 : f32 to vector<16x1xf32>
    %161 = arith.mulf %159, %160 : vector<16x1xf32>
    %162 = arith.mulf %156, %156 : vector<16x1xf32>
    %163 = arith.subf %161, %162 : vector<16x1xf32>
    %164 = vector.broadcast %156 : vector<16x1xf32> to vector<16x512xf32>
    %165 = arith.subf %152, %164 : vector<16x512xf32>
    %cst_110 = arith.constant 9.99999974E-6 : f32
    %166 = vector.broadcast %cst_110 : f32 to vector<16x1xf32>
    %167 = arith.addf %163, %166 : vector<16x1xf32>
    %168 = math.rsqrt %167 : vector<16x1xf32>
    %169 = vector.broadcast %168 : vector<16x1xf32> to vector<16x512xf32>
    %170 = arith.mulf %165, %169 : vector<16x512xf32>
    %cst_111 = arith.constant 0.000000e+00 : f32
    %171 = vector.broadcast %cst_111 : f32 to vector<16x512xf32>
    %172 = arith.maximumf %170, %171 : vector<16x512xf32>
    %c0_112 = arith.constant 0 : index
    %c128_113 = arith.constant 128 : index
    %173 = vector.load %arg8[%c0_112, %c128_113] : memref<16x768xf32, #tpu.memory_space<vmem>>, vector<16x512xf32>
    tpu.vector_store %arg8[%c0_112, %c128_113], %172 {strides = array<i32>} : memref<16x768xf32, #tpu.memory_space<vmem>>, vector<16x512xf32>,
    %c0_114 = arith.constant 0 : index
    %c111_115 = arith.constant 111 : index
    %174 = vector.load %arg8[%c0_114, %c111_115] : memref<16x768xf32, #tpu.memory_space<vmem>>, vector<16x512xf32>
    %175 = arith.andi %3, %7 : vector<1x512xi1>
    %cst_116 = arith.constant 0.000000e+00 : f32
    %176 = vector.broadcast %cst_116 : f32 to vector<16x512xf32>
    %177 = vector.shape_cast %175 : vector<1x512xi1> to vector<1x512xi1>
    %178 = vector.broadcast %177 : vector<1x512xi1> to vector<16x512xi1>
    %179 = arith.select %178, %174, %176 : vector<16x512xi1>, vector<16x512xf32>
    %c0_117 = arith.constant 0 : index
    %c0_118 = arith.constant 0 : index
    %180 = vector.load %arg9[%c0_117, %c0_118] : memref<144x512xf32, #tpu.memory_space<vmem>>, vector<16x512xf32>
    tpu.vector_store %arg9[%c0_117, %c0_118], %179 {strides = array<i32>} : memref<144x512xf32, #tpu.memory_space<vmem>>, vector<16x512xf32>,
    %c0_119 = arith.constant 0 : index
    %c112_120 = arith.constant 112 : index
    %181 = vector.load %arg8[%c0_119, %c112_120] : memref<16x768xf32, #tpu.memory_space<vmem>>, vector<16x512xf32>
    %cst_121 = arith.constant 0.000000e+00 : f32
    %182 = vector.broadcast %cst_121 : f32 to vector<16x512xf32>
    %183 = vector.shape_cast %3 : vector<1x512xi1> to vector<1x512xi1>
    %184 = vector.broadcast %183 : vector<1x512xi1> to vector<16x512xi1>
    %185 = arith.select %184, %181, %182 : vector<16x512xi1>, vector<16x512xf32>
    %c16_122 = arith.constant 16 : index
    %c0_123 = arith.constant 0 : index
    %186 = vector.load %arg9[%c16_122, %c0_123] : memref<144x512xf32, #tpu.memory_space<vmem>>, vector<16x512xf32>
    tpu.vector_store %arg9[%c16_122, %c0_123], %185 {strides = array<i32>} : memref<144x512xf32, #tpu.memory_space<vmem>>, vector<16x512xf32>,
    %c0_124 = arith.constant 0 : index
    %c113_125 = arith.constant 113 : index
    %187 = vector.load %arg8[%c0_124, %c113_125] : memref<16x768xf32, #tpu.memory_space<vmem>>, vector<16x512xf32>
    %188 = arith.andi %3, %9 : vector<1x512xi1>
    %cst_126 = arith.constant 0.000000e+00 : f32
    %189 = vector.broadcast %cst_126 : f32 to vector<16x512xf32>
    %190 = vector.shape_cast %188 : vector<1x512xi1> to vector<1x512xi1>
    %191 = vector.broadcast %190 : vector<1x512xi1> to vector<16x512xi1>
    %192 = arith.select %191, %187, %189 : vector<16x512xi1>, vector<16x512xf32>
    %c32_127 = arith.constant 32 : index
    %c0_128 = arith.constant 0 : index
    %193 = vector.load %arg9[%c32_127, %c0_128] : memref<144x512xf32, #tpu.memory_space<vmem>>, vector<16x512xf32>
    tpu.vector_store %arg9[%c32_127, %c0_128], %192 {strides = array<i32>} : memref<144x512xf32, #tpu.memory_space<vmem>>, vector<16x512xf32>,
    %c0_129 = arith.constant 0 : index
    %c127_130 = arith.constant 127 : index
    %194 = vector.load %arg8[%c0_129, %c127_130] : memref<16x768xf32, #tpu.memory_space<vmem>>, vector<16x512xf32>
    %cst_131 = arith.constant 0.000000e+00 : f32
    %195 = vector.broadcast %cst_131 : f32 to vector<16x512xf32>
    %196 = vector.shape_cast %7 : vector<1x512xi1> to vector<1x512xi1>
    %197 = vector.broadcast %196 : vector<1x512xi1> to vector<16x512xi1>
    %198 = arith.select %197, %194, %195 : vector<16x512xi1>, vector<16x512xf32>
    %c48_132 = arith.constant 48 : index
    %c0_133 = arith.constant 0 : index
    %199 = vector.load %arg9[%c48_132, %c0_133] : memref<144x512xf32, #tpu.memory_space<vmem>>, vector<16x512xf32>
    tpu.vector_store %arg9[%c48_132, %c0_133], %198 {strides = array<i32>} : memref<144x512xf32, #tpu.memory_space<vmem>>, vector<16x512xf32>,
    %c0_134 = arith.constant 0 : index
    %c128_135 = arith.constant 128 : index
    %200 = vector.load %arg8[%c0_134, %c128_135] : memref<16x768xf32, #tpu.memory_space<vmem>>, vector<16x512xf32>
    %c64_136 = arith.constant 64 : index
    %c0_137 = arith.constant 0 : index
    %201 = vector.load %arg9[%c64_136, %c0_137] : memref<144x512xf32, #tpu.memory_space<vmem>>, vector<16x512xf32>
    tpu.vector_store %arg9[%c64_136, %c0_137], %200 {strides = array<i32>} : memref<144x512xf32, #tpu.memory_space<vmem>>, vector<16x512xf32>,
    %c0_138 = arith.constant 0 : index
    %c129_139 = arith.constant 129 : index
    %202 = vector.load %arg8[%c0_138, %c129_139] : memref<16x768xf32, #tpu.memory_space<vmem>>, vector<16x512xf32>
    %cst_140 = arith.constant 0.000000e+00 : f32
    %203 = vector.broadcast %cst_140 : f32 to vector<16x512xf32>
    %204 = vector.shape_cast %9 : vector<1x512xi1> to vector<1x512xi1>
    %205 = vector.broadcast %204 : vector<1x512xi1> to vector<16x512xi1>
    %206 = arith.select %205, %202, %203 : vector<16x512xi1>, vector<16x512xf32>
    %c80 = arith.constant 80 : index
    %c0_141 = arith.constant 0 : index
    %207 = vector.load %arg9[%c80, %c0_141] : memref<144x512xf32, #tpu.memory_space<vmem>>, vector<16x512xf32>
    tpu.vector_store %arg9[%c80, %c0_141], %206 {strides = array<i32>} : memref<144x512xf32, #tpu.memory_space<vmem>>, vector<16x512xf32>,
    %c0_142 = arith.constant 0 : index
    %c143_143 = arith.constant 143 : index
    %208 = vector.load %arg8[%c0_142, %c143_143] : memref<16x768xf32, #tpu.memory_space<vmem>>, vector<16x512xf32>
    %209 = arith.andi %5, %7 : vector<1x512xi1>
    %cst_144 = arith.constant 0.000000e+00 : f32
    %210 = vector.broadcast %cst_144 : f32 to vector<16x512xf32>
    %211 = vector.shape_cast %209 : vector<1x512xi1> to vector<1x512xi1>
    %212 = vector.broadcast %211 : vector<1x512xi1> to vector<16x512xi1>
    %213 = arith.select %212, %208, %210 : vector<16x512xi1>, vector<16x512xf32>
    %c96 = arith.constant 96 : index
    %c0_145 = arith.constant 0 : index
    %214 = vector.load %arg9[%c96, %c0_145] : memref<144x512xf32, #tpu.memory_space<vmem>>, vector<16x512xf32>
    tpu.vector_store %arg9[%c96, %c0_145], %213 {strides = array<i32>} : memref<144x512xf32, #tpu.memory_space<vmem>>, vector<16x512xf32>,
    %c0_146 = arith.constant 0 : index
    %c144_147 = arith.constant 144 : index
    %215 = vector.load %arg8[%c0_146, %c144_147] : memref<16x768xf32, #tpu.memory_space<vmem>>, vector<16x512xf32>
    %cst_148 = arith.constant 0.000000e+00 : f32
    %216 = vector.broadcast %cst_148 : f32 to vector<16x512xf32>
    %217 = vector.shape_cast %5 : vector<1x512xi1> to vector<1x512xi1>
    %218 = vector.broadcast %217 : vector<1x512xi1> to vector<16x512xi1>
    %219 = arith.select %218, %215, %216 : vector<16x512xi1>, vector<16x512xf32>
    %c112_149 = arith.constant 112 : index
    %c0_150 = arith.constant 0 : index
    %220 = vector.load %arg9[%c112_149, %c0_150] : memref<144x512xf32, #tpu.memory_space<vmem>>, vector<16x512xf32>
    tpu.vector_store %arg9[%c112_149, %c0_150], %219 {strides = array<i32>} : memref<144x512xf32, #tpu.memory_space<vmem>>, vector<16x512xf32>,
    %c0_151 = arith.constant 0 : index
    %c145_152 = arith.constant 145 : index
    %221 = vector.load %arg8[%c0_151, %c145_152] : memref<16x768xf32, #tpu.memory_space<vmem>>, vector<16x512xf32>
    %222 = arith.andi %5, %9 : vector<1x512xi1>
    %cst_153 = arith.constant 0.000000e+00 : f32
    %223 = vector.broadcast %cst_153 : f32 to vector<16x512xf32>
    %224 = vector.shape_cast %222 : vector<1x512xi1> to vector<1x512xi1>
    %225 = vector.broadcast %224 : vector<1x512xi1> to vector<16x512xi1>
    %226 = arith.select %225, %221, %223 : vector<16x512xi1>, vector<16x512xf32>
    %c128_154 = arith.constant 128 : index
    %c0_155 = arith.constant 0 : index
    %227 = vector.load %arg9[%c128_154, %c0_155] : memref<144x512xf32, #tpu.memory_space<vmem>>, vector<16x512xf32>
    tpu.vector_store %arg9[%c128_154, %c0_155], %226 {strides = array<i32>} : memref<144x512xf32, #tpu.memory_space<vmem>>, vector<16x512xf32>,
    %c0_156 = arith.constant 0 : index
    %c0_157 = arith.constant 0 : index
    %228 = vector.load %arg9[%c0_156, %c0_157] : memref<144x512xf32, #tpu.memory_space<vmem>>, vector<144x512xf32>
    %c0_158 = arith.constant 0 : index
    %c0_159 = arith.constant 0 : index
    %229 = vector.load %arg6[%c0_158, %c0_159] : memref<25x144xf32, #tpu.memory_space<vmem>>, vector<25x144xf32>
    %cst_160 = arith.constant dense<0.000000e+00> : vector<25x512xf32>
    %230 = tpu.matmul %229, %228, %cst_160 {dimension_numbers = #tpu.dot_dimension_numbers<[1], [0], [0], [1], [0, 0, 1, 1], [], []>} : vector<25x144xf32>, vector<144x512xf32>, vector<25x512xf32> -> vector<25x512xf32>
    %cst_161 = arith.constant dense<0.000000e+00> : vector<25xf32>
    %231 = vector.multi_reduction <add>, %230, %cst_161 [1] : vector<25x512xf32> to vector<25xf32>
    %232 = vector.shape_cast %231 : vector<25xf32> to vector<25x1xf32>
    %cst_162 = arith.constant 0.001953125 : f32
    %233 = vector.broadcast %cst_162 : f32 to vector<25x1xf32>
    %234 = arith.mulf %232, %233 : vector<25x1xf32>
    %235 = arith.mulf %230, %230 : vector<25x512xf32>
    %cst_163 = arith.constant dense<0.000000e+00> : vector<25xf32>
    %236 = vector.multi_reduction <add>, %235, %cst_163 [1] : vector<25x512xf32> to vector<25xf32>
    %237 = vector.shape_cast %236 : vector<25xf32> to vector<25x1xf32>
    %cst_164 = arith.constant 0.001953125 : f32
    %238 = vector.broadcast %cst_164 : f32 to vector<25x1xf32>
    %239 = arith.mulf %237, %238 : vector<25x1xf32>
    %240 = arith.mulf %234, %234 : vector<25x1xf32>
    %241 = arith.subf %239, %240 : vector<25x1xf32>
    %242 = vector.broadcast %234 : vector<25x1xf32> to vector<25x512xf32>
    %243 = arith.subf %230, %242 : vector<25x512xf32>
    %cst_165 = arith.constant 9.99999974E-6 : f32
    %244 = vector.broadcast %cst_165 : f32 to vector<25x1xf32>
    %245 = arith.addf %241, %244 : vector<25x1xf32>
    %246 = math.rsqrt %245 : vector<25x1xf32>
    %247 = vector.broadcast %246 : vector<25x1xf32> to vector<25x512xf32>
    %248 = arith.mulf %243, %247 : vector<25x512xf32>
    %cst_166 = arith.constant 0.000000e+00 : f32
    %249 = vector.broadcast %cst_166 : f32 to vector<25x512xf32>
    %250 = arith.maximumf %248, %249 : vector<25x512xf32>
    %cst_167 = arith.constant dense<0xFF800000> : vector<512xf32>
    %251 = vector.multi_reduction <maximumf>, %250, %cst_167 [0] : vector<25x512xf32> to vector<512xf32>
    %252 = vector.shape_cast %251 : vector<512xf32> to vector<1x512xf32>
    %253 = vector.broadcast %252 : vector<1x512xf32> to vector<25x512xf32>
    %254 = arith.subf %250, %253 : vector<25x512xf32>
    %255 = math.exp %254 : vector<25x512xf32>
    %cst_168 = arith.constant dense<0.000000e+00> : vector<512xf32>
    %256 = vector.multi_reduction <add>, %255, %cst_168 [0] : vector<25x512xf32> to vector<512xf32>
    %257 = vector.shape_cast %256 : vector<512xf32> to vector<1x512xf32>
    %cst_169 = arith.constant 1.000000e+00 : f32
    %258 = vector.broadcast %cst_169 : f32 to vector<1x512xf32>
    %259 = arith.divf %258, %257 : vector<1x512xf32>
    %260 = vector.broadcast %259 : vector<1x512xf32> to vector<25x512xf32>
    %261 = arith.mulf %255, %260 : vector<25x512xf32>
    %262 = vector.extract_strided_slice %261 {offsets = [0, 0], sizes = [25, 256], strides = [1, 1]} : vector<25x512xf32> to vector<25x256xf32>
    %c0_170 = arith.constant 0 : index
    %c0_171 = arith.constant 0 : index
    %c0_172 = arith.constant 0 : index
    %263 = vector.load %arg7[%c0_170, %c0_171, %c0_172] : memref<2x25x256xf32, #tpu.memory_space<vmem>>, vector<1x25x256xf32>
    %264 = vector.shape_cast %263 : vector<1x25x256xf32> to vector<25x256xf32>
    %265 = vector.shape_cast %262 : vector<25x256xf32> to vector<1x25x256xf32>
    tpu.vector_store %arg7[%c0_170, %c0_171, %c0_172], %265 {strides = array<i32>} : memref<2x25x256xf32, #tpu.memory_space<vmem>>, vector<1x25x256xf32>,
    %266 = vector.extract_strided_slice %261 {offsets = [0, 256], sizes = [25, 256], strides = [1, 1]} : vector<25x512xf32> to vector<25x256xf32>
    %c1_173 = arith.constant 1 : index
    %c0_174 = arith.constant 0 : index
    %c0_175 = arith.constant 0 : index
    %267 = vector.load %arg7[%c1_173, %c0_174, %c0_175] : memref<2x25x256xf32, #tpu.memory_space<vmem>>, vector<1x25x256xf32>
    %268 = vector.shape_cast %267 : vector<1x25x256xf32> to vector<25x256xf32>
    %269 = vector.shape_cast %266 : vector<25x256xf32> to vector<1x25x256xf32>
    tpu.vector_store %arg7[%c1_173, %c0_174, %c0_175], %269 {strides = array<i32>} : memref<2x25x256xf32, #tpu.memory_space<vmem>>, vector<1x25x256xf32>,
    return
  }
}

</mosaic_0001>

<llo_original>
// kernel: tile.10
$region0: #{tile.10}
  %s0 = inlined_call_operand.vmem [shape: s32[16,16], index: 0, kind: input, shape index: {}]
  %s1 = inlined_call_operand.vmem [shape: s32[256], index: 1, kind: output, shape index: {}]
  $region1: #{tile.10} parent=0
    #allocation0 [shape = 'u8[4096]{0}', space=vmem, size = 0x1000, scoped, tag = 'scoped mem for output reshape']
    %s2 = smov 3
    %v3 = vld [vmem:[%s0] ss:$8 sm:%s2]
    %vm4 = vcmask 130048
    %5 = vst.msk [vmem:[#allocation0] sm:$0x3] %vm4, %v3
    %s6 = scalar_lea.vmem %s0, 7
    %s7 = smov 3
    %v8 = vld [vmem:[%s6] ss:$8 sm:%s7]
    %9 = vrot.lane.b32.xlu0 %v8, 112
    %v10 = vpop.permute.xlu0 %9
    %vm11 = vcmask 1048448
    %12 = vst.msk [vmem:[#allocation0] sm:$0x3] %vm11, %v10
    %s13 = scalar_lea.vmem %s0, 6
    %s14 = smov 3
    %v15 = vld [vmem:[%s13] ss:$8 sm:%s14]
    %16 = vrot.lane.b32.xlu0 %v15, 96
    %v17 = vpop.permute.xlu0 %16
    %vm18 = vcmask 917248
    %19 = vst.msk [vmem:[#allocation0] sm:$0x3] %vm18, %v17
    %s20 = scalar_lea.vmem %s0, 5
    %s21 = smov 3
    %v22 = vld [vmem:[%s20] ss:$8 sm:%s21]
    %23 = vrot.lane.b32.xlu0 %v22, 80
    %v24 = vpop.permute.xlu0 %23
    %vm25 = vcmask 786048
    %26 = vst.msk [vmem:[#allocation0] sm:$0x3] %vm25, %v24
    %s27 = scalar_lea.vmem %s0, 4
    %s28 = smov 3
    %v29 = vld [vmem:[%s27] ss:$8 sm:%s28]
    %30 = vrot.lane.b32.xlu0 %v29, 64
    %v31 = vpop.permute.xlu0 %30
    %vm32 = vcmask 654848
    %33 = vst.msk [vmem:[#allocation0] sm:$0x3] %vm32, %v31
    %s34 = scalar_lea.vmem %s0, 3
    %s35 = smov 3
    %v36 = vld [vmem:[%s34] ss:$8 sm:%s35]
    %37 = vrot.lane.b32.xlu0 %v36, 48
    %v38 = vpop.permute.xlu0 %37
    %vm39 = vcmask 523648
    %40 = vst.msk [vmem:[#allocation0] sm:$0x3] %vm39, %v38
    %s41 = scalar_lea.vmem %s0, 2
    %s42 = smov 3
    %v43 = vld [vmem:[%s41] ss:$8 sm:%s42]
    %44 = vrot.lane.b32.xlu0 %v43, 32
    %v45 = vpop.permute.xlu0 %44
    %vm46 = vcmask 392448
    %47 = vst.msk [vmem:[#allocation0] sm:$0x3] %vm46, %v45
    %s48 = scalar_lea.vmem %s0, 1
    %s49 = smov 3
    %v50 = vld [vmem:[%s48] ss:$8 sm:%s49]
    %51 = vrot.lane.b32.xlu0 %v50, 16
    %v52 = vpop.permute.xlu0 %51
    %vm53 = vcmask 261248
    %54 = vst.msk [vmem:[#allocation0] sm:$0x3] %vm53, %v52
    %s56 = sshllo.u32 0, 2
    %v58 = vld [vmem:[#allocation0] sm:%s56]
    %s59 = sshllo.u32 0, 2
    %60 = vst [vmem:[%s1] sm:%s59] %v58

// kernel: tile.17
$region0: #{tile.17}
  %s0 = inlined_call_operand.vmem [shape: s32[32,16], index: 0, kind: input, shape index: {}]
  %s1 = inlined_call_operand.vmem [shape: s32[1,512], index: 1, kind: output, shape index: {}]
  $region1: #{tile.17} parent=0
    #allocation0 [shape = 'u8[16384]{0}', space=vmem, size = 0x4000, scoped, tag = 'scoped mem for output reshape']
    %v2 = vld [vmem:[%s0] ss:$8 sm:$0xf]
    %vm3 = vcmask 130048
    %4 = vst.msk [vmem:[#allocation0] ss:$8 sm:$0xf] %vm3, %v2
    %s5 = scalar_lea.vmem %s0, 7
    %v6 = vld [vmem:[%s5] ss:$8 sm:$0xf]
    %7 = vrot.lane.b32.xlu0 %v6, 112
    %v8 = vpop.permute.xlu0 %7
    %vm9 = vcmask 1048448
    %10 = vst.msk [vmem:[#allocation0] ss:$8 sm:$0xf] %vm9, %v8
    %s11 = scalar_lea.vmem %s0, 6
    %v12 = vld [vmem:[%s11] ss:$8 sm:$0xf]
    %13 = vrot.lane.b32.xlu0 %v12, 96
    %v14 = vpop.permute.xlu0 %13
    %vm15 = vcmask 917248
    %16 = vst.msk [vmem:[#allocation0] ss:$8 sm:$0xf] %vm15, %v14
    %s17 = scalar_lea.vmem %s0, 5
    %v18 = vld [vmem:[%s17] ss:$8 sm:$0xf]
    %19 = vrot.lane.b32.xlu0 %v18, 80
    %v20 = vpop.permute.xlu0 %19
    %vm21 = vcmask 786048
    %22 = vst.msk [vmem:[#allocation0] ss:$8 sm:$0xf] %vm21, %v20
    %s23 = scalar_lea.vmem %s0, 4
    %v24 = vld [vmem:[%s23] ss:$8 sm:$0xf]
    %25 = vrot.lane.b32.xlu0 %v24, 64
    %v26 = vpop.permute.xlu0 %25
    %vm27 = vcmask 654848
    %28 = vst.msk [vmem:[#allocation0] ss:$8 sm:$0xf] %vm27, %v26
    %s29 = scalar_lea.vmem %s0, 3
    %v30 = vld [vmem:[%s29] ss:$8 sm:$0xf]
    %31 = vrot.lane.b32.xlu0 %v30, 48
    %v32 = vpop.permute.xlu0 %31
    %vm33 = vcmask 523648
    %34 = vst.msk [vmem:[#allocation0] ss:$8 sm:$0xf] %vm33, %v32
    %s35 = scalar_lea.vmem %s0, 2
    %v36 = vld [vmem:[%s35] ss:$8 sm:$0xf]
    %37 = vrot.lane.b32.xlu0 %v36, 32
    %v38 = vpop.permute.xlu0 %37
    %vm39 = vcmask 392448
    %40 = vst.msk [vmem:[#allocation0] ss:$8 sm:$0xf] %vm39, %v38
    %s41 = scalar_lea.vmem %s0, 1
    %v42 = vld [vmem:[%s41] ss:$8 sm:$0xf]
    %43 = vrot.lane.b32.xlu0 %v42, 16
    %v44 = vpop.permute.xlu0 %43
    %vm45 = vcmask 261248
    %46 = vst.msk [vmem:[#allocation0] ss:$8 sm:$0xf] %vm45, %v44
    %s48 = sshllo.u32 0, 1
    %v50 = vld [vmem:[#allocation0] sm:%s48]
    %s51 = sshllo.u32 0, 1
    %52 = vst [vmem:[%s1] sm:%s51] %v50
    %s53 = scalar_lea.vmem [#allocation0], 8
    %v54 = vld [vmem:[%s53] sm:%s48]
    %s55 = sshllo.u32 0, 1
    %s56 = scalar_lea.vmem %s1, 1
    %57 = vst [vmem:[%s56] sm:%s55] %v54
    %s58 = scalar_lea.vmem [#allocation0], 16
    %v59 = vld [vmem:[%s58] sm:%s48]
    %s60 = sshllo.u32 0, 1
    %s61 = smul.addr 1, 2
    %s62 = scalar_lea.vmem %s1, %s61
    %63 = vst [vmem:[%s62] sm:%s60] %v59
    %s64 = scalar_lea.vmem [#allocation0], 24
    %v65 = vld [vmem:[%s64] sm:%s48]
    %s66 = sshllo.u32 0, 1
    %s67 = smul.addr 1, 3
    %s68 = scalar_lea.vmem %s1, %s67
    %69 = vst [vmem:[%s68] sm:%s66] %v65

// kernel: base_forward.1
$region0: #{base_forward.1}
  #allocation0 [shape = 'u32[]', space=smem, size = 0x4, offset = 0x4, fixed_abs, tag = 'smem constant byte address 0x4 - core index']
  #allocation1 [shape = 'u32[144,128]{1,0:T(1,128)}', space=vmem, size = 0x12000, scoped, tag = 'internal scratch']
  #allocation2 [shape = 'f32[16,768]{1,0:T(8,128)}', space=vmem, size = 0xc000, scoped, tag = 'scratch operand']
  #allocation3 [shape = 'f32[144,512]{1,0:T(8,128)}', space=vmem, size = 0x48000, scoped, tag = 'scratch operand']
  %s0 = inlined_call_operand.vmem [shape: s32[2,512], index: 0, kind: input, shape index: {}]
  %s1 = inlined_call_operand.vmem [shape: f32[1,512], index: 1, kind: input, shape index: {}]
  %s2 = inlined_call_operand.vmem [shape: f32[1,512], index: 2, kind: input, shape index: {}]
  %s3 = inlined_call_operand.vmem [shape: f32[1,512], index: 3, kind: input, shape index: {}]
  %s4 = inlined_call_operand.vmem [shape: f32[8,72], index: 4, kind: input, shape index: {}]
  %s5 = inlined_call_operand.vmem [shape: f32[16,72], index: 5, kind: input, shape index: {}]
  %s6 = inlined_call_operand.vmem [shape: f32[25,144], index: 6, kind: input, shape index: {}]
  %s7 = inlined_call_operand.vmem [shape: f32[2,25,256], index: 7, kind: output, shape index: {}]
  %s8 = sld [smem:[#allocation0]]
  $region38: #{base_forward.1} parent=0
    _
  %s10 = ssub.s32 1, %s8
  %s11 = scalar_select 0, %s10, %s8
  // Predicated region
  $region2: #{base_forward.1} parent=0 // pred_check
    _
  $region3: #{base_forward.1} parent=0 // pred_check_branch
    %13 = sbr.rel (0) target = $region5
  $region4: #{base_forward.1} parent=0 // pred_region
    _
  $region5: #{base_forward.1} parent=0 // pred_fallthru
    _
  // Predicated region
  $region6: #{base_forward.1} parent=0 // pred_check
    _
  $region7: #{base_forward.1} parent=0 // pred_check_branch
    %15 = sbr.rel (0) target = $region9
  $region8: #{base_forward.1} parent=0 // pred_region
    _
  $region9: #{base_forward.1} parent=0 // pred_fallthru
    _
  // Predicated region
  $region10: #{base_forward.1} parent=0 // pred_check
    _
  $region11: #{base_forward.1} parent=0 // pred_check_branch
    %17 = sbr.rel (0) target = $region13
  $region12: #{base_forward.1} parent=0 // pred_region
    _
  $region13: #{base_forward.1} parent=0 // pred_fallthru
    _
  // Predicated region
  $region14: #{base_forward.1} parent=0 // pred_check
    _
  $region15: #{base_forward.1} parent=0 // pred_check_branch
    %19 = sbr.rel (0) target = $region17
  $region16: #{base_forward.1} parent=0 // pred_region
    _
  $region17: #{base_forward.1} parent=0 // pred_fallthru
    _
  // Predicated region
  $region18: #{base_forward.1} parent=0 // pred_check
    _
  $region19: #{base_forward.1} parent=0 // pred_check_branch
    %21 = sbr.rel (0) target = $region21
  $region20: #{base_forward.1} parent=0 // pred_region
    _
  $region21: #{base_forward.1} parent=0 // pred_fallthru
    _
  // Predicated region
  $region22: #{base_forward.1} parent=0 // pred_check
    _
  $region23: #{base_forward.1} parent=0 // pred_check_branch
    %23 = sbr.rel (0) target = $region25
  $region24: #{base_forward.1} parent=0 // pred_region
    _
  $region25: #{base_forward.1} parent=0 // pred_fallthru
    _
  // Predicated region
  $region26: #{base_forward.1} parent=0 // pred_check
    _
  $region27: #{base_forward.1} parent=0 // pred_check_branch
    %25 = sbr.rel (0) target = $region29
  $region28: #{base_forward.1} parent=0 // pred_region
    _
  $region29: #{base_forward.1} parent=0 // pred_fallthru
    _
  %v26 = vld [vmem:[%s0] ss:$2 sm:$0xf]
  %s27 = scalar_lea.vmem %s0, 1
  %v28 = vld [vmem:[%s27] ss:$2 sm:$0xf]
  %vm29 = vcmp.ge.s32.totalorder %v26, 1
  %vm30 = vcmp.le.s32.totalorder %v26, 14
  %vm31 = vcmp.ge.s32.totalorder %v28, 1
  %vm32 = vcmp.le.s32.totalorder %v28, 14
  %33 = vst [vmem:[#allocation2] sm:$0xff] 0.0
  %34 = vst [vmem:[#allocation2 + $0x8] sm:$0xff] 0.0
  %35 = vst [vmem:[#allocation2 + $0x10] sm:$0xff] 0.0
  %36 = vst [vmem:[#allocation2 + $0x18] sm:$0xff] 0.0
  %37 = vst [vmem:[#allocation2 + $0x20] sm:$0xff] 0.0
  %38 = vst [vmem:[#allocation2 + $0x28] sm:$0xff] 0.0
  %39 = vst [vmem:[#allocation2 + $0x30] sm:$0xff] 0.0
  %40 = vst [vmem:[#allocation2 + $0x38] sm:$0xff] 0.0
  %41 = vst [vmem:[#allocation2 + $0x40] sm:$0xff] 0.0
  %42 = vst [vmem:[#allocation2 + $0x48] sm:$0xff] 0.0
  %43 = vst [vmem:[#allocation2 + $0x50] sm:$0xff] 0.0
  %44 = vst [vmem:[#allocation2 + $0x58] sm:$0xff] 0.0
  %v45 = vld [vmem:[%s1] sm:$0xf]
  %v46 = vlaneseq
  %vm47 = vcmp.ge.s32.totalorder %v46, 0
  %vm48 = vcmp.lt.s32.totalorder %v46, 512
  %vm49 = vmand %vm47, %vm48
  %s50 = scalar_lea.vmem [#allocation2], 8
  %51 = vst.msk [vmem:[%s50] ss:$8 sm:$0xf] %vm49, %v45
  %52 = vst.msk [vmem:[%s50] ss:$8 sm:$0x0] %vm49, %v45
  %v53 = vld [vmem:[%s2] sm:$0xf]
  %s54 = scalar_lea.vmem [#allocation2], 9
  %55 = vst.msk [vmem:[%s54] ss:$8 sm:$0xf] %vm49, %v53
  %56 = vst.msk [vmem:[%s54] ss:$8 sm:$0x0] %vm49, %v53
  %v57 = vld [vmem:[%s3] sm:$0xf]
  %s58 = scalar_lea.vmem [#allocation2], 10
  %59 = vst.msk [vmem:[%s58] ss:$8 sm:$0xf] %vm49, %v57
  %60 = vst.msk [vmem:[%s58] ss:$8 sm:$0x0] %vm49, %v57
  %v61 = vld [vmem:[#allocation2] sm:$0xff]
  %v62 = vld [vmem:[#allocation2 + $0x8] sm:$0xff]
  %v63 = vld [vmem:[#allocation2 + $0x10] sm:$0xff]
  %v64 = vld [vmem:[#allocation2 + $0x18] sm:$0xff]
  %v65 = vld [vmem:[#allocation2 + $0x20] sm:$0xff]
  %vm66 = vmand %vm29, %vm31
  %v67 = vsel %vm66, 1, 0
  %v68 = vlaneseq
  %v69 = vshrl.u32 %v68, 7
  %v70 = vsub.s32 0, %v69
  %v71 = vrot.slane %v67, %v70
  %v72 = vlaneseq
  %v73 = vshrl.u32 %v72, 7
  %v74 = vsub.s32 1, %v73
  %v75 = vrot.slane %v67, %v74
  %v76 = vlaneseq
  %v77 = vshrl.u32 %v76, 7
  %v78 = vsub.s32 2, %v77
  %v79 = vrot.slane %v67, %v78
  %v80 = vlaneseq
  %v81 = vshrl.u32 %v80, 7
  %v82 = vsub.s32 3, %v81
  %v83 = vrot.slane %v67, %v82
  %vm84 = vcmp.eq.s32.totalorder %v71, 1
  %vm85 = vcmp.eq.s32.totalorder %v75, 1
  %vm86 = vcmp.eq.s32.totalorder %v79, 1
  %vm87 = vcmp.eq.s32.totalorder %v83, 1
  %93 = vrot.lane.b32.xlu0 %v61, 17
  %v94 = vpop.permute.xlu0 %93
  %95 = vrot.lane.b32.xlu0 %v62, 17
  %v96 = vpop.permute.xlu0 %95
  %97 = vrot.lane.b32.xlu0 %v63, 17
  %v98 = vpop.permute.xlu0 %97
  %99 = vrot.lane.b32.xlu0 %v64, 17
  %v100 = vpop.permute.xlu0 %99
  %101 = vrot.lane.b32.xlu0 %v65, 17
  %v102 = vpop.permute.xlu0 %101
  %vm103 = vcmask 138240
  %v104 = vsel %vm103, %v94, %v96
  %v105 = vsel %vm103, %v96, %v98
  %v106 = vsel %vm103, %v98, %v100
  %v107 = vsel %vm103, %v100, %v102
  %v112 = vsel %vm84, %v104, 0.0
  %v113 = vsel %vm85, %v105, 0.0
  %v114 = vsel %vm86, %v106, 0.0
  %v115 = vsel %vm87, %v107, 0.0
  %116 = vst [vmem:[#allocation3] sm:$0xff] %v112
  %117 = vst [vmem:[#allocation3 + $0x8] sm:$0xff] %v113
  %118 = vst [vmem:[#allocation3 + $0x10] sm:$0xff] %v114
  %119 = vst [vmem:[#allocation3 + $0x18] sm:$0xff] %v115
  %v120 = vld [vmem:[#allocation2] sm:$0xff]
  %v121 = vld [vmem:[#allocation2 + $0x8] sm:$0xff]
  %v122 = vld [vmem:[#allocation2 + $0x10] sm:$0xff]
  %v123 = vld [vmem:[#allocation2 + $0x18] sm:$0xff]
  %v124 = vld [vmem:[#allocation2 + $0x20] sm:$0xff]
  %v125 = vsel %vm29, 1, 0
  %v126 = vlaneseq
  %v127 = vshrl.u32 %v126, 7
  %v128 = vsub.s32 0, %v127
  %v129 = vrot.slane %v125, %v128
  %v130 = vlaneseq
  %v131 = vshrl.u32 %v130, 7
  %v132 = vsub.s32 1, %v131
  %v133 = vrot.slane %v125, %v132
  %v134 = vlaneseq
  %v135 = vshrl.u32 %v134, 7
  %v136 = vsub.s32 2, %v135
  %v137 = vrot.slane %v125, %v136
  %v138 = vlaneseq
  %v139 = vshrl.u32 %v138, 7
  %v140 = vsub.s32 3, %v139
  %v141 = vrot.slane %v125, %v140
  %vm142 = vcmp.eq.s32.totalorder %v129, 1
  %vm143 = vcmp.eq.s32.totalorder %v133, 1
  %vm144 = vcmp.eq.s32.totalorder %v137, 1
  %vm145 = vcmp.eq.s32.totalorder %v141, 1
  %151 = vrot.lane.b32.xlu0 %v120, 16
  %v152 = vpop.permute.xlu0 %151
  %153 = vrot.lane.b32.xlu0 %v121, 16
  %v154 = vpop.permute.xlu0 %153
  %155 = vrot.lane.b32.xlu0 %v122, 16
  %v156 = vpop.permute.xlu0 %155
  %157 = vrot.lane.b32.xlu0 %v123, 16
  %v158 = vpop.permute.xlu0 %157
  %159 = vrot.lane.b32.xlu0 %v124, 16
  %v160 = vpop.permute.xlu0 %159
  %vm161 = vcmask 130048
  %v162 = vsel %vm161, %v152, %v154
  %v163 = vsel %vm161, %v154, %v156
  %v164 = vsel %vm161, %v156, %v158
  %v165 = vsel %vm161, %v158, %v160
  %v170 = vsel %vm142, %v162, 0.0
  %v171 = vsel %vm143, %v163, 0.0
  %v172 = vsel %vm144, %v164, 0.0
  %v173 = vsel %vm145, %v165, 0.0
  %174 = vst [vmem:[#allocation3 + $0x20] sm:$0xff] %v170
  %175 = vst [vmem:[#allocation3 + $0x28] sm:$0xff] %v171
  %176 = vst [vmem:[#allocation3 + $0x30] sm:$0xff] %v172
  %177 = vst [vmem:[#allocation3 + $0x38] sm:$0xff] %v173
  %v178 = vld [vmem:[#allocation2] sm:$0xff]
  %v179 = vld [vmem:[#allocation2 + $0x8] sm:$0xff]
  %v180 = vld [vmem:[#allocation2 + $0x10] sm:$0xff]
  %v181 = vld [vmem:[#allocation2 + $0x18] sm:$0xff]
  %v182 = vld [vmem:[#allocation2 + $0x20] sm:$0xff]
  %vm183 = vmand %vm29, %vm32
  %v184 = vsel %vm183, 1, 0
  %v185 = vlaneseq
  %v186 = vshrl.u32 %v185, 7
  %v187 = vsub.s32 0, %v186
  %v188 = vrot.slane %v184, %v187
  %v189 = vlaneseq
  %v190 = vshrl.u32 %v189, 7
  %v191 = vsub.s32 1, %v190
  %v192 = vrot.slane %v184, %v191
  %v193 = vlaneseq
  %v194 = vshrl.u32 %v193, 7
  %v195 = vsub.s32 2, %v194
  %v196 = vrot.slane %v184, %v195
  %v197 = vlaneseq
  %v198 = vshrl.u32 %v197, 7
  %v199 = vsub.s32 3, %v198
  %v200 = vrot.slane %v184, %v199
  %vm201 = vcmp.eq.s32.totalorder %v188, 1
  %vm202 = vcmp.eq.s32.totalorder %v192, 1
  %vm203 = vcmp.eq.s32.totalorder %v196, 1
  %vm204 = vcmp.eq.s32.totalorder %v200, 1
  %210 = vrot.lane.b32.xlu0 %v178, 15
  %v211 = vpop.permute.xlu0 %210
  %212 = vrot.lane.b32.xlu0 %v179, 15
  %v213 = vpop.permute.xlu0 %212
  %214 = vrot.lane.b32.xlu0 %v180, 15
  %v215 = vpop.permute.xlu0 %214
  %216 = vrot.lane.b32.xlu0 %v181, 15
  %v217 = vpop.permute.xlu0 %216
  %218 = vrot.lane.b32.xlu0 %v182, 15
  %v219 = vpop.permute.xlu0 %218
  %vm220 = vcmask 121856
  %v221 = vsel %vm220, %v211, %v213
  %v222 = vsel %vm220, %v213, %v215
  %v223 = vsel %vm220, %v215, %v217
  %v224 = vsel %vm220, %v217, %v219
  %v229 = vsel %vm201, %v221, 0.0
  %v230 = vsel %vm202, %v222, 0.0
  %v231 = vsel %vm203, %v223, 0.0
  %v232 = vsel %vm204, %v224, 0.0
  %233 = vst [vmem:[#allocation3 + $0x40] sm:$0xff] %v229
  %234 = vst [vmem:[#allocation3 + $0x48] sm:$0xff] %v230
  %235 = vst [vmem:[#allocation3 + $0x50] sm:$0xff] %v231
  %236 = vst [vmem:[#allocation3 + $0x58] sm:$0xff] %v232
  %v237 = vld [vmem:[#allocation2] sm:$0xff]
  %v238 = vld [vmem:[#allocation2 + $0x8] sm:$0xff]
  %v239 = vld [vmem:[#allocation2 + $0x10] sm:$0xff]
  %v240 = vld [vmem:[#allocation2 + $0x18] sm:$0xff]
  %v241 = vld [vmem:[#allocation2 + $0x20] sm:$0xff]
  %v242 = vsel %vm31, 1, 0
  %v243 = vlaneseq
  %v244 = vshrl.u32 %v243, 7
  %v245 = vsub.s32 0, %v244
  %v246 = vrot.slane %v242, %v245
  %v247 = vlaneseq
  %v248 = vshrl.u32 %v247, 7
  %v249 = vsub.s32 1, %v248
  %v250 = vrot.slane %v242, %v249
  %v251 = vlaneseq
  %v252 = vshrl.u32 %v251, 7
  %v253 = vsub.s32 2, %v252
  %v254 = vrot.slane %v242, %v253
  %v255 = vlaneseq
  %v256 = vshrl.u32 %v255, 7
  %v257 = vsub.s32 3, %v256
  %v258 = vrot.slane %v242, %v257
  %vm259 = vcmp.eq.s32.totalorder %v246, 1
  %vm260 = vcmp.eq.s32.totalorder %v250, 1
  %vm261 = vcmp.eq.s32.totalorder %v254, 1
  %vm262 = vcmp.eq.s32.totalorder %v258, 1
  %268 = vrot.lane.b32.xlu0 %v237, 1
  %v269 = vpop.permute.xlu0 %268
  %270 = vrot.lane.b32.xlu0 %v238, 1
  %v271 = vpop.permute.xlu0 %270
  %272 = vrot.lane.b32.xlu0 %v239, 1
  %v273 = vpop.permute.xlu0 %272
  %274 = vrot.lane.b32.xlu0 %v240, 1
  %v275 = vpop.permute.xlu0 %274
  %276 = vrot.lane.b32.xlu0 %v241, 1
  %v277 = vpop.permute.xlu0 %276
  %vm278 = vcmask 7168
  %v279 = vsel %vm278, %v269, %v271
  %v280 = vsel %vm278, %v271, %v273
  %v281 = vsel %vm278, %v273, %v275
  %v282 = vsel %vm278, %v275, %v277
  %v287 = vsel %vm259, %v279, 0.0
  %v288 = vsel %vm260, %v280, 0.0
  %v289 = vsel %vm261, %v281, 0.0
  %v290 = vsel %vm262, %v282, 0.0
  %291 = vst [vmem:[#allocation3 + $0x60] sm:$0xff] %v287
  %292 = vst [vmem:[#allocation3 + $0x68] sm:$0xff] %v288
  %293 = vst [vmem:[#allocation3 + $0x70] sm:$0xff] %v289
  %294 = vst [vmem:[#allocation3 + $0x78] sm:$0xff] %v290
  %v295 = vld [vmem:[#allocation2 + $0x8] sm:$0xff]
  %v296 = vld [vmem:[#allocation2 + $0x10] sm:$0xff]
  %v297 = vld [vmem:[#allocation2 + $0x18] sm:$0xff]
  %v298 = vld [vmem:[#allocation2 + $0x20] sm:$0xff]
  %299 = vst [vmem:[#allocation3 + $0x80] sm:$0xff] %v295
  %300 = vst [vmem:[#allocation3 + $0x88] sm:$0xff] %v296
  %301 = vst [vmem:[#allocation3 + $0x90] sm:$0xff] %v297
  %302 = vst [vmem:[#allocation3 + $0x98] sm:$0xff] %v298
  %v303 = vld [vmem:[#allocation2 + $0x8] sm:$0xff]
  %v304 = vld [vmem:[#allocation2 + $0x10] sm:$0xff]
  %v305 = vld [vmem:[#allocation2 + $0x18] sm:$0xff]
  %v306 = vld [vmem:[#allocation2 + $0x20] sm:$0xff]
  %v307 = vld [vmem:[#allocation2 + $0x28] sm:$0xff]
  %v308 = vsel %vm32, 1, 0
  %v309 = vlaneseq
  %v310 = vshrl.u32 %v309, 7
  %v311 = vsub.s32 0, %v310
  %v312 = vrot.slane %v308, %v311
  %v313 = vlaneseq
  %v314 = vshrl.u32 %v313, 7
  %v315 = vsub.s32 1, %v314
  %v316 = vrot.slane %v308, %v315
  %v317 = vlaneseq
  %v318 = vshrl.u32 %v317, 7
  %v319 = vsub.s32 2, %v318
  %v320 = vrot.slane %v308, %v319
  %v321 = vlaneseq
  %v322 = vshrl.u32 %v321, 7
  %v323 = vsub.s32 3, %v322
  %v324 = vrot.slane %v308, %v323
  %vm325 = vcmp.eq.s32.totalorder %v312, 1
  %vm326 = vcmp.eq.s32.totalorder %v316, 1
  %vm327 = vcmp.eq.s32.totalorder %v320, 1
  %vm328 = vcmp.eq.s32.totalorder %v324, 1
  %334 = vrot.lane.b32.xlu0 %v303, 127
  %v335 = vpop.permute.xlu0 %334
  %336 = vrot.lane.b32.xlu0 %v304, 127
  %v337 = vpop.permute.xlu0 %336
  %338 = vrot.lane.b32.xlu0 %v305, 127
  %v339 = vpop.permute.xlu0 %338
  %340 = vrot.lane.b32.xlu0 %v306, 127
  %v341 = vpop.permute.xlu0 %340
  %342 = vrot.lane.b32.xlu0 %v307, 127
  %v343 = vpop.permute.xlu0 %342
  %vm344 = vcmask 1039360
  %v345 = vsel %vm344, %v335, %v337
  %v346 = vsel %vm344, %v337, %v339
  %v347 = vsel %vm344, %v339, %v341
  %v348 = vsel %vm344, %v341, %v343
  %v353 = vsel %vm325, %v345, 0.0
  %v354 = vsel %vm326, %v346, 0.0
  %v355 = vsel %vm327, %v347, 0.0
  %v356 = vsel %vm328, %v348, 0.0
  %357 = vst [vmem:[#allocation3 + $0xa0] sm:$0xff] %v353
  %358 = vst [vmem:[#allocation3 + $0xa8] sm:$0xff] %v354
  %359 = vst [vmem:[#allocation3 + $0xb0] sm:$0xff] %v355
  %360 = vst [vmem:[#allocation3 + $0xb8] sm:$0xff] %v356
  %v361 = vld [vmem:[#allocation2 + $0x8] sm:$0xff]
  %v362 = vld [vmem:[#allocation2 + $0x10] sm:$0xff]
  %v363 = vld [vmem:[#allocation2 + $0x18] sm:$0xff]
  %v364 = vld [vmem:[#allocation2 + $0x20] sm:$0xff]
  %v365 = vld [vmem:[#allocation2 + $0x28] sm:$0xff]
  %vm366 = vmand %vm30, %vm31
  %v367 = vsel %vm366, 1, 0
  %v368 = vlaneseq
  %v369 = vshrl.u32 %v368, 7
  %v370 = vsub.s32 0, %v369
  %v371 = vrot.slane %v367, %v370
  %v372 = vlaneseq
  %v373 = vshrl.u32 %v372, 7
  %v374 = vsub.s32 1, %v373
  %v375 = vrot.slane %v367, %v374
  %v376 = vlaneseq
  %v377 = vshrl.u32 %v376, 7
  %v378 = vsub.s32 2, %v377
  %v379 = vrot.slane %v367, %v378
  %v380 = vlaneseq
  %v381 = vshrl.u32 %v380, 7
  %v382 = vsub.s32 3, %v381
  %v383 = vrot.slane %v367, %v382
  %vm384 = vcmp.eq.s32.totalorder %v371, 1
  %vm385 = vcmp.eq.s32.totalorder %v375, 1
  %vm386 = vcmp.eq.s32.totalorder %v379, 1
  %vm387 = vcmp.eq.s32.totalorder %v383, 1
  %393 = vrot.lane.b32.xlu0 %v361, 113
  %v394 = vpop.permute.xlu0 %393
  %395 = vrot.lane.b32.xlu0 %v362, 113
  %v396 = vpop.permute.xlu0 %395
  %397 = vrot.lane.b32.xlu0 %v363, 113
  %v398 = vpop.permute.xlu0 %397
  %399 = vrot.lane.b32.xlu0 %v364, 113
  %v400 = vpop.permute.xlu0 %399
  %401 = vrot.lane.b32.xlu0 %v365, 113
  %v402 = vpop.permute.xlu0 %401
  %vm403 = vcmask 924672
  %v404 = vsel %vm403, %v394, %v396
  %v405 = vsel %vm403, %v396, %v398
  %v406 = vsel %vm403, %v398, %v400
  %v407 = vsel %vm403, %v400, %v402
  %v412 = vsel %vm384, %v404, 0.0
  %v413 = vsel %vm385, %v405, 0.0
  %v414 = vsel %vm386, %v406, 0.0
  %v415 = vsel %vm387, %v407, 0.0
  %416 = vst [vmem:[#allocation3 + $0xc0] sm:$0xff] %v412
  %417 = vst [vmem:[#allocation3 + $0xc8] sm:$0xff] %v413
  %418 = vst [vmem:[#allocation3 + $0xd0] sm:$0xff] %v414
  %419 = vst [vmem:[#allocation3 + $0xd8] sm:$0xff] %v415
  %v420 = vld [vmem:[#allocation2 + $0x8] sm:$0xff]
  %v421 = vld [vmem:[#allocation2 + $0x10] sm:$0xff]
  %v422 = vld [vmem:[#allocation2 + $0x18] sm:$0xff]
  %v423 = vld [vmem:[#allocation2 + $0x20] sm:$0xff]
  %v424 = vld [vmem:[#allocation2 + $0x28] sm:$0xff]
  %v425 = vsel %vm30, 1, 0
  %v426 = vlaneseq
  %v427 = vshrl.u32 %v426, 7
  %v428 = vsub.s32 0, %v427
  %v429 = vrot.slane %v425, %v428
  %v430 = vlaneseq
  %v431 = vshrl.u32 %v430, 7
  %v432 = vsub.s32 1, %v431
  %v433 = vrot.slane %v425, %v432
  %v434 = vlaneseq
  %v435 = vshrl.u32 %v434, 7
  %v436 = vsub.s32 2, %v435
  %v437 = vrot.slane %v425, %v436
  %v438 = vlaneseq
  %v439 = vshrl.u32 %v438, 7
  %v440 = vsub.s32 3, %v439
  %v441 = vrot.slane %v425, %v440
  %vm442 = vcmp.eq.s32.totalorder %v429, 1
  %vm443 = vcmp.eq.s32.totalorder %v433, 1
  %vm444 = vcmp.eq.s32.totalorder %v437, 1
  %vm445 = vcmp.eq.s32.totalorder %v441, 1
  %451 = vrot.lane.b32.xlu0 %v420, 112
  %v452 = vpop.permute.xlu0 %451
  %453 = vrot.lane.b32.xlu0 %v421, 112
  %v454 = vpop.permute.xlu0 %453
  %455 = vrot.lane.b32.xlu0 %v422, 112
  %v456 = vpop.permute.xlu0 %455
  %457 = vrot.lane.b32.xlu0 %v423, 112
  %v458 = vpop.permute.xlu0 %457
  %459 = vrot.lane.b32.xlu0 %v424, 112
  %v460 = vpop.permute.xlu0 %459
  %vm461 = vcmask 916480
  %v462 = vsel %vm461, %v452, %v454
  %v463 = vsel %vm461, %v454, %v456
  %v464 = vsel %vm461, %v456, %v458
  %v465 = vsel %vm461, %v458, %v460
  %v470 = vsel %vm442, %v462, 0.0
  %v471 = vsel %vm443, %v463, 0.0
  %v472 = vsel %vm444, %v464, 0.0
  %v473 = vsel %vm445, %v465, 0.0
  %474 = vst [vmem:[#allocation3 + $0xe0] sm:$0xff] %v470
  %475 = vst [vmem:[#allocation3 + $0xe8] sm:$0xff] %v471
  %476 = vst [vmem:[#allocation3 + $0xf0] sm:$0xff] %v472
  %477 = vst [vmem:[#allocation3 + $0xf8] sm:$0xff] %v473
  %v478 = vld [vmem:[#allocation2 + $0x8] sm:$0xff]
  %v479 = vld [vmem:[#allocation2 + $0x10] sm:$0xff]
  %v480 = vld [vmem:[#allocation2 + $0x18] sm:$0xff]
  %v481 = vld [vmem:[#allocation2 + $0x20] sm:$0xff]
  %v482 = vld [vmem:[#allocation2 + $0x28] sm:$0xff]
  %vm483 = vmand %vm30, %vm32
  %v484 = vsel %vm483, 1, 0
  %v485 = vlaneseq
  %v486 = vshrl.u32 %v485, 7
  %v487 = vsub.s32 0, %v486
  %v488 = vrot.slane %v484, %v487
  %v489 = vlaneseq
  %v490 = vshrl.u32 %v489, 7
  %v491 = vsub.s32 1, %v490
  %v492 = vrot.slane %v484, %v491
  %v493 = vlaneseq
  %v494 = vshrl.u32 %v493, 7
  %v495 = vsub.s32 2, %v494
  %v496 = vrot.slane %v484, %v495
  %v497 = vlaneseq
  %v498 = vshrl.u32 %v497, 7
  %v499 = vsub.s32 3, %v498
  %v500 = vrot.slane %v484, %v499
  %vm501 = vcmp.eq.s32.totalorder %v488, 1
  %vm502 = vcmp.eq.s32.totalorder %v492, 1
  %vm503 = vcmp.eq.s32.totalorder %v496, 1
  %vm504 = vcmp.eq.s32.totalorder %v500, 1
  %510 = vrot.lane.b32.xlu0 %v478, 111
  %v511 = vpop.permute.xlu0 %510
  %512 = vrot.lane.b32.xlu0 %v479, 111
  %v513 = vpop.permute.xlu0 %512
  %514 = vrot.lane.b32.xlu0 %v480, 111
  %v515 = vpop.permute.xlu0 %514
  %516 = vrot.lane.b32.xlu0 %v481, 111
  %v517 = vpop.permute.xlu0 %516
  %518 = vrot.lane.b32.xlu0 %v482, 111
  %v519 = vpop.permute.xlu0 %518
  %vm520 = vcmask 908288
  %v521 = vsel %vm520, %v511, %v513
  %v522 = vsel %vm520, %v513, %v515
  %v523 = vsel %vm520, %v515, %v517
  %v524 = vsel %vm520, %v517, %v519
  %v529 = vsel %vm501, %v521, 0.0
  %v530 = vsel %vm502, %v522, 0.0
  %v531 = vsel %vm503, %v523, 0.0
  %v532 = vsel %vm504, %v524, 0.0
  %533 = vst [vmem:[#allocation3 + $0x100] sm:$0xff] %v529
  %534 = vst [vmem:[#allocation3 + $0x108] sm:$0xff] %v530
  %535 = vst [vmem:[#allocation3 + $0x110] sm:$0xff] %v531
  %536 = vst [vmem:[#allocation3 + $0x118] sm:$0xff] %v532
  %v537 = vld [vmem:[#allocation3] sm:$0xff]
  %v538 = vld [vmem:[#allocation3 + $0x8] sm:$0xff]
  %v539 = vld [vmem:[#allocation3 + $0x10] sm:$0xff]
  %v540 = vld [vmem:[#allocation3 + $0x18] sm:$0xff]
  %v541 = vld [vmem:[#allocation3 + $0x20] sm:$0xff]
  %v542 = vld [vmem:[#allocation3 + $0x28] sm:$0xff]
  %v543 = vld [vmem:[#allocation3 + $0x30] sm:$0xff]
  %v544 = vld [vmem:[#allocation3 + $0x38] sm:$0xff]
  %v545 = vld [vmem:[#allocation3 + $0x40] sm:$0xff]
  %v546 = vld [vmem:[#allocation3 + $0x48] sm:$0xff]
  %v547 = vld [vmem:[#allocation3 + $0x50] sm:$0xff]
  %v548 = vld [vmem:[#allocation3 + $0x58] sm:$0xff]
  %v549 = vld [vmem:[#allocation3 + $0x60] sm:$0xff]
  %v550 = vld [vmem:[#allocation3 + $0x68] sm:$0xff]
  %v551 = vld [vmem:[#allocation3 + $0x70] sm:$0xff]
  %v552 = vld [vmem:[#allocation3 + $0x78] sm:$0xff]
  %v553 = vld [vmem:[#allocation3 + $0x80] sm:$0xff]
  %v554 = vld [vmem:[#allocation3 + $0x88] sm:$0xff]
  %v555 = vld [vmem:[#allocation3 + $0x90] sm:$0xff]
  %v556 = vld [vmem:[#allocation3 + $0x98] sm:$0xff]
  %v557 = vld [vmem:[#allocation3 + $0xa0] sm:$0xff]
  %v558 = vld [vmem:[#allocation3 + $0xa8] sm:$0xff]
  %v559 = vld [vmem:[#allocation3 + $0xb0] sm:$0xff]
  %v560 = vld [vmem:[#allocation3 + $0xb8] sm:$0xff]
  %v561 = vld [vmem:[#allocation3 + $0xc0] sm:$0xff]
  %v562 = vld [vmem:[#allocation3 + $0xc8] sm:$0xff]
  %v563 = vld [vmem:[#allocation3 + $0xd0] sm:$0xff]
  %v564 = vld [vmem:[#allocation3 + $0xd8] sm:$0xff]
  %v565 = vld [vmem:[#allocation3 + $0xe0] sm:$0xff]
  %v566 = vld [vmem:[#allocation3 + $0xe8] sm:$0xff]
  %v567 = vld [vmem:[#allocation3 + $0xf0] sm:$0xff]
  %v568 = vld [vmem:[#allocation3 + $0xf8] sm:$0xff]
  %v569 = vld [vmem:[#allocation3 + $0x100] sm:$0xff]
  %v570 = vld [vmem:[#allocation3 + $0x108] sm:$0xff]
  %v571 = vld [vmem:[#allocation3 + $0x110] sm:$0xff]
  %v572 = vld [vmem:[#allocation3 + $0x118] sm:$0xff]
  %v573 = vld [vmem:[%s4] sm:$0xff]
  %vm574 = vcmask 588800
  %v576 = vsel %vm574, %v573, 0
  %578 = vmatprep.subr.mxu0 %v538
  %579 = vmatpush1.msra.mxu0 %v537
  %580 = vmatprep.subr.mxu0 %v542
  %581 = vmatpush1.msra.mxu0 %v541
  %582 = vmatprep.subr.mxu0 %v546
  %583 = vmatpush1.msra.mxu0 %v545
  %584 = vmatprep.subr.mxu0 %v550
  %585 = vmatpush1.msra.mxu0 %v549
  %586 = vmatprep.subr.mxu0 %v554
  %587 = vmatpush1.msra.mxu0 %v553
  %588 = vmatprep.subr.mxu0 %v558
  %589 = vmatpush1.msra.mxu0 %v557
  %590 = vmatprep.subr.mxu0 %v562
  %591 = vmatpush1.msra.mxu0 %v561
  %592 = vmatprep.subr.mxu0 %v566
  %593 = vmatpush1.msra.mxu0 %v565
  %594 = vmatprep.subr.mxu0 %v570
  %595 = vmatpush1.msra.mxu0 %v569
  %596 = vmatprep.subr.mxu0 0.0
  %597 = vmatpush1.msra.mxu0 0.0
  %598 = vmatprep.subr.mxu0 0.0
  %599 = vmatpush1.msra.mxu0 0.0
  %600 = vmatprep.subr.mxu0 0.0
  %601 = vmatpush1.msra.mxu0 0.0
  %602 = vmatprep.subr.mxu0 0.0
  %603 = vmatpush1.msra.mxu0 0.0
  %604 = vmatprep.subr.mxu0 0.0
  %605 = vmatpush1.msra.mxu0 0.0
  %606 = vmatprep.subr.mxu0 0.0
  %607 = vmatpush1.msra.mxu0 0.0
  %608 = vmatprep.subr.mxu0 0.0
  %609 = vmatpush1.msra.mxu0 0.0
  %610 = vmatprep.subr.mxu0 0.0
  %611 = vmatpush1.msra.mxu0 0.0
  %612 = vmatprep.subr.mxu0 0.0
  %613 = vmatpush1.msra.mxu0 0.0
  %614 = vmatprep.subr.mxu0 0.0
  %615 = vmatpush1.msra.mxu0 0.0
  %616 = vmatprep.subr.mxu0 0.0
  %617 = vmatpush1.msra.mxu0 0.0
  %618 = vmatprep.subr.mxu0 0.0
  %619 = vmatpush1.msra.mxu0 0.0
  %620 = vmatprep.subr.mxu0 0.0
  %621 = vmatpush1.msra.mxu0 0.0
  %622 = vmatprep.subr.mxu0 0.0
  %623 = vmatpush1.msra.mxu0 0.0
  %624 = vmatprep.subr.mxu0 0.0
  %625 = vmatpush1.msra.mxu0 0.0
  %626 = vmatprep.subr.mxu0 0.0
  %627 = vmatpush1.msra.mxu0 0.0
  %628 = vmatprep.subr.mxu0 0.0
  %629 = vmatpush1.msra.mxu0 0.0
  %630 = vmatprep.subr.mxu0 0.0
  %631 = vmatpush1.msra.mxu0 0.0
  %632 = vmatprep.subr.mxu0 0.0
  %633 = vmatpush1.msra.mxu0 0.0
  %634 = vmatprep.subr.mxu0 0.0
  %635 = vmatpush1.msra.mxu0 0.0
  %636 = vmatprep.subr.mxu0 0.0
  %637 = vmatpush1.msra.mxu0 0.0
  %638 = vmatprep.subr.mxu0 0.0
  %639 = vmatpush1.msra.mxu0 0.0
  %640 = vmatprep.subr.mxu0 0.0
  %641 = vmatpush1.msra.mxu0 0.0
  %642 = vmatprep.mubr.f32.mxu0 0.0
  %643 = vmatmul.mubr.f32.gmra.mrb[0].mxu0 %v576
  %v644 = vpop.f32.mrb[0].mxu0
  %v645 = vadd.f32 0.0, %v644
  %v646 = vpop.f32.mrb[0].mxu0
  %v647 = vadd.f32 0.0, %v646
  %648 = vdwg.mxu0
  %649 = vmatprep.subr.mxu0 %v540
  %650 = vmatpush1.msra.mxu0 %v539
  %651 = vmatprep.subr.mxu0 %v544
  %652 = vmatpush1.msra.mxu0 %v543
  %653 = vmatprep.subr.mxu0 %v548
  %654 = vmatpush1.msra.mxu0 %v547
  %655 = vmatprep.subr.mxu0 %v552
  %656 = vmatpush1.msra.mxu0 %v551
  %657 = vmatprep.subr.mxu0 %v556
  %658 = vmatpush1.msra.mxu0 %v555
  %659 = vmatprep.subr.mxu0 %v560
  %660 = vmatpush1.msra.mxu0 %v559
  %661 = vmatprep.subr.mxu0 %v564
  %662 = vmatpush1.msra.mxu0 %v563
  %663 = vmatprep.subr.mxu0 %v568
  %664 = vmatpush1.msra.mxu0 %v567
  %665 = vmatprep.subr.mxu0 %v572
  %666 = vmatpush1.msra.mxu0 %v571
  %667 = vmatprep.subr.mxu0 0.0
  %668 = vmatpush1.msra.mxu0 0.0
  %669 = vmatprep.subr.mxu0 0.0
  %670 = vmatpush1.msra.mxu0 0.0
  %671 = vmatprep.subr.mxu0 0.0
  %672 = vmatpush1.msra.mxu0 0.0
  %673 = vmatprep.subr.mxu0 0.0
  %674 = vmatpush1.msra.mxu0 0.0
  %675 = vmatprep.subr.mxu0 0.0
  %676 = vmatpush1.msra.mxu0 0.0
  %677 = vmatprep.subr.mxu0 0.0
  %678 = vmatpush1.msra.mxu0 0.0
  %679 = vmatprep.subr.mxu0 0.0
  %680 = vmatpush1.msra.mxu0 0.0
  %681 = vmatprep.subr.mxu0 0.0
  %682 = vmatpush1.msra.mxu0 0.0
  %683 = vmatprep.subr.mxu0 0.0
  %684 = vmatpush1.msra.mxu0 0.0
  %685 = vmatprep.subr.mxu0 0.0
  %686 = vmatpush1.msra.mxu0 0.0
  %687 = vmatprep.subr.mxu0 0.0
  %688 = vmatpush1.msra.mxu0 0.0
  %689 = vmatprep.subr.mxu0 0.0
  %690 = vmatpush1.msra.mxu0 0.0
  %691 = vmatprep.subr.mxu0 0.0
  %692 = vmatpush1.msra.mxu0 0.0
  %693 = vmatprep.subr.mxu0 0.0
  %694 = vmatpush1.msra.mxu0 0.0
  %695 = vmatprep.subr.mxu0 0.0
  %696 = vmatpush1.msra.mxu0 0.0
  %697 = vmatprep.subr.mxu0 0.0
  %698 = vmatpush1.msra.mxu0 0.0
  %699 = vmatprep.subr.mxu0 0.0
  %700 = vmatpush1.msra.mxu0 0.0
  %701 = vmatprep.subr.mxu0 0.0
  %702 = vmatpush1.msra.mxu0 0.0
  %703 = vmatprep.subr.mxu0 0.0
  %704 = vmatpush1.msra.mxu0 0.0
  %705 = vmatprep.subr.mxu0 0.0
  %706 = vmatpush1.msra.mxu0 0.0
  %707 = vmatprep.subr.mxu0 0.0
  %708 = vmatpush1.msra.mxu0 0.0
  %709 = vmatprep.subr.mxu0 0.0
  %710 = vmatpush1.msra.mxu0 0.0
  %711 = vmatprep.subr.mxu0 0.0
  %712 = vmatpush1.msra.mxu0 0.0
  %713 = vmatprep.mubr.f32.mxu0 0.0
  %714 = vmatmul.mubr.f32.gmra.mrb[0].mxu0 %v576
  %v715 = vpop.f32.mrb[0].mxu0
  %v716 = vadd.f32 0.0, %v715
  %v717 = vpop.f32.mrb[0].mxu0
  %v718 = vadd.f32 0.0, %v717
  %719 = vdwg.mxu0
  %v720 = vadd.f32 %v645, %v647
  %v721 = vadd.f32 %v720, %v716
  %v722 = vadd.f32 %v721, %v718
  %723 = vadd.xlane.f32.xlu0 %v722
  %v724 = vpop.xlane.xlu0 %723
  %v725 = vmul.f32 %v724, 0.001953125
  %v726 = vmul.f32 %v645, %v645
  %v727 = vmul.f32 %v647, %v647
  %v728 = vmul.f32 %v716, %v716
  %v729 = vmul.f32 %v718, %v718
  %v730 = vadd.f32 %v726, %v727
  %v731 = vadd.f32 %v730, %v728
  %v732 = vadd.f32 %v731, %v729
  %733 = vadd.xlane.f32.xlu0 %v732
  %v734 = vpop.xlane.xlu0 %733
  %v735 = vmul.f32 %v734, 0.001953125
  %v736 = vmul.f32 %v725, %v725
  %v737 = vsub.f32 %v735, %v736
  %v738 = vsub.f32 %v645, %v725
  %v739 = vsub.f32 %v647, %v725
  %v740 = vsub.f32 %v716, %v725
  %v741 = vsub.f32 %v718, %v725
  %v742 = vadd.f32 %v737, 1e-05
  %v743 = vrsqrt.pop %v742
  %v744 = vmul.f32 %v738, %v743
  %v745 = vmul.f32 %v739, %v743
  %v746 = vmul.f32 %v740, %v743
  %v747 = vmul.f32 %v741, %v743
  %v748 = vmax.f32 %v744, 0.0
  %v749 = vmax.f32 %v745, 0.0
  %v750 = vmax.f32 %v746, 0.0
  %v751 = vmax.f32 %v747, 0.0
  %752 = vst [vmem:[#allocation2 + $0x8] sm:$0xff] %v748
  %753 = vst [vmem:[#allocation2 + $0x10] sm:$0xff] %v749
  %754 = vst [vmem:[#allocation2 + $0x18] sm:$0xff] %v750
  %755 = vst [vmem:[#allocation2 + $0x20] sm:$0xff] %v751
  %v756 = vld [vmem:[#allocation2] sm:$0xff]
  %v757 = vld [vmem:[#allocation2 + $0x8] sm:$0xff]
  %v758 = vld [vmem:[#allocation2 + $0x10] sm:$0xff]
  %v759 = vld [vmem:[#allocation2 + $0x18] sm:$0xff]
  %v760 = vld [vmem:[#allocation2 + $0x20] sm:$0xff]
  %766 = vrot.lane.b32.xlu0 %v756, 17
  %v767 = vpop.permute.xlu0 %766
  %768 = vrot.lane.b32.xlu0 %v757, 17
  %v769 = vpop.permute.xlu0 %768
  %770 = vrot.lane.b32.xlu0 %v758, 17
  %v771 = vpop.permute.xlu0 %770
  %772 = vrot.lane.b32.xlu0 %v759, 17
  %v773 = vpop.permute.xlu0 %772
  %774 = vrot.lane.b32.xlu0 %v760, 17
  %v775 = vpop.permute.xlu0 %774
  %v776 = vsel %vm103, %v767, %v769
  %v777 = vsel %vm103, %v769, %v771
  %v778 = vsel %vm103, %v771, %v773
  %v779 = vsel %vm103, %v773, %v775
  %v784 = vsel %vm84, %v776, 0.0
  %v785 = vsel %vm85, %v777, 0.0
  %v786 = vsel %vm86, %v778, 0.0
  %v787 = vsel %vm87, %v779, 0.0
  %788 = vst [vmem:[#allocation3] sm:$0xff] %v784
  %789 = vst [vmem:[#allocation3 + $0x8] sm:$0xff] %v785
  %790 = vst [vmem:[#allocation3 + $0x10] sm:$0xff] %v786
  %791 = vst [vmem:[#allocation3 + $0x18] sm:$0xff] %v787
  %v792 = vld [vmem:[#allocation2] sm:$0xff]
  %v793 = vld [vmem:[#allocation2 + $0x8] sm:$0xff]
  %v794 = vld [vmem:[#allocation2 + $0x10] sm:$0xff]
  %v795 = vld [vmem:[#allocation2 + $0x18] sm:$0xff]
  %v796 = vld [vmem:[#allocation2 + $0x20] sm:$0xff]
  %802 = vrot.lane.b32.xlu0 %v792, 16
  %v803 = vpop.permute.xlu0 %802
  %804 = vrot.lane.b32.xlu0 %v793, 16
  %v805 = vpop.permute.xlu0 %804
  %806 = vrot.lane.b32.xlu0 %v794, 16
  %v807 = vpop.permute.xlu0 %806
  %808 = vrot.lane.b32.xlu0 %v795, 16
  %v809 = vpop.permute.xlu0 %808
  %810 = vrot.lane.b32.xlu0 %v796, 16
  %v811 = vpop.permute.xlu0 %810
  %v812 = vsel %vm161, %v803, %v805
  %v813 = vsel %vm161, %v805, %v807
  %v814 = vsel %vm161, %v807, %v809
  %v815 = vsel %vm161, %v809, %v811
  %v820 = vsel %vm142, %v812, 0.0
  %v821 = vsel %vm143, %v813, 0.0
  %v822 = vsel %vm144, %v814, 0.0
  %v823 = vsel %vm145, %v815, 0.0
  %824 = vst [vmem:[#allocation3 + $0x20] sm:$0xff] %v820
  %825 = vst [vmem:[#allocation3 + $0x28] sm:$0xff] %v821
  %826 = vst [vmem:[#allocation3 + $0x30] sm:$0xff] %v822
  %827 = vst [vmem:[#allocation3 + $0x38] sm:$0xff] %v823
  %v828 = vld [vmem:[#allocation2] sm:$0xff]
  %v829 = vld [vmem:[#allocation2 + $0x8] sm:$0xff]
  %v830 = vld [vmem:[#allocation2 + $0x10] sm:$0xff]
  %v831 = vld [vmem:[#allocation2 + $0x18] sm:$0xff]
  %v832 = vld [vmem:[#allocation2 + $0x20] sm:$0xff]
  %838 = vrot.lane.b32.xlu0 %v828, 15
  %v839 = vpop.permute.xlu0 %838
  %840 = vrot.lane.b32.xlu0 %v829, 15
  %v841 = vpop.permute.xlu0 %840
  %842 = vrot.lane.b32.xlu0 %v830, 15
  %v843 = vpop.permute.xlu0 %842
  %844 = vrot.lane.b32.xlu0 %v831, 15
  %v845 = vpop.permute.xlu0 %844
  %846 = vrot.lane.b32.xlu0 %v832, 15
  %v847 = vpop.permute.xlu0 %846
  %v848 = vsel %vm220, %v839, %v841
  %v849 = vsel %vm220, %v841, %v843
  %v850 = vsel %vm220, %v843, %v845
  %v851 = vsel %vm220, %v845, %v847
  %v856 = vsel %vm201, %v848, 0.0
  %v857 = vsel %vm202, %v849, 0.0
  %v858 = vsel %vm203, %v850, 0.0
  %v859 = vsel %vm204, %v851, 0.0
  %860 = vst [vmem:[#allocation3 + $0x40] sm:$0xff] %v856
  %861 = vst [vmem:[#allocation3 + $0x48] sm:$0xff] %v857
  %862 = vst [vmem:[#allocation3 + $0x50] sm:$0xff] %v858
  %863 = vst [vmem:[#allocation3 + $0x58] sm:$0xff] %v859
  %v864 = vld [vmem:[#allocation2] sm:$0xff]
  %v865 = vld [vmem:[#allocation2 + $0x8] sm:$0xff]
  %v866 = vld [vmem:[#allocation2 + $0x10] sm:$0xff]
  %v867 = vld [vmem:[#allocation2 + $0x18] sm:$0xff]
  %v868 = vld [vmem:[#allocation2 + $0x20] sm:$0xff]
  %874 = vrot.lane.b32.xlu0 %v864, 1
  %v875 = vpop.permute.xlu0 %874
  %876 = vrot.lane.b32.xlu0 %v865, 1
  %v877 = vpop.permute.xlu0 %876
  %878 = vrot.lane.b32.xlu0 %v866, 1
  %v879 = vpop.permute.xlu0 %878
  %880 = vrot.lane.b32.xlu0 %v867, 1
  %v881 = vpop.permute.xlu0 %880
  %882 = vrot.lane.b32.xlu0 %v868, 1
  %v883 = vpop.permute.xlu0 %882
  %v884 = vsel %vm278, %v875, %v877
  %v885 = vsel %vm278, %v877, %v879
  %v886 = vsel %vm278, %v879, %v881
  %v887 = vsel %vm278, %v881, %v883
  %v892 = vsel %vm259, %v884, 0.0
  %v893 = vsel %vm260, %v885, 0.0
  %v894 = vsel %vm261, %v886, 0.0
  %v895 = vsel %vm262, %v887, 0.0
  %896 = vst [vmem:[#allocation3 + $0x60] sm:$0xff] %v892
  %897 = vst [vmem:[#allocation3 + $0x68] sm:$0xff] %v893
  %898 = vst [vmem:[#allocation3 + $0x70] sm:$0xff] %v894
  %899 = vst [vmem:[#allocation3 + $0x78] sm:$0xff] %v895
  %v900 = vld [vmem:[#allocation2 + $0x8] sm:$0xff]
  %v901 = vld [vmem:[#allocation2 + $0x10] sm:$0xff]
  %v902 = vld [vmem:[#allocation2 + $0x18] sm:$0xff]
  %v903 = vld [vmem:[#allocation2 + $0x20] sm:$0xff]
  %904 = vst [vmem:[#allocation3 + $0x80] sm:$0xff] %v900
  %905 = vst [vmem:[#allocation3 + $0x88] sm:$0xff] %v901
  %906 = vst [vmem:[#allocation3 + $0x90] sm:$0xff] %v902
  %907 = vst [vmem:[#allocation3 + $0x98] sm:$0xff] %v903
  %v908 = vld [vmem:[#allocation2 + $0x8] sm:$0xff]
  %v909 = vld [vmem:[#allocation2 + $0x10] sm:$0xff]
  %v910 = vld [vmem:[#allocation2 + $0x18] sm:$0xff]
  %v911 = vld [vmem:[#allocation2 + $0x20] sm:$0xff]
  %v912 = vld [vmem:[#allocation2 + $0x28] sm:$0xff]
  %918 = vrot.lane.b32.xlu0 %v908, 127
  %v919 = vpop.permute.xlu0 %918
  %920 = vrot.lane.b32.xlu0 %v909, 127
  %v921 = vpop.permute.xlu0 %920
  %922 = vrot.lane.b32.xlu0 %v910, 127
  %v923 = vpop.permute.xlu0 %922
  %924 = vrot.lane.b32.xlu0 %v911, 127
  %v925 = vpop.permute.xlu0 %924
  %926 = vrot.lane.b32.xlu0 %v912, 127
  %v927 = vpop.permute.xlu0 %926
  %v928 = vsel %vm344, %v919, %v921
  %v929 = vsel %vm344, %v921, %v923
  %v930 = vsel %vm344, %v923, %v925
  %v931 = vsel %vm344, %v925, %v927
  %v936 = vsel %vm325, %v928, 0.0
  %v937 = vsel %vm326, %v929, 0.0
  %v938 = vsel %vm327, %v930, 0.0
  %v939 = vsel %vm328, %v931, 0.0
  %940 = vst [vmem:[#allocation3 + $0xa0] sm:$0xff] %v936
  %941 = vst [vmem:[#allocation3 + $0xa8] sm:$0xff] %v937
  %942 = vst [vmem:[#allocation3 + $0xb0] sm:$0xff] %v938
  %943 = vst [vmem:[#allocation3 + $0xb8] sm:$0xff] %v939
  %v944 = vld [vmem:[#allocation2 + $0x8] sm:$0xff]
  %v945 = vld [vmem:[#allocation2 + $0x10] sm:$0xff]
  %v946 = vld [vmem:[#allocation2 + $0x18] sm:$0xff]
  %v947 = vld [vmem:[#allocation2 + $0x20] sm:$0xff]
  %v948 = vld [vmem:[#allocation2 + $0x28] sm:$0xff]
  %954 = vrot.lane.b32.xlu0 %v944, 113
  %v955 = vpop.permute.xlu0 %954
  %956 = vrot.lane.b32.xlu0 %v945, 113
  %v957 = vpop.permute.xlu0 %956
  %958 = vrot.lane.b32.xlu0 %v946, 113
  %v959 = vpop.permute.xlu0 %958
  %960 = vrot.lane.b32.xlu0 %v947, 113
  %v961 = vpop.permute.xlu0 %960
  %962 = vrot.lane.b32.xlu0 %v948, 113
  %v963 = vpop.permute.xlu0 %962
  %v964 = vsel %vm403, %v955, %v957
  %v965 = vsel %vm403, %v957, %v959
  %v966 = vsel %vm403, %v959, %v961
  %v967 = vsel %vm403, %v961, %v963
  %v972 = vsel %vm384, %v964, 0.0
  %v973 = vsel %vm385, %v965, 0.0
  %v974 = vsel %vm386, %v966, 0.0
  %v975 = vsel %vm387, %v967, 0.0
  %976 = vst [vmem:[#allocation3 + $0xc0] sm:$0xff] %v972
  %977 = vst [vmem:[#allocation3 + $0xc8] sm:$0xff] %v973
  %978 = vst [vmem:[#allocation3 + $0xd0] sm:$0xff] %v974
  %979 = vst [vmem:[#allocation3 + $0xd8] sm:$0xff] %v975
  %v980 = vld [vmem:[#allocation2 + $0x8] sm:$0xff]
  %v981 = vld [vmem:[#allocation2 + $0x10] sm:$0xff]
  %v982 = vld [vmem:[#allocation2 + $0x18] sm:$0xff]
  %v983 = vld [vmem:[#allocation2 + $0x20] sm:$0xff]
  %v984 = vld [vmem:[#allocation2 + $0x28] sm:$0xff]
  %990 = vrot.lane.b32.xlu0 %v980, 112
  %v991 = vpop.permute.xlu0 %990
  %992 = vrot.lane.b32.xlu0 %v981, 112
  %v993 = vpop.permute.xlu0 %992
  %994 = vrot.lane.b32.xlu0 %v982, 112
  %v995 = vpop.permute.xlu0 %994
  %996 = vrot.lane.b32.xlu0 %v983, 112
  %v997 = vpop.permute.xlu0 %996
  %998 = vrot.lane.b32.xlu0 %v984, 112
  %v999 = vpop.permute.xlu0 %998
  %v1000 = vsel %vm461, %v991, %v993
  %v1001 = vsel %vm461, %v993, %v995
  %v1002 = vsel %vm461, %v995, %v997
  %v1003 = vsel %vm461, %v997, %v999
  %v1008 = vsel %vm442, %v1000, 0.0
  %v1009 = vsel %vm443, %v1001, 0.0
  %v1010 = vsel %vm444, %v1002, 0.0
  %v1011 = vsel %vm445, %v1003, 0.0
  %1012 = vst [vmem:[#allocation3 + $0xe0] sm:$0xff] %v1008
  %1013 = vst [vmem:[#allocation3 + $0xe8] sm:$0xff] %v1009
  %1014 = vst [vmem:[#allocation3 + $0xf0] sm:$0xff] %v1010
  %1015 = vst [vmem:[#allocation3 + $0xf8] sm:$0xff] %v1011
  %v1016 = vld [vmem:[#allocation2 + $0x8] sm:$0xff]
  %v1017 = vld [vmem:[#allocation2 + $0x10] sm:$0xff]
  %v1018 = vld [vmem:[#allocation2 + $0x18] sm:$0xff]
  %v1019 = vld [vmem:[#allocation2 + $0x20] sm:$0xff]
  %v1020 = vld [vmem:[#allocation2 + $0x28] sm:$0xff]
  %1026 = vrot.lane.b32.xlu0 %v1016, 111
  %v1027 = vpop.permute.xlu0 %1026
  %1028 = vrot.lane.b32.xlu0 %v1017, 111
  %v1029 = vpop.permute.xlu0 %1028
  %1030 = vrot.lane.b32.xlu0 %v1018, 111
  %v1031 = vpop.permute.xlu0 %1030
  %1032 = vrot.lane.b32.xlu0 %v1019, 111
  %v1033 = vpop.permute.xlu0 %1032
  %1034 = vrot.lane.b32.xlu0 %v1020, 111
  %v1035 = vpop.permute.xlu0 %1034
  %v1036 = vsel %vm520, %v1027, %v1029
  %v1037 = vsel %vm520, %v1029, %v1031
  %v1038 = vsel %vm520, %v1031, %v1033
  %v1039 = vsel %vm520, %v1033, %v1035
  %v1044 = vsel %vm501, %v1036, 0.0
  %v1045 = vsel %vm502, %v1037, 0.0
  %v1046 = vsel %vm503, %v1038, 0.0
  %v1047 = vsel %vm504, %v1039, 0.0
  %1048 = vst [vmem:[#allocation3 + $0x100] sm:$0xff] %v1044
  %1049 = vst [vmem:[#allocation3 + $0x108] sm:$0xff] %v1045
  %1050 = vst [vmem:[#allocation3 + $0x110] sm:$0xff] %v1046
  %1051 = vst [vmem:[#allocation3 + $0x118] sm:$0xff] %v1047
  %v1052 = vld [vmem:[#allocation3] sm:$0xff]
  %v1053 = vld [vmem:[#allocation3 + $0x8] sm:$0xff]
  %v1054 = vld [vmem:[#allocation3 + $0x10] sm:$0xff]
  %v1055 = vld [vmem:[#allocation3 + $0x18] sm:$0xff]
  %v1056 = vld [vmem:[#allocation3 + $0x20] sm:$0xff]
  %v1057 = vld [vmem:[#allocation3 + $0x28] sm:$0xff]
  %v1058 = vld [vmem:[#allocation3 + $0x30] sm:$0xff]
  %v1059 = vld [vmem:[#allocation3 + $0x38] sm:$0xff]
  %v1060 = vld [vmem:[#allocation3 + $0x40] sm:$0xff]
  %v1061 = vld [vmem:[#allocation3 + $0x48] sm:$0xff]
  %v1062 = vld [vmem:[#allocation3 + $0x50] sm:$0xff]
  %v1063 = vld [vmem:[#allocation3 + $0x58] sm:$0xff]
  %v1064 = vld [vmem:[#allocation3 + $0x60] sm:$0xff]
  %v1065 = vld [vmem:[#allocation3 + $0x68] sm:$0xff]
  %v1066 = vld [vmem:[#allocation3 + $0x70] sm:$0xff]
  %v1067 = vld [vmem:[#allocation3 + $0x78] sm:$0xff]
  %v1068 = vld [vmem:[#allocation3 + $0x80] sm:$0xff]
  %v1069 = vld [vmem:[#allocation3 + $0x88] sm:$0xff]
  %v1070 = vld [vmem:[#allocation3 + $0x90] sm:$0xff]
  %v1071 = vld [vmem:[#allocation3 + $0x98] sm:$0xff]
  %v1072 = vld [vmem:[#allocation3 + $0xa0] sm:$0xff]
  %v1073 = vld [vmem:[#allocation3 + $0xa8] sm:$0xff]
  %v1074 = vld [vmem:[#allocation3 + $0xb0] sm:$0xff]
  %v1075 = vld [vmem:[#allocation3 + $0xb8] sm:$0xff]
  %v1076 = vld [vmem:[#allocation3 + $0xc0] sm:$0xff]
  %v1077 = vld [vmem:[#allocation3 + $0xc8] sm:$0xff]
  %v1078 = vld [vmem:[#allocation3 + $0xd0] sm:$0xff]
  %v1079 = vld [vmem:[#allocation3 + $0xd8] sm:$0xff]
  %v1080 = vld [vmem:[#allocation3 + $0xe0] sm:$0xff]
  %v1081 = vld [vmem:[#allocation3 + $0xe8] sm:$0xff]
  %v1082 = vld [vmem:[#allocation3 + $0xf0] sm:$0xff]
  %v1083 = vld [vmem:[#allocation3 + $0xf8] sm:$0xff]
  %v1084 = vld [vmem:[#allocation3 + $0x100] sm:$0xff]
  %v1085 = vld [vmem:[#allocation3 + $0x108] sm:$0xff]
  %v1086 = vld [vmem:[#allocation3 + $0x110] sm:$0xff]
  %v1087 = vld [vmem:[#allocation3 + $0x118] sm:$0xff]
  %v1088 = vld [vmem:[%s5] sm:$0xff]
  %v1089 = vld [vmem:[%s5 + $0x8] sm:$0xff]
  %v1091 = vsel %vm574, %v1088, 0
  %v1094 = vsel %vm574, %v1089, 0
  %1096 = vmatprep.subr.mxu0 %v1053
  %1097 = vmatpush1.msra.mxu0 %v1052
  %1098 = vmatprep.subr.mxu0 %v1057
  %1099 = vmatpush1.msra.mxu0 %v1056
  %1100 = vmatprep.subr.mxu0 %v1061
  %1101 = vmatpush1.msra.mxu0 %v1060
  %1102 = vmatprep.subr.mxu0 %v1065
  %1103 = vmatpush1.msra.mxu0 %v1064
  %1104 = vmatprep.subr.mxu0 %v1069
  %1105 = vmatpush1.msra.mxu0 %v1068
  %1106 = vmatprep.subr.mxu0 %v1073
  %1107 = vmatpush1.msra.mxu0 %v1072
  %1108 = vmatprep.subr.mxu0 %v1077
  %1109 = vmatpush1.msra.mxu0 %v1076
  %1110 = vmatprep.subr.mxu0 %v1081
  %1111 = vmatpush1.msra.mxu0 %v1080
  %1112 = vmatprep.subr.mxu0 %v1085
  %1113 = vmatpush1.msra.mxu0 %v1084
  %1114 = vmatprep.subr.mxu0 0.0
  %1115 = vmatpush1.msra.mxu0 0.0
  %1116 = vmatprep.subr.mxu0 0.0
  %1117 = vmatpush1.msra.mxu0 0.0
  %1118 = vmatprep.subr.mxu0 0.0
  %1119 = vmatpush1.msra.mxu0 0.0
  %1120 = vmatprep.subr.mxu0 0.0
  %1121 = vmatpush1.msra.mxu0 0.0
  %1122 = vmatprep.subr.mxu0 0.0
  %1123 = vmatpush1.msra.mxu0 0.0
  %1124 = vmatprep.subr.mxu0 0.0
  %1125 = vmatpush1.msra.mxu0 0.0
  %1126 = vmatprep.subr.mxu0 0.0
  %1127 = vmatpush1.msra.mxu0 0.0
  %1128 = vmatprep.subr.mxu0 0.0
  %1129 = vmatpush1.msra.mxu0 0.0
  %1130 = vmatprep.subr.mxu0 0.0
  %1131 = vmatpush1.msra.mxu0 0.0
  %1132 = vmatprep.subr.mxu0 0.0
  %1133 = vmatpush1.msra.mxu0 0.0
  %1134 = vmatprep.subr.mxu0 0.0
  %1135 = vmatpush1.msra.mxu0 0.0
  %1136 = vmatprep.subr.mxu0 0.0
  %1137 = vmatpush1.msra.mxu0 0.0
  %1138 = vmatprep.subr.mxu0 0.0
  %1139 = vmatpush1.msra.mxu0 0.0
  %1140 = vmatprep.subr.mxu0 0.0
  %1141 = vmatpush1.msra.mxu0 0.0
  %1142 = vmatprep.subr.mxu0 0.0
  %1143 = vmatpush1.msra.mxu0 0.0
  %1144 = vmatprep.subr.mxu0 0.0
  %1145 = vmatpush1.msra.mxu0 0.0
  %1146 = vmatprep.subr.mxu0 0.0
  %1147 = vmatpush1.msra.mxu0 0.0
  %1148 = vmatprep.subr.mxu0 0.0
  %1149 = vmatpush1.msra.mxu0 0.0
  %1150 = vmatprep.subr.mxu0 0.0
  %1151 = vmatpush1.msra.mxu0 0.0
  %1152 = vmatprep.subr.mxu0 0.0
  %1153 = vmatpush1.msra.mxu0 0.0
  %1154 = vmatprep.subr.mxu0 0.0
  %1155 = vmatpush1.msra.mxu0 0.0
  %1156 = vmatprep.subr.mxu0 0.0
  %1157 = vmatpush1.msra.mxu0 0.0
  %1158 = vmatprep.subr.mxu0 0.0
  %1159 = vmatpush1.msra.mxu0 0.0
  %1160 = vmatprep.mubr.f32.mxu0 0.0
  %1161 = vmatmul.mubr.f32.gmra.mrb[0].mxu0 %v1091
  %v1162 = vpop.f32.mrb[0].mxu0
  %v1163 = vadd.f32 0.0, %v1162
  %v1164 = vpop.f32.mrb[0].mxu0
  %v1165 = vadd.f32 0.0, %v1164
  %1166 = vmatprep.mubr.f32.mxu0 0.0
  %1167 = vmatmul.mubr.f32.gmra.mrb[0].mxu0 %v1094
  %v1168 = vpop.f32.mrb[0].mxu0
  %v1169 = vadd.f32 0.0, %v1168
  %v1170 = vpop.f32.mrb[0].mxu0
  %v1171 = vadd.f32 0.0, %v1170
  %1172 = vdwg.mxu0
  %1173 = vmatprep.subr.mxu0 %v1055
  %1174 = vmatpush1.msra.mxu0 %v1054
  %1175 = vmatprep.subr.mxu0 %v1059
  %1176 = vmatpush1.msra.mxu0 %v1058
  %1177 = vmatprep.subr.mxu0 %v1063
  %1178 = vmatpush1.msra.mxu0 %v1062
  %1179 = vmatprep.subr.mxu0 %v1067
  %1180 = vmatpush1.msra.mxu0 %v1066
  %1181 = vmatprep.subr.mxu0 %v1071
  %1182 = vmatpush1.msra.mxu0 %v1070
  %1183 = vmatprep.subr.mxu0 %v1075
  %1184 = vmatpush1.msra.mxu0 %v1074
  %1185 = vmatprep.subr.mxu0 %v1079
  %1186 = vmatpush1.msra.mxu0 %v1078
  %1187 = vmatprep.subr.mxu0 %v1083
  %1188 = vmatpush1.msra.mxu0 %v1082
  %1189 = vmatprep.subr.mxu0 %v1087
  %1190 = vmatpush1.msra.mxu0 %v1086
  %1191 = vmatprep.subr.mxu0 0.0
  %1192 = vmatpush1.msra.mxu0 0.0
  %1193 = vmatprep.subr.mxu0 0.0
  %1194 = vmatpush1.msra.mxu0 0.0
  %1195 = vmatprep.subr.mxu0 0.0
  %1196 = vmatpush1.msra.mxu0 0.0
  %1197 = vmatprep.subr.mxu0 0.0
  %1198 = vmatpush1.msra.mxu0 0.0
  %1199 = vmatprep.subr.mxu0 0.0
  %1200 = vmatpush1.msra.mxu0 0.0
  %1201 = vmatprep.subr.mxu0 0.0
  %1202 = vmatpush1.msra.mxu0 0.0
  %1203 = vmatprep.subr.mxu0 0.0
  %1204 = vmatpush1.msra.mxu0 0.0
  %1205 = vmatprep.subr.mxu0 0.0
  %1206 = vmatpush1.msra.mxu0 0.0
  %1207 = vmatprep.subr.mxu0 0.0
  %1208 = vmatpush1.msra.mxu0 0.0
  %1209 = vmatprep.subr.mxu0 0.0
  %1210 = vmatpush1.msra.mxu0 0.0
  %1211 = vmatprep.subr.mxu0 0.0
  %1212 = vmatpush1.msra.mxu0 0.0
  %1213 = vmatprep.subr.mxu0 0.0
  %1214 = vmatpush1.msra.mxu0 0.0
  %1215 = vmatprep.subr.mxu0 0.0
  %1216 = vmatpush1.msra.mxu0 0.0
  %1217 = vmatprep.subr.mxu0 0.0
  %1218 = vmatpush1.msra.mxu0 0.0
  %1219 = vmatprep.subr.mxu0 0.0
  %1220 = vmatpush1.msra.mxu0 0.0
  %1221 = vmatprep.subr.mxu0 0.0
  %1222 = vmatpush1.msra.mxu0 0.0
  %1223 = vmatprep.subr.mxu0 0.0
  %1224 = vmatpush1.msra.mxu0 0.0
  %1225 = vmatprep.subr.mxu0 0.0
  %1226 = vmatpush1.msra.mxu0 0.0
  %1227 = vmatprep.subr.mxu0 0.0
  %1228 = vmatpush1.msra.mxu0 0.0
  %1229 = vmatprep.subr.mxu0 0.0
  %1230 = vmatpush1.msra.mxu0 0.0
  %1231 = vmatprep.subr.mxu0 0.0
  %1232 = vmatpush1.msra.mxu0 0.0
  %1233 = vmatprep.subr.mxu0 0.0
  %1234 = vmatpush1.msra.mxu0 0.0
  %1235 = vmatprep.subr.mxu0 0.0
  %1236 = vmatpush1.msra.mxu0 0.0
  %1237 = vmatprep.mubr.f32.mxu0 0.0
  %1238 = vmatmul.mubr.f32.gmra.mrb[0].mxu0 %v1091
  %v1239 = vpop.f32.mrb[0].mxu0
  %v1240 = vadd.f32 0.0, %v1239
  %v1241 = vpop.f32.mrb[0].mxu0
  %v1242 = vadd.f32 0.0, %v1241
  %1243 = vmatprep.mubr.f32.mxu0 0.0
  %1244 = vmatmul.mubr.f32.gmra.mrb[0].mxu0 %v1094
  %v1245 = vpop.f32.mrb[0].mxu0
  %v1246 = vadd.f32 0.0, %v1245
  %v1247 = vpop.f32.mrb[0].mxu0
  %v1248 = vadd.f32 0.0, %v1247
  %1249 = vdwg.mxu0
  %v1250 = vadd.f32 %v1163, %v1165
  %v1251 = vadd.f32 %v1250, %v1240
  %v1252 = vadd.f32 %v1251, %v1242
  %1253 = vadd.xlane.f32.xlu0 %v1252
  %v1254 = vpop.xlane.xlu0 %1253
  %v1255 = vadd.f32 %v1169, %v1171
  %v1256 = vadd.f32 %v1255, %v1246
  %v1257 = vadd.f32 %v1256, %v1248
  %1258 = vadd.xlane.f32.xlu0 %v1257
  %v1259 = vpop.xlane.xlu0 %1258
  %v1260 = vmul.f32 %v1254, 0.001953125
  %v1261 = vmul.f32 %v1259, 0.001953125
  %v1262 = vmul.f32 %v1163, %v1163
  %v1263 = vmul.f32 %v1165, %v1165
  %v1264 = vmul.f32 %v1240, %v1240
  %v1265 = vmul.f32 %v1242, %v1242
  %v1266 = vmul.f32 %v1169, %v1169
  %v1267 = vmul.f32 %v1171, %v1171
  %v1268 = vmul.f32 %v1246, %v1246
  %v1269 = vmul.f32 %v1248, %v1248
  %v1270 = vadd.f32 %v1262, %v1263
  %v1271 = vadd.f32 %v1270, %v1264
  %v1272 = vadd.f32 %v1271, %v1265
  %1273 = vadd.xlane.f32.xlu0 %v1272
  %v1274 = vpop.xlane.xlu0 %1273
  %v1275 = vadd.f32 %v1266, %v1267
  %v1276 = vadd.f32 %v1275, %v1268
  %v1277 = vadd.f32 %v1276, %v1269
  %1278 = vadd.xlane.f32.xlu0 %v1277
  %v1279 = vpop.xlane.xlu0 %1278
  %v1280 = vmul.f32 %v1274, 0.001953125
  %v1281 = vmul.f32 %v1279, 0.001953125
  %v1282 = vmul.f32 %v1260, %v1260
  %v1283 = vmul.f32 %v1261, %v1261
  %v1284 = vsub.f32 %v1280, %v1282
  %v1285 = vsub.f32 %v1281, %v1283
  %v1286 = vsub.f32 %v1163, %v1260
  %v1287 = vsub.f32 %v1165, %v1260
  %v1288 = vsub.f32 %v1240, %v1260
  %v1289 = vsub.f32 %v1242, %v1260
  %v1290 = vsub.f32 %v1169, %v1261
  %v1291 = vsub.f32 %v1171, %v1261
  %v1292 = vsub.f32 %v1246, %v1261
  %v1293 = vsub.f32 %v1248, %v1261
  %v1294 = vadd.f32 %v1284, 1e-05
  %v1295 = vadd.f32 %v1285, 1e-05
  %v1296 = vrsqrt.pop %v1294
  %v1297 = vrsqrt.pop %v1295
  %v1298 = vmul.f32 %v1286, %v1296
  %v1299 = vmul.f32 %v1287, %v1296
  %v1300 = vmul.f32 %v1288, %v1296
  %v1301 = vmul.f32 %v1289, %v1296
  %v1302 = vmul.f32 %v1290, %v1297
  %v1303 = vmul.f32 %v1291, %v1297
  %v1304 = vmul.f32 %v1292, %v1297
  %v1305 = vmul.f32 %v1293, %v1297
  %v1306 = vmax.f32 %v1298, 0.0
  %v1307 = vmax.f32 %v1299, 0.0
  %v1308 = vmax.f32 %v1300, 0.0
  %v1309 = vmax.f32 %v1301, 0.0
  %v1310 = vmax.f32 %v1302, 0.0
  %v1311 = vmax.f32 %v1303, 0.0
  %v1312 = vmax.f32 %v1304, 0.0
  %v1313 = vmax.f32 %v1305, 0.0
  %1314 = vst [vmem:[#allocation2 + $0x8] sm:$0xff] %v1306
  %1315 = vst [vmem:[#allocation2 + $0x10] sm:$0xff] %v1307
  %1316 = vst [vmem:[#allocation2 + $0x18] sm:$0xff] %v1308
  %1317 = vst [vmem:[#allocation2 + $0x20] sm:$0xff] %v1309
  %1318 = vst [vmem:[#allocation2 + $0x38] sm:$0xff] %v1310
  %1319 = vst [vmem:[#allocation2 + $0x40] sm:$0xff] %v1311
  %1320 = vst [vmem:[#allocation2 + $0x48] sm:$0xff] %v1312
  %1321 = vst [vmem:[#allocation2 + $0x50] sm:$0xff] %v1313
  %v1322 = vld [vmem:[#allocation2] sm:$0xff]
  %v1323 = vld [vmem:[#allocation2 + $0x8] sm:$0xff]
  %v1324 = vld [vmem:[#allocation2 + $0x10] sm:$0xff]
  %v1325 = vld [vmem:[#allocation2 + $0x18] sm:$0xff]
  %v1326 = vld [vmem:[#allocation2 + $0x20] sm:$0xff]
  %v1327 = vld [vmem:[#allocation2 + $0x30] sm:$0xff]
  %v1328 = vld [vmem:[#allocation2 + $0x38] sm:$0xff]
  %v1329 = vld [vmem:[#allocation2 + $0x40] sm:$0xff]
  %v1330 = vld [vmem:[#allocation2 + $0x48] sm:$0xff]
  %v1331 = vld [vmem:[#allocation2 + $0x50] sm:$0xff]
  %1342 = vrot.lane.b32.xlu0 %v1322, 17
  %v1343 = vpop.permute.xlu0 %1342
  %1344 = vrot.lane.b32.xlu0 %v1323, 17
  %v1345 = vpop.permute.xlu0 %1344
  %1346 = vrot.lane.b32.xlu0 %v1324, 17
  %v1347 = vpop.permute.xlu0 %1346
  %1348 = vrot.lane.b32.xlu0 %v1325, 17
  %v1349 = vpop.permute.xlu0 %1348
  %1350 = vrot.lane.b32.xlu0 %v1326, 17
  %v1351 = vpop.permute.xlu0 %1350
  %1352 = vrot.lane.b32.xlu0 %v1327, 17
  %v1353 = vpop.permute.xlu0 %1352
  %1354 = vrot.lane.b32.xlu0 %v1328, 17
  %v1355 = vpop.permute.xlu0 %1354
  %1356 = vrot.lane.b32.xlu0 %v1329, 17
  %v1357 = vpop.permute.xlu0 %1356
  %1358 = vrot.lane.b32.xlu0 %v1330, 17
  %v1359 = vpop.permute.xlu0 %1358
  %1360 = vrot.lane.b32.xlu0 %v1331, 17
  %v1361 = vpop.permute.xlu0 %1360
  %v1362 = vsel %vm103, %v1343, %v1345
  %v1363 = vsel %vm103, %v1345, %v1347
  %v1364 = vsel %vm103, %v1347, %v1349
  %v1365 = vsel %vm103, %v1349, %v1351
  %v1366 = vsel %vm103, %v1353, %v1355
  %v1367 = vsel %vm103, %v1355, %v1357
  %v1368 = vsel %vm103, %v1357, %v1359
  %v1369 = vsel %vm103, %v1359, %v1361
  %v1378 = vsel %vm84, %v1362, 0.0
  %v1379 = vsel %vm85, %v1363, 0.0
  %v1380 = vsel %vm86, %v1364, 0.0
  %v1381 = vsel %vm87, %v1365, 0.0
  %v1382 = vsel %vm84, %v1366, 0.0
  %v1383 = vsel %vm85, %v1367, 0.0
  %v1384 = vsel %vm86, %v1368, 0.0
  %v1385 = vsel %vm87, %v1369, 0.0
  %1386 = vst [vmem:[#allocation3] sm:$0xff] %v1378
  %1387 = vst [vmem:[#allocation3 + $0x8] sm:$0xff] %v1379
  %1388 = vst [vmem:[#allocation3 + $0x10] sm:$0xff] %v1380
  %1389 = vst [vmem:[#allocation3 + $0x18] sm:$0xff] %v1381
  %1390 = vst [vmem:[#allocation3 + $0x20] sm:$0xff] %v1382
  %1391 = vst [vmem:[#allocation3 + $0x28] sm:$0xff] %v1383
  %1392 = vst [vmem:[#allocation3 + $0x30] sm:$0xff] %v1384
  %1393 = vst [vmem:[#allocation3 + $0x38] sm:$0xff] %v1385
  %v1394 = vld [vmem:[#allocation2] sm:$0xff]
  %v1395 = vld [vmem:[#allocation2 + $0x8] sm:$0xff]
  %v1396 = vld [vmem:[#allocation2 + $0x10] sm:$0xff]
  %v1397 = vld [vmem:[#allocation2 + $0x18] sm:$0xff]
  %v1398 = vld [vmem:[#allocation2 + $0x20] sm:$0xff]
  %v1399 = vld [vmem:[#allocation2 + $0x30] sm:$0xff]
  %v1400 = vld [vmem:[#allocation2 + $0x38] sm:$0xff]
  %v1401 = vld [vmem:[#allocation2 + $0x40] sm:$0xff]
  %v1402 = vld [vmem:[#allocation2 + $0x48] sm:$0xff]
  %v1403 = vld [vmem:[#allocation2 + $0x50] sm:$0xff]
  %1414 = vrot.lane.b32.xlu0 %v1394, 16
  %v1415 = vpop.permute.xlu0 %1414
  %1416 = vrot.lane.b32.xlu0 %v1395, 16
  %v1417 = vpop.permute.xlu0 %1416
  %1418 = vrot.lane.b32.xlu0 %v1396, 16
  %v1419 = vpop.permute.xlu0 %1418
  %1420 = vrot.lane.b32.xlu0 %v1397, 16
  %v1421 = vpop.permute.xlu0 %1420
  %1422 = vrot.lane.b32.xlu0 %v1398, 16
  %v1423 = vpop.permute.xlu0 %1422
  %1424 = vrot.lane.b32.xlu0 %v1399, 16
  %v1425 = vpop.permute.xlu0 %1424
  %1426 = vrot.lane.b32.xlu0 %v1400, 16
  %v1427 = vpop.permute.xlu0 %1426
  %1428 = vrot.lane.b32.xlu0 %v1401, 16
  %v1429 = vpop.permute.xlu0 %1428
  %1430 = vrot.lane.b32.xlu0 %v1402, 16
  %v1431 = vpop.permute.xlu0 %1430
  %1432 = vrot.lane.b32.xlu0 %v1403, 16
  %v1433 = vpop.permute.xlu0 %1432
  %v1434 = vsel %vm161, %v1415, %v1417
  %v1435 = vsel %vm161, %v1417, %v1419
  %v1436 = vsel %vm161, %v1419, %v1421
  %v1437 = vsel %vm161, %v1421, %v1423
  %v1438 = vsel %vm161, %v1425, %v1427
  %v1439 = vsel %vm161, %v1427, %v1429
  %v1440 = vsel %vm161, %v1429, %v1431
  %v1441 = vsel %vm161, %v1431, %v1433
  %v1450 = vsel %vm142, %v1434, 0.0
  %v1451 = vsel %vm143, %v1435, 0.0
  %v1452 = vsel %vm144, %v1436, 0.0
  %v1453 = vsel %vm145, %v1437, 0.0
  %v1454 = vsel %vm142, %v1438, 0.0
  %v1455 = vsel %vm143, %v1439, 0.0
  %v1456 = vsel %vm144, %v1440, 0.0
  %v1457 = vsel %vm145, %v1441, 0.0
  %1458 = vst [vmem:[#allocation3 + $0x40] sm:$0xff] %v1450
  %1459 = vst [vmem:[#allocation3 + $0x48] sm:$0xff] %v1451
  %1460 = vst [vmem:[#allocation3 + $0x50] sm:$0xff] %v1452
  %1461 = vst [vmem:[#allocation3 + $0x58] sm:$0xff] %v1453
  %1462 = vst [vmem:[#allocation3 + $0x60] sm:$0xff] %v1454
  %1463 = vst [vmem:[#allocation3 + $0x68] sm:$0xff] %v1455
  %1464 = vst [vmem:[#allocation3 + $0x70] sm:$0xff] %v1456
  %1465 = vst [vmem:[#allocation3 + $0x78] sm:$0xff] %v1457
  %v1466 = vld [vmem:[#allocation2] sm:$0xff]
  %v1467 = vld [vmem:[#allocation2 + $0x8] sm:$0xff]
  %v1468 = vld [vmem:[#allocation2 + $0x10] sm:$0xff]
  %v1469 = vld [vmem:[#allocation2 + $0x18] sm:$0xff]
  %v1470 = vld [vmem:[#allocation2 + $0x20] sm:$0xff]
  %v1471 = vld [vmem:[#allocation2 + $0x30] sm:$0xff]
  %v1472 = vld [vmem:[#allocation2 + $0x38] sm:$0xff]
  %v1473 = vld [vmem:[#allocation2 + $0x40] sm:$0xff]
  %v1474 = vld [vmem:[#allocation2 + $0x48] sm:$0xff]
  %v1475 = vld [vmem:[#allocation2 + $0x50] sm:$0xff]
  %1486 = vrot.lane.b32.xlu0 %v1466, 15
  %v1487 = vpop.permute.xlu0 %1486
  %1488 = vrot.lane.b32.xlu0 %v1467, 15
  %v1489 = vpop.permute.xlu0 %1488
  %1490 = vrot.lane.b32.xlu0 %v1468, 15
  %v1491 = vpop.permute.xlu0 %1490
  %1492 = vrot.lane.b32.xlu0 %v1469, 15
  %v1493 = vpop.permute.xlu0 %1492
  %1494 = vrot.lane.b32.xlu0 %v1470, 15
  %v1495 = vpop.permute.xlu0 %1494
  %1496 = vrot.lane.b32.xlu0 %v1471, 15
  %v1497 = vpop.permute.xlu0 %1496
  %1498 = vrot.lane.b32.xlu0 %v1472, 15
  %v1499 = vpop.permute.xlu0 %1498
  %1500 = vrot.lane.b32.xlu0 %v1473, 15
  %v1501 = vpop.permute.xlu0 %1500
  %1502 = vrot.lane.b32.xlu0 %v1474, 15
  %v1503 = vpop.permute.xlu0 %1502
  %1504 = vrot.lane.b32.xlu0 %v1475, 15
  %v1505 = vpop.permute.xlu0 %1504
  %v1506 = vsel %vm220, %v1487, %v1489
  %v1507 = vsel %vm220, %v1489, %v1491
  %v1508 = vsel %vm220, %v1491, %v1493
  %v1509 = vsel %vm220, %v1493, %v1495
  %v1510 = vsel %vm220, %v1497, %v1499
  %v1511 = vsel %vm220, %v1499, %v1501
  %v1512 = vsel %vm220, %v1501, %v1503
  %v1513 = vsel %vm220, %v1503, %v1505
  %v1522 = vsel %vm201, %v1506, 0.0
  %v1523 = vsel %vm202, %v1507, 0.0
  %v1524 = vsel %vm203, %v1508, 0.0
  %v1525 = vsel %vm204, %v1509, 0.0
  %v1526 = vsel %vm201, %v1510, 0.0
  %v1527 = vsel %vm202, %v1511, 0.0
  %v1528 = vsel %vm203, %v1512, 0.0
  %v1529 = vsel %vm204, %v1513, 0.0
  %1530 = vst [vmem:[#allocation3 + $0x80] sm:$0xff] %v1522
  %1531 = vst [vmem:[#allocation3 + $0x88] sm:$0xff] %v1523
  %1532 = vst [vmem:[#allocation3 + $0x90] sm:$0xff] %v1524
  %1533 = vst [vmem:[#allocation3 + $0x98] sm:$0xff] %v1525
  %1534 = vst [vmem:[#allocation3 + $0xa0] sm:$0xff] %v1526
  %1535 = vst [vmem:[#allocation3 + $0xa8] sm:$0xff] %v1527
  %1536 = vst [vmem:[#allocation3 + $0xb0] sm:$0xff] %v1528
  %1537 = vst [vmem:[#allocation3 + $0xb8] sm:$0xff] %v1529
  %v1538 = vld [vmem:[#allocation2] sm:$0xff]
  %v1539 = vld [vmem:[#allocation2 + $0x8] sm:$0xff]
  %v1540 = vld [vmem:[#allocation2 + $0x10] sm:$0xff]
  %v1541 = vld [vmem:[#allocation2 + $0x18] sm:$0xff]
  %v1542 = vld [vmem:[#allocation2 + $0x20] sm:$0xff]
  %v1543 = vld [vmem:[#allocation2 + $0x30] sm:$0xff]
  %v1544 = vld [vmem:[#allocation2 + $0x38] sm:$0xff]
  %v1545 = vld [vmem:[#allocation2 + $0x40] sm:$0xff]
  %v1546 = vld [vmem:[#allocation2 + $0x48] sm:$0xff]
  %v1547 = vld [vmem:[#allocation2 + $0x50] sm:$0xff]
  %1558 = vrot.lane.b32.xlu0 %v1538, 1
  %v1559 = vpop.permute.xlu0 %1558
  %1560 = vrot.lane.b32.xlu0 %v1539, 1
  %v1561 = vpop.permute.xlu0 %1560
  %1562 = vrot.lane.b32.xlu0 %v1540, 1
  %v1563 = vpop.permute.xlu0 %1562
  %1564 = vrot.lane.b32.xlu0 %v1541, 1
  %v1565 = vpop.permute.xlu0 %1564
  %1566 = vrot.lane.b32.xlu0 %v1542, 1
  %v1567 = vpop.permute.xlu0 %1566
  %1568 = vrot.lane.b32.xlu0 %v1543, 1
  %v1569 = vpop.permute.xlu0 %1568
  %1570 = vrot.lane.b32.xlu0 %v1544, 1
  %v1571 = vpop.permute.xlu0 %1570
  %1572 = vrot.lane.b32.xlu0 %v1545, 1
  %v1573 = vpop.permute.xlu0 %1572
  %1574 = vrot.lane.b32.xlu0 %v1546, 1
  %v1575 = vpop.permute.xlu0 %1574
  %1576 = vrot.lane.b32.xlu0 %v1547, 1
  %v1577 = vpop.permute.xlu0 %1576
  %v1578 = vsel %vm278, %v1559, %v1561
  %v1579 = vsel %vm278, %v1561, %v1563
  %v1580 = vsel %vm278, %v1563, %v1565
  %v1581 = vsel %vm278, %v1565, %v1567
  %v1582 = vsel %vm278, %v1569, %v1571
  %v1583 = vsel %vm278, %v1571, %v1573
  %v1584 = vsel %vm278, %v1573, %v1575
  %v1585 = vsel %vm278, %v1575, %v1577
  %v1594 = vsel %vm259, %v1578, 0.0
  %v1595 = vsel %vm260, %v1579, 0.0
  %v1596 = vsel %vm261, %v1580, 0.0
  %v1597 = vsel %vm262, %v1581, 0.0
  %v1598 = vsel %vm259, %v1582, 0.0
  %v1599 = vsel %vm260, %v1583, 0.0
  %v1600 = vsel %vm261, %v1584, 0.0
  %v1601 = vsel %vm262, %v1585, 0.0
  %1602 = vst [vmem:[#allocation3 + $0xc0] sm:$0xff] %v1594
  %1603 = vst [vmem:[#allocation3 + $0xc8] sm:$0xff] %v1595
  %1604 = vst [vmem:[#allocation3 + $0xd0] sm:$0xff] %v1596
  %1605 = vst [vmem:[#allocation3 + $0xd8] sm:$0xff] %v1597
  %1606 = vst [vmem:[#allocation3 + $0xe0] sm:$0xff] %v1598
  %1607 = vst [vmem:[#allocation3 + $0xe8] sm:$0xff] %v1599
  %1608 = vst [vmem:[#allocation3 + $0xf0] sm:$0xff] %v1600
  %1609 = vst [vmem:[#allocation3 + $0xf8] sm:$0xff] %v1601
  %v1610 = vld [vmem:[#allocation2 + $0x8] sm:$0xff]
  %v1611 = vld [vmem:[#allocation2 + $0x10] sm:$0xff]
  %v1612 = vld [vmem:[#allocation2 + $0x18] sm:$0xff]
  %v1613 = vld [vmem:[#allocation2 + $0x20] sm:$0xff]
  %v1614 = vld [vmem:[#allocation2 + $0x38] sm:$0xff]
  %v1615 = vld [vmem:[#allocation2 + $0x40] sm:$0xff]
  %v1616 = vld [vmem:[#allocation2 + $0x48] sm:$0xff]
  %v1617 = vld [vmem:[#allocation2 + $0x50] sm:$0xff]
  %1618 = vst [vmem:[#allocation3 + $0x100] sm:$0xff] %v1610
  %1619 = vst [vmem:[#allocation3 + $0x108] sm:$0xff] %v1611
  %1620 = vst [vmem:[#allocation3 + $0x110] sm:$0xff] %v1612
  %1621 = vst [vmem:[#allocation3 + $0x118] sm:$0xff] %v1613
  %1622 = vst [vmem:[#allocation3 + $0x120] sm:$0xff] %v1614
  %1623 = vst [vmem:[#allocation3 + $0x128] sm:$0xff] %v1615
  %1624 = vst [vmem:[#allocation3 + $0x130] sm:$0xff] %v1616
  %1625 = vst [vmem:[#allocation3 + $0x138] sm:$0xff] %v1617
  %v1626 = vld [vmem:[#allocation2 + $0x8] sm:$0xff]
  %v1627 = vld [vmem:[#allocation2 + $0x10] sm:$0xff]
  %v1628 = vld [vmem:[#allocation2 + $0x18] sm:$0xff]
  %v1629 = vld [vmem:[#allocation2 + $0x20] sm:$0xff]
  %v1630 = vld [vmem:[#allocation2 + $0x28] sm:$0xff]
  %v1631 = vld [vmem:[#allocation2 + $0x38] sm:$0xff]
  %v1632 = vld [vmem:[#allocation2 + $0x40] sm:$0xff]
  %v1633 = vld [vmem:[#allocation2 + $0x48] sm:$0xff]
  %v1634 = vld [vmem:[#allocation2 + $0x50] sm:$0xff]
  %v1635 = vld [vmem:[#allocation2 + $0x58] sm:$0xff]
  %1646 = vrot.lane.b32.xlu0 %v1626, 127
  %v1647 = vpop.permute.xlu0 %1646
  %1648 = vrot.lane.b32.xlu0 %v1627, 127
  %v1649 = vpop.permute.xlu0 %1648
  %1650 = vrot.lane.b32.xlu0 %v1628, 127
  %v1651 = vpop.permute.xlu0 %1650
  %1652 = vrot.lane.b32.xlu0 %v1629, 127
  %v1653 = vpop.permute.xlu0 %1652
  %1654 = vrot.lane.b32.xlu0 %v1630, 127
  %v1655 = vpop.permute.xlu0 %1654
  %1656 = vrot.lane.b32.xlu0 %v1631, 127
  %v1657 = vpop.permute.xlu0 %1656
  %1658 = vrot.lane.b32.xlu0 %v1632, 127
  %v1659 = vpop.permute.xlu0 %1658
  %1660 = vrot.lane.b32.xlu0 %v1633, 127
  %v1661 = vpop.permute.xlu0 %1660
  %1662 = vrot.lane.b32.xlu0 %v1634, 127
  %v1663 = vpop.permute.xlu0 %1662
  %1664 = vrot.lane.b32.xlu0 %v1635, 127
  %v1665 = vpop.permute.xlu0 %1664
  %v1666 = vsel %vm344, %v1647, %v1649
  %v1667 = vsel %vm344, %v1649, %v1651
  %v1668 = vsel %vm344, %v1651, %v1653
  %v1669 = vsel %vm344, %v1653, %v1655
  %v1670 = vsel %vm344, %v1657, %v1659
  %v1671 = vsel %vm344, %v1659, %v1661
  %v1672 = vsel %vm344, %v1661, %v1663
  %v1673 = vsel %vm344, %v1663, %v1665
  %v1682 = vsel %vm325, %v1666, 0.0
  %v1683 = vsel %vm326, %v1667, 0.0
  %v1684 = vsel %vm327, %v1668, 0.0
  %v1685 = vsel %vm328, %v1669, 0.0
  %v1686 = vsel %vm325, %v1670, 0.0
  %v1687 = vsel %vm326, %v1671, 0.0
  %v1688 = vsel %vm327, %v1672, 0.0
  %v1689 = vsel %vm328, %v1673, 0.0
  %1690 = vst [vmem:[#allocation3 + $0x140] sm:$0xff] %v1682
  %1691 = vst [vmem:[#allocation3 + $0x148] sm:$0xff] %v1683
  %1692 = vst [vmem:[#allocation3 + $0x150] sm:$0xff] %v1684
  %1693 = vst [vmem:[#allocation3 + $0x158] sm:$0xff] %v1685
  %1694 = vst [vmem:[#allocation3 + $0x160] sm:$0xff] %v1686
  %1695 = vst [vmem:[#allocation3 + $0x168] sm:$0xff] %v1687
  %1696 = vst [vmem:[#allocation3 + $0x170] sm:$0xff] %v1688
  %1697 = vst [vmem:[#allocation3 + $0x178] sm:$0xff] %v1689
  %v1698 = vld [vmem:[#allocation2 + $0x8] sm:$0xff]
  %v1699 = vld [vmem:[#allocation2 + $0x10] sm:$0xff]
  %v1700 = vld [vmem:[#allocation2 + $0x18] sm:$0xff]
  %v1701 = vld [vmem:[#allocation2 + $0x20] sm:$0xff]
  %v1702 = vld [vmem:[#allocation2 + $0x28] sm:$0xff]
  %v1703 = vld [vmem:[#allocation2 + $0x38] sm:$0xff]
  %v1704 = vld [vmem:[#allocation2 + $0x40] sm:$0xff]
  %v1705 = vld [vmem:[#allocation2 + $0x48] sm:$0xff]
  %v1706 = vld [vmem:[#allocation2 + $0x50] sm:$0xff]
  %v1707 = vld [vmem:[#allocation2 + $0x58] sm:$0xff]
  %1718 = vrot.lane.b32.xlu0 %v1698, 113
  %v1719 = vpop.permute.xlu0 %1718
  %1720 = vrot.lane.b32.xlu0 %v1699, 113
  %v1721 = vpop.permute.xlu0 %1720
  %1722 = vrot.lane.b32.xlu0 %v1700, 113
  %v1723 = vpop.permute.xlu0 %1722
  %1724 = vrot.lane.b32.xlu0 %v1701, 113
  %v1725 = vpop.permute.xlu0 %1724
  %1726 = vrot.lane.b32.xlu0 %v1702, 113
  %v1727 = vpop.permute.xlu0 %1726
  %1728 = vrot.lane.b32.xlu0 %v1703, 113
  %v1729 = vpop.permute.xlu0 %1728
  %1730 = vrot.lane.b32.xlu0 %v1704, 113
  %v1731 = vpop.permute.xlu0 %1730
  %1732 = vrot.lane.b32.xlu0 %v1705, 113
  %v1733 = vpop.permute.xlu0 %1732
  %1734 = vrot.lane.b32.xlu0 %v1706, 113
  %v1735 = vpop.permute.xlu0 %1734
  %1736 = vrot.lane.b32.xlu0 %v1707, 113
  %v1737 = vpop.permute.xlu0 %1736
  %v1738 = vsel %vm403, %v1719, %v1721
  %v1739 = vsel %vm403, %v1721, %v1723
  %v1740 = vsel %vm403, %v1723, %v1725
  %v1741 = vsel %vm403, %v1725, %v1727
  %v1742 = vsel %vm403, %v1729, %v1731
  %v1743 = vsel %vm403, %v1731, %v1733
  %v1744 = vsel %vm403, %v1733, %v1735
  %v1745 = vsel %vm403, %v1735, %v1737
  %v1754 = vsel %vm384, %v1738, 0.0
  %v1755 = vsel %vm385, %v1739, 0.0
  %v1756 = vsel %vm386, %v1740, 0.0
  %v1757 = vsel %vm387, %v1741, 0.0
  %v1758 = vsel %vm384, %v1742, 0.0
  %v1759 = vsel %vm385, %v1743, 0.0
  %v1760 = vsel %vm386, %v1744, 0.0
  %v1761 = vsel %vm387, %v1745, 0.0
  %1762 = vst [vmem:[#allocation3 + $0x180] sm:$0xff] %v1754
  %1763 = vst [vmem:[#allocation3 + $0x188] sm:$0xff] %v1755
  %1764 = vst [vmem:[#allocation3 + $0x190] sm:$0xff] %v1756
  %1765 = vst [vmem:[#allocation3 + $0x198] sm:$0xff] %v1757
  %1766 = vst [vmem:[#allocation3 + $0x1a0] sm:$0xff] %v1758
  %1767 = vst [vmem:[#allocation3 + $0x1a8] sm:$0xff] %v1759
  %1768 = vst [vmem:[#allocation3 + $0x1b0] sm:$0xff] %v1760
  %1769 = vst [vmem:[#allocation3 + $0x1b8] sm:$0xff] %v1761
  %v1770 = vld [vmem:[#allocation2 + $0x8] sm:$0xff]
  %v1771 = vld [vmem:[#allocation2 + $0x10] sm:$0xff]
  %v1772 = vld [vmem:[#allocation2 + $0x18] sm:$0xff]
  %v1773 = vld [vmem:[#allocation2 + $0x20] sm:$0xff]
  %v1774 = vld [vmem:[#allocation2 + $0x28] sm:$0xff]
  %v1775 = vld [vmem:[#allocation2 + $0x38] sm:$0xff]
  %v1776 = vld [vmem:[#allocation2 + $0x40] sm:$0xff]
  %v1777 = vld [vmem:[#allocation2 + $0x48] sm:$0xff]
  %v1778 = vld [vmem:[#allocation2 + $0x50] sm:$0xff]
  %v1779 = vld [vmem:[#allocation2 + $0x58] sm:$0xff]
  %1790 = vrot.lane.b32.xlu0 %v1770, 112
  %v1791 = vpop.permute.xlu0 %1790
  %1792 = vrot.lane.b32.xlu0 %v1771, 112
  %v1793 = vpop.permute.xlu0 %1792
  %1794 = vrot.lane.b32.xlu0 %v1772, 112
  %v1795 = vpop.permute.xlu0 %1794
  %1796 = vrot.lane.b32.xlu0 %v1773, 112
  %v1797 = vpop.permute.xlu0 %1796
  %1798 = vrot.lane.b32.xlu0 %v1774, 112
  %v1799 = vpop.permute.xlu0 %1798
  %1800 = vrot.lane.b32.xlu0 %v1775, 112
  %v1801 = vpop.permute.xlu0 %1800
  %1802 = vrot.lane.b32.xlu0 %v1776, 112
  %v1803 = vpop.permute.xlu0 %1802
  %1804 = vrot.lane.b32.xlu0 %v1777, 112
  %v1805 = vpop.permute.xlu0 %1804
  %1806 = vrot.lane.b32.xlu0 %v1778, 112
  %v1807 = vpop.permute.xlu0 %1806
  %1808 = vrot.lane.b32.xlu0 %v1779, 112
  %v1809 = vpop.permute.xlu0 %1808
  %v1810 = vsel %vm461, %v1791, %v1793
  %v1811 = vsel %vm461, %v1793, %v1795
  %v1812 = vsel %vm461, %v1795, %v1797
  %v1813 = vsel %vm461, %v1797, %v1799
  %v1814 = vsel %vm461, %v1801, %v1803
  %v1815 = vsel %vm461, %v1803, %v1805
  %v1816 = vsel %vm461, %v1805, %v1807
  %v1817 = vsel %vm461, %v1807, %v1809
  %v1826 = vsel %vm442, %v1810, 0.0
  %v1827 = vsel %vm443, %v1811, 0.0
  %v1828 = vsel %vm444, %v1812, 0.0
  %v1829 = vsel %vm445, %v1813, 0.0
  %v1830 = vsel %vm442, %v1814, 0.0
  %v1831 = vsel %vm443, %v1815, 0.0
  %v1832 = vsel %vm444, %v1816, 0.0
  %v1833 = vsel %vm445, %v1817, 0.0
  %1834 = vst [vmem:[#allocation3 + $0x1c0] sm:$0xff] %v1826
  %1835 = vst [vmem:[#allocation3 + $0x1c8] sm:$0xff] %v1827
  %1836 = vst [vmem:[#allocation3 + $0x1d0] sm:$0xff] %v1828
  %1837 = vst [vmem:[#allocation3 + $0x1d8] sm:$0xff] %v1829
  %1838 = vst [vmem:[#allocation3 + $0x1e0] sm:$0xff] %v1830
  %1839 = vst [vmem:[#allocation3 + $0x1e8] sm:$0xff] %v1831
  %1840 = vst [vmem:[#allocation3 + $0x1f0] sm:$0xff] %v1832
  %1841 = vst [vmem:[#allocation3 + $0x1f8] sm:$0xff] %v1833
  %v1842 = vld [vmem:[#allocation2 + $0x8] sm:$0xff]
  %v1843 = vld [vmem:[#allocation2 + $0x10] sm:$0xff]
  %v1844 = vld [vmem:[#allocation2 + $0x18] sm:$0xff]
  %v1845 = vld [vmem:[#allocation2 + $0x20] sm:$0xff]
  %v1846 = vld [vmem:[#allocation2 + $0x28] sm:$0xff]
  %v1847 = vld [vmem:[#allocation2 + $0x38] sm:$0xff]
  %v1848 = vld [vmem:[#allocation2 + $0x40] sm:$0xff]
  %v1849 = vld [vmem:[#allocation2 + $0x48] sm:$0xff]
  %v1850 = vld [vmem:[#allocation2 + $0x50] sm:$0xff]
  %v1851 = vld [vmem:[#allocation2 + $0x58] sm:$0xff]
  %1862 = vrot.lane.b32.xlu0 %v1842, 111
  %v1863 = vpop.permute.xlu0 %1862
  %1864 = vrot.lane.b32.xlu0 %v1843, 111
  %v1865 = vpop.permute.xlu0 %1864
  %1866 = vrot.lane.b32.xlu0 %v1844, 111
  %v1867 = vpop.permute.xlu0 %1866
  %1868 = vrot.lane.b32.xlu0 %v1845, 111
  %v1869 = vpop.permute.xlu0 %1868
  %1870 = vrot.lane.b32.xlu0 %v1846, 111
  %v1871 = vpop.permute.xlu0 %1870
  %1872 = vrot.lane.b32.xlu0 %v1847, 111
  %v1873 = vpop.permute.xlu0 %1872
  %1874 = vrot.lane.b32.xlu0 %v1848, 111
  %v1875 = vpop.permute.xlu0 %1874
  %1876 = vrot.lane.b32.xlu0 %v1849, 111
  %v1877 = vpop.permute.xlu0 %1876
  %1878 = vrot.lane.b32.xlu0 %v1850, 111
  %v1879 = vpop.permute.xlu0 %1878
  %1880 = vrot.lane.b32.xlu0 %v1851, 111
  %v1881 = vpop.permute.xlu0 %1880
  %v1882 = vsel %vm520, %v1863, %v1865
  %v1883 = vsel %vm520, %v1865, %v1867
  %v1884 = vsel %vm520, %v1867, %v1869
  %v1885 = vsel %vm520, %v1869, %v1871
  %v1886 = vsel %vm520, %v1873, %v1875
  %v1887 = vsel %vm520, %v1875, %v1877
  %v1888 = vsel %vm520, %v1877, %v1879
  %v1889 = vsel %vm520, %v1879, %v1881
  %v1898 = vsel %vm501, %v1882, 0.0
  %v1899 = vsel %vm502, %v1883, 0.0
  %v1900 = vsel %vm503, %v1884, 0.0
  %v1901 = vsel %vm504, %v1885, 0.0
  %v1902 = vsel %vm501, %v1886, 0.0
  %v1903 = vsel %vm502, %v1887, 0.0
  %v1904 = vsel %vm503, %v1888, 0.0
  %v1905 = vsel %vm504, %v1889, 0.0
  %1906 = vst [vmem:[#allocation3 + $0x200] sm:$0xff] %v1898
  %1907 = vst [vmem:[#allocation3 + $0x208] sm:$0xff] %v1899
  %1908 = vst [vmem:[#allocation3 + $0x210] sm:$0xff] %v1900
  %1909 = vst [vmem:[#allocation3 + $0x218] sm:$0xff] %v1901
  %1910 = vst [vmem:[#allocation3 + $0x220] sm:$0xff] %v1902
  %1911 = vst [vmem:[#allocation3 + $0x228] sm:$0xff] %v1903
  %1912 = vst [vmem:[#allocation3 + $0x230] sm:$0xff] %v1904
  %1913 = vst [vmem:[#allocation3 + $0x238] sm:$0xff] %v1905
  %v1914 = vld [vmem:[#allocation3] sm:$0xff]
  %v1915 = vld [vmem:[#allocation3 + $0x8] sm:$0xff]
  %v1916 = vld [vmem:[#allocation3 + $0x10] sm:$0xff]
  %v1917 = vld [vmem:[#allocation3 + $0x18] sm:$0xff]
  %v1918 = vld [vmem:[#allocation3 + $0x20] sm:$0xff]
  %v1919 = vld [vmem:[#allocation3 + $0x28] sm:$0xff]
  %v1920 = vld [vmem:[#allocation3 + $0x30] sm:$0xff]
  %v1921 = vld [vmem:[#allocation3 + $0x38] sm:$0xff]
  %v1922 = vld [vmem:[#allocation3 + $0x40] sm:$0xff]
  %v1923 = vld [vmem:[#allocation3 + $0x48] sm:$0xff]
  %v1924 = vld [vmem:[#allocation3 + $0x50] sm:$0xff]
  %v1925 = vld [vmem:[#allocation3 + $0x58] sm:$0xff]
  %v1926 = vld [vmem:[#allocation3 + $0x60] sm:$0xff]
  %v1927 = vld [vmem:[#allocation3 + $0x68] sm:$0xff]
  %v1928 = vld [vmem:[#allocation3 + $0x70] sm:$0xff]
  %v1929 = vld [vmem:[#allocation3 + $0x78] sm:$0xff]
  %v1930 = vld [vmem:[#allocation3 + $0x80] sm:$0xff]
  %v1931 = vld [vmem:[#allocation3 + $0x88] sm:$0xff]
  %v1932 = vld [vmem:[#allocation3 + $0x90] sm:$0xff]
  %v1933 = vld [vmem:[#allocation3 + $0x98] sm:$0xff]
  %v1934 = vld [vmem:[#allocation3 + $0xa0] sm:$0xff]
  %v1935 = vld [vmem:[#allocation3 + $0xa8] sm:$0xff]
  %v1936 = vld [vmem:[#allocation3 + $0xb0] sm:$0xff]
  %v1937 = vld [vmem:[#allocation3 + $0xb8] sm:$0xff]
  %v1938 = vld [vmem:[#allocation3 + $0xc0] sm:$0xff]
  %v1939 = vld [vmem:[#allocation3 + $0xc8] sm:$0xff]
  %v1940 = vld [vmem:[#allocation3 + $0xd0] sm:$0xff]
  %v1941 = vld [vmem:[#allocation3 + $0xd8] sm:$0xff]
  %v1942 = vld [vmem:[#allocation3 + $0xe0] sm:$0xff]
  %v1943 = vld [vmem:[#allocation3 + $0xe8] sm:$0xff]
  %v1944 = vld [vmem:[#allocation3 + $0xf0] sm:$0xff]
  %v1945 = vld [vmem:[#allocation3 + $0xf8] sm:$0xff]
  %v1946 = vld [vmem:[#allocation3 + $0x100] sm:$0xff]
  %v1947 = vld [vmem:[#allocation3 + $0x108] sm:$0xff]
  %v1948 = vld [vmem:[#allocation3 + $0x110] sm:$0xff]
  %v1949 = vld [vmem:[#allocation3 + $0x118] sm:$0xff]
  %v1950 = vld [vmem:[#allocation3 + $0x120] sm:$0xff]
  %v1951 = vld [vmem:[#allocation3 + $0x128] sm:$0xff]
  %v1952 = vld [vmem:[#allocation3 + $0x130] sm:$0xff]
  %v1953 = vld [vmem:[#allocation3 + $0x138] sm:$0xff]
  %v1954 = vld [vmem:[#allocation3 + $0x140] sm:$0xff]
  %v1955 = vld [vmem:[#allocation3 + $0x148] sm:$0xff]
  %v1956 = vld [vmem:[#allocation3 + $0x150] sm:$0xff]
  %v1957 = vld [vmem:[#allocation3 + $0x158] sm:$0xff]
  %v1958 = vld [vmem:[#allocation3 + $0x160] sm:$0xff]
  %v1959 = vld [vmem:[#allocation3 + $0x168] sm:$0xff]
  %v1960 = vld [vmem:[#allocation3 + $0x170] sm:$0xff]
  %v1961 = vld [vmem:[#allocation3 + $0x178] sm:$0xff]
  %v1962 = vld [vmem:[#allocation3 + $0x180] sm:$0xff]
  %v1963 = vld [vmem:[#allocation3 + $0x188] sm:$0xff]
  %v1964 = vld [vmem:[#allocation3 + $0x190] sm:$0xff]
  %v1965 = vld [vmem:[#allocation3 + $0x198] sm:$0xff]
  %v1966 = vld [vmem:[#allocation3 + $0x1a0] sm:$0xff]
  %v1967 = vld [vmem:[#allocation3 + $0x1a8] sm:$0xff]
  %v1968 = vld [vmem:[#allocation3 + $0x1b0] sm:$0xff]
  %v1969 = vld [vmem:[#allocation3 + $0x1b8] sm:$0xff]
  %v1970 = vld [vmem:[#allocation3 + $0x1c0] sm:$0xff]
  %v1971 = vld [vmem:[#allocation3 + $0x1c8] sm:$0xff]
  %v1972 = vld [vmem:[#allocation3 + $0x1d0] sm:$0xff]
  %v1973 = vld [vmem:[#allocation3 + $0x1d8] sm:$0xff]
  %v1974 = vld [vmem:[#allocation3 + $0x1e0] sm:$0xff]
  %v1975 = vld [vmem:[#allocation3 + $0x1e8] sm:$0xff]
  %v1976 = vld [vmem:[#allocation3 + $0x1f0] sm:$0xff]
  %v1977 = vld [vmem:[#allocation3 + $0x1f8] sm:$0xff]
  %v1978 = vld [vmem:[#allocation3 + $0x200] sm:$0xff]
  %v1979 = vld [vmem:[#allocation3 + $0x208] sm:$0xff]
  %v1980 = vld [vmem:[#allocation3 + $0x210] sm:$0xff]
  %v1981 = vld [vmem:[#allocation3 + $0x218] sm:$0xff]
  %v1982 = vld [vmem:[#allocation3 + $0x220] sm:$0xff]
  %v1983 = vld [vmem:[#allocation3 + $0x228] sm:$0xff]
  %v1984 = vld [vmem:[#allocation3 + $0x230] sm:$0xff]
  %v1985 = vld [vmem:[#allocation3 + $0x238] sm:$0xff]
  %v1986 = vld [vmem:[%s6] sm:$0xff]
  %v1987 = vld [vmem:[%s6 + $0x8] sm:$0xff]
  %v1988 = vld [vmem:[%s6 + $0x10] sm:$0xff]
  %v1989 = vld [vmem:[%s6 + $0x18] sm:$0xff]
  %v1990 = vld [vmem:[%s6 + $0x20] sm:$0xff]
  %v1991 = vld [vmem:[%s6 + $0x28] sm:$0xff]
  %v1992 = vld [vmem:[%s6 + $0x30] sm:$0x1]
  %v1993 = vld [vmem:[%s6 + $0x38] sm:$0x1]
  %v1995 = vsel %vm161, %v1987, 0
  %v1998 = vsel %vm161, %v1989, 0
  %v2001 = vsel %vm161, %v1991, 0
  %v2004 = vsel %vm161, %v1993, 0
  %2006 = vmatprep.subr.mxu0 %v1915
  %2007 = vmatpush1.msra.mxu0 %v1914
  %2008 = vmatprep.subr.mxu0 %v1919
  %2009 = vmatpush1.msra.mxu0 %v1918
  %2010 = vmatprep.subr.mxu0 %v1923
  %2011 = vmatpush1.msra.mxu0 %v1922
  %2012 = vmatprep.subr.mxu0 %v1927
  %2013 = vmatpush1.msra.mxu0 %v1926
  %2014 = vmatprep.subr.mxu0 %v1931
  %2015 = vmatpush1.msra.mxu0 %v1930
  %2016 = vmatprep.subr.mxu0 %v1935
  %2017 = vmatpush1.msra.mxu0 %v1934
  %2018 = vmatprep.subr.mxu0 %v1939
  %2019 = vmatpush1.msra.mxu0 %v1938
  %2020 = vmatprep.subr.mxu0 %v1943
  %2021 = vmatpush1.msra.mxu0 %v1942
  %2022 = vmatprep.subr.mxu0 %v1947
  %2023 = vmatpush1.msra.mxu0 %v1946
  %2024 = vmatprep.subr.mxu0 %v1951
  %2025 = vmatpush1.msra.mxu0 %v1950
  %2026 = vmatprep.subr.mxu0 %v1955
  %2027 = vmatpush1.msra.mxu0 %v1954
  %2028 = vmatprep.subr.mxu0 %v1959
  %2029 = vmatpush1.msra.mxu0 %v1958
  %2030 = vmatprep.subr.mxu0 %v1963
  %2031 = vmatpush1.msra.mxu0 %v1962
  %2032 = vmatprep.subr.mxu0 %v1967
  %2033 = vmatpush1.msra.mxu0 %v1966
  %2034 = vmatprep.subr.mxu0 %v1971
  %2035 = vmatpush1.msra.mxu0 %v1970
  %2036 = vmatprep.subr.mxu0 %v1975
  %2037 = vmatpush1.msra.mxu0 %v1974
  %2038 = vmatprep.subr.mxu0 %v1979
  %2039 = vmatpush1.msra.mxu0 %v1978
  %2040 = vmatprep.subr.mxu0 %v1983
  %2041 = vmatpush1.msra.mxu0 %v1982
  %2042 = vmatprep.subr.mxu0 0.0
  %2043 = vmatpush1.msra.mxu0 0.0
  %2044 = vmatprep.subr.mxu0 0.0
  %2045 = vmatpush1.msra.mxu0 0.0
  %2046 = vmatprep.subr.mxu0 0.0
  %2047 = vmatpush1.msra.mxu0 0.0
  %2048 = vmatprep.subr.mxu0 0.0
  %2049 = vmatpush1.msra.mxu0 0.0
  %2050 = vmatprep.subr.mxu0 0.0
  %2051 = vmatpush1.msra.mxu0 0.0
  %2052 = vmatprep.subr.mxu0 0.0
  %2053 = vmatpush1.msra.mxu0 0.0
  %2054 = vmatprep.subr.mxu0 0.0
  %2055 = vmatpush1.msra.mxu0 0.0
  %2056 = vmatprep.subr.mxu0 0.0
  %2057 = vmatpush1.msra.mxu0 0.0
  %2058 = vmatprep.subr.mxu0 0.0
  %2059 = vmatpush1.msra.mxu0 0.0
  %2060 = vmatprep.subr.mxu0 0.0
  %2061 = vmatpush1.msra.mxu0 0.0
  %2062 = vmatprep.subr.mxu0 0.0
  %2063 = vmatpush1.msra.mxu0 0.0
  %2064 = vmatprep.subr.mxu0 0.0
  %2065 = vmatpush1.msra.mxu0 0.0
  %2066 = vmatprep.subr.mxu0 0.0
  %2067 = vmatpush1.msra.mxu0 0.0
  %2068 = vmatprep.subr.mxu0 0.0
  %2069 = vmatpush1.msra.mxu0 0.0
  %2070 = vmatprep.mubr.f32.mxu0 %v1995
  %2071 = vmatmul.mubr.f32.gmra.mrb[0].mxu0 %v1986
  %v2072 = vpop.f32.mrb[0].mxu0
  %v2073 = vadd.f32 0.0, %v2072
  %v2074 = vpop.f32.mrb[0].mxu0
  %v2075 = vadd.f32 0.0, %v2074
  %2076 = vmatprep.mubr.f32.mxu0 %v1998
  %2077 = vmatmul.mubr.f32.gmra.mrb[0].mxu0 %v1988
  %v2078 = vpop.f32.mrb[0].mxu0
  %v2079 = vadd.f32 0.0, %v2078
  %v2080 = vpop.f32.mrb[0].mxu0
  %v2081 = vadd.f32 0.0, %v2080
  %2082 = vmatprep.mubr.f32.mxu0 %v2001
  %2083 = vmatmul.mubr.f32.gmra.mrb[0].mxu0 %v1990
  %v2084 = vpop.f32.mrb[0].mxu0
  %v2085 = vadd.f32 0.0, %v2084
  %v2086 = vpop.f32.mrb[0].mxu0
  %v2087 = vadd.f32 0.0, %v2086
  %2088 = vmatprep.mubr.f32.mxu0 %v2004
  %2089 = vmatmul.mubr.f32.gmra.mrb[0].mxu0 %v1992
  %v2090 = vpop.f32.mrb[0].mxu0
  %v2091 = vadd.f32 0.0, %v2090
  %v2092 = vpop.f32.mrb[0].mxu0
  %v2093 = vadd.f32 0.0, %v2092
  %2094 = vdwg.mxu0
  %2095 = vmatprep.subr.mxu0 %v1917
  %2096 = vmatpush1.msra.mxu0 %v1916
  %2097 = vmatprep.subr.mxu0 %v1921
  %2098 = vmatpush1.msra.mxu0 %v1920
  %2099 = vmatprep.subr.mxu0 %v1925
  %2100 = vmatpush1.msra.mxu0 %v1924
  %2101 = vmatprep.subr.mxu0 %v1929
  %2102 = vmatpush1.msra.mxu0 %v1928
  %2103 = vmatprep.subr.mxu0 %v1933
  %2104 = vmatpush1.msra.mxu0 %v1932
  %2105 = vmatprep.subr.mxu0 %v1937
  %2106 = vmatpush1.msra.mxu0 %v1936
  %2107 = vmatprep.subr.mxu0 %v1941
  %2108 = vmatpush1.msra.mxu0 %v1940
  %2109 = vmatprep.subr.mxu0 %v1945
  %2110 = vmatpush1.msra.mxu0 %v1944
  %2111 = vmatprep.subr.mxu0 %v1949
  %2112 = vmatpush1.msra.mxu0 %v1948
  %2113 = vmatprep.subr.mxu0 %v1953
  %2114 = vmatpush1.msra.mxu0 %v1952
  %2115 = vmatprep.subr.mxu0 %v1957
  %2116 = vmatpush1.msra.mxu0 %v1956
  %2117 = vmatprep.subr.mxu0 %v1961
  %2118 = vmatpush1.msra.mxu0 %v1960
  %2119 = vmatprep.subr.mxu0 %v1965
  %2120 = vmatpush1.msra.mxu0 %v1964
  %2121 = vmatprep.subr.mxu0 %v1969
  %2122 = vmatpush1.msra.mxu0 %v1968
  %2123 = vmatprep.subr.mxu0 %v1973
  %2124 = vmatpush1.msra.mxu0 %v1972
  %2125 = vmatprep.subr.mxu0 %v1977
  %2126 = vmatpush1.msra.mxu0 %v1976
  %2127 = vmatprep.subr.mxu0 %v1981
  %2128 = vmatpush1.msra.mxu0 %v1980
  %2129 = vmatprep.subr.mxu0 %v1985
  %2130 = vmatpush1.msra.mxu0 %v1984
  %2131 = vmatprep.subr.mxu0 0.0
  %2132 = vmatpush1.msra.mxu0 0.0
  %2133 = vmatprep.subr.mxu0 0.0
  %2134 = vmatpush1.msra.mxu0 0.0
  %2135 = vmatprep.subr.mxu0 0.0
  %2136 = vmatpush1.msra.mxu0 0.0
  %2137 = vmatprep.subr.mxu0 0.0
  %2138 = vmatpush1.msra.mxu0 0.0
  %2139 = vmatprep.subr.mxu0 0.0
  %2140 = vmatpush1.msra.mxu0 0.0
  %2141 = vmatprep.subr.mxu0 0.0
  %2142 = vmatpush1.msra.mxu0 0.0
  %2143 = vmatprep.subr.mxu0 0.0
  %2144 = vmatpush1.msra.mxu0 0.0
  %2145 = vmatprep.subr.mxu0 0.0
  %2146 = vmatpush1.msra.mxu0 0.0
  %2147 = vmatprep.subr.mxu0 0.0
  %2148 = vmatpush1.msra.mxu0 0.0
  %2149 = vmatprep.subr.mxu0 0.0
  %2150 = vmatpush1.msra.mxu0 0.0
  %2151 = vmatprep.subr.mxu0 0.0
  %2152 = vmatpush1.msra.mxu0 0.0
  %2153 = vmatprep.subr.mxu0 0.0
  %2154 = vmatpush1.msra.mxu0 0.0
  %2155 = vmatprep.subr.mxu0 0.0
  %2156 = vmatpush1.msra.mxu0 0.0
  %2157 = vmatprep.subr.mxu0 0.0
  %2158 = vmatpush1.msra.mxu0 0.0
  %2159 = vmatprep.mubr.f32.mxu0 %v1995
  %2160 = vmatmul.mubr.f32.gmra.mrb[0].mxu0 %v1986
  %v2161 = vpop.f32.mrb[0].mxu0
  %v2162 = vadd.f32 0.0, %v2161
  %v2163 = vpop.f32.mrb[0].mxu0
  %v2164 = vadd.f32 0.0, %v2163
  %2165 = vmatprep.mubr.f32.mxu0 %v1998
  %2166 = vmatmul.mubr.f32.gmra.mrb[0].mxu0 %v1988
  %v2167 = vpop.f32.mrb[0].mxu0
  %v2168 = vadd.f32 0.0, %v2167
  %v2169 = vpop.f32.mrb[0].mxu0
  %v2170 = vadd.f32 0.0, %v2169
  %2171 = vmatprep.mubr.f32.mxu0 %v2001
  %2172 = vmatmul.mubr.f32.gmra.mrb[0].mxu0 %v1990
  %v2173 = vpop.f32.mrb[0].mxu0
  %v2174 = vadd.f32 0.0, %v2173
  %v2175 = vpop.f32.mrb[0].mxu0
  %v2176 = vadd.f32 0.0, %v2175
  %2177 = vmatprep.mubr.f32.mxu0 %v2004
  %2178 = vmatmul.mubr.f32.gmra.mrb[0].mxu0 %v1992
  %v2179 = vpop.f32.mrb[0].mxu0
  %v2180 = vadd.f32 0.0, %v2179
  %v2181 = vpop.f32.mrb[0].mxu0
  %v2182 = vadd.f32 0.0, %v2181
  %2183 = vdwg.mxu0
  %v2184 = vadd.f32 %v2073, %v2075
  %v2185 = vadd.f32 %v2184, %v2162
  %v2186 = vadd.f32 %v2185, %v2164
  %2187 = vadd.xlane.f32.xlu0 %v2186
  %v2188 = vpop.xlane.xlu0 %2187
  %v2189 = vadd.f32 %v2079, %v2081
  %v2190 = vadd.f32 %v2189, %v2168
  %v2191 = vadd.f32 %v2190, %v2170
  %2192 = vadd.xlane.f32.xlu0 %v2191
  %v2193 = vpop.xlane.xlu0 %2192
  %v2194 = vadd.f32 %v2085, %v2087
  %v2195 = vadd.f32 %v2194, %v2174
  %v2196 = vadd.f32 %v2195, %v2176
  %2197 = vadd.xlane.f32.xlu0 %v2196
  %v2198 = vpop.xlane.xlu0 %2197
  %vm2199 = vcmask 1040384
  %v2200 = vsel %vm2199, %v2091, 0.0
  %v2201 = vsel %vm2199, %v2093, 0.0
  %v2202 = vadd.f32 %v2200, %v2201
  %v2203 = vsel %vm2199, %v2180, 0.0
  %v2204 = vadd.f32 %v2202, %v2203
  %v2205 = vsel %vm2199, %v2182, 0.0
  %v2206 = vadd.f32 %v2204, %v2205
  %2207 = vadd.xlane.f32.xlu0 %v2206
  %v2208 = vpop.xlane.xlu0 %2207
  %v2209 = vmul.f32 %v2188, 0.001953125
  %v2210 = vmul.f32 %v2193, 0.001953125
  %v2211 = vmul.f32 %v2198, 0.001953125
  %v2212 = vmul.f32 %v2208, 0.001953125
  %v2213 = vmul.f32 %v2073, %v2073
  %v2214 = vmul.f32 %v2075, %v2075
  %v2215 = vmul.f32 %v2162, %v2162
  %v2216 = vmul.f32 %v2164, %v2164
  %v2217 = vmul.f32 %v2079, %v2079
  %v2218 = vmul.f32 %v2081, %v2081
  %v2219 = vmul.f32 %v2168, %v2168
  %v2220 = vmul.f32 %v2170, %v2170
  %v2221 = vmul.f32 %v2085, %v2085
  %v2222 = vmul.f32 %v2087, %v2087
  %v2223 = vmul.f32 %v2174, %v2174
  %v2224 = vmul.f32 %v2176, %v2176
  %v2225 = vmul.f32 %v2091, %v2091
  %v2226 = vmul.f32 %v2093, %v2093
  %v2227 = vmul.f32 %v2180, %v2180
  %v2228 = vmul.f32 %v2182, %v2182
  %v2229 = vadd.f32 %v2213, %v2214
  %v2230 = vadd.f32 %v2229, %v2215
  %v2231 = vadd.f32 %v2230, %v2216
  %2232 = vadd.xlane.f32.xlu0 %v2231
  %v2233 = vpop.xlane.xlu0 %2232
  %v2234 = vadd.f32 %v2217, %v2218
  %v2235 = vadd.f32 %v2234, %v2219
  %v2236 = vadd.f32 %v2235, %v2220
  %2237 = vadd.xlane.f32.xlu0 %v2236
  %v2238 = vpop.xlane.xlu0 %2237
  %v2239 = vadd.f32 %v2221, %v2222
  %v2240 = vadd.f32 %v2239, %v2223
  %v2241 = vadd.f32 %v2240, %v2224
  %2242 = vadd.xlane.f32.xlu0 %v2241
  %v2243 = vpop.xlane.xlu0 %2242
  %v2244 = vsel %vm2199, %v2225, 0.0
  %v2245 = vsel %vm2199, %v2226, 0.0
  %v2246 = vadd.f32 %v2244, %v2245
  %v2247 = vsel %vm2199, %v2227, 0.0
  %v2248 = vadd.f32 %v2246, %v2247
  %v2249 = vsel %vm2199, %v2228, 0.0
  %v2250 = vadd.f32 %v2248, %v2249
  %2251 = vadd.xlane.f32.xlu0 %v2250
  %v2252 = vpop.xlane.xlu0 %2251
  %v2253 = vmul.f32 %v2233, 0.001953125
  %v2254 = vmul.f32 %v2238, 0.001953125
  %v2255 = vmul.f32 %v2243, 0.001953125
  %v2256 = vmul.f32 %v2252, 0.001953125
  %v2257 = vmul.f32 %v2209, %v2209
  %v2258 = vmul.f32 %v2210, %v2210
  %v2259 = vmul.f32 %v2211, %v2211
  %v2260 = vmul.f32 %v2212, %v2212
  %v2261 = vsub.f32 %v2253, %v2257
  %v2262 = vsub.f32 %v2254, %v2258
  %v2263 = vsub.f32 %v2255, %v2259
  %v2264 = vsub.f32 %v2256, %v2260
  %v2265 = vsub.f32 %v2073, %v2209
  %v2266 = vsub.f32 %v2075, %v2209
  %v2267 = vsub.f32 %v2162, %v2209
  %v2268 = vsub.f32 %v2164, %v2209
  %v2269 = vsub.f32 %v2079, %v2210
  %v2270 = vsub.f32 %v2081, %v2210
  %v2271 = vsub.f32 %v2168, %v2210
  %v2272 = vsub.f32 %v2170, %v2210
  %v2273 = vsub.f32 %v2085, %v2211
  %v2274 = vsub.f32 %v2087, %v2211
  %v2275 = vsub.f32 %v2174, %v2211
  %v2276 = vsub.f32 %v2176, %v2211
  %v2277 = vsub.f32 %v2091, %v2212
  %v2278 = vsub.f32 %v2093, %v2212
  %v2279 = vsub.f32 %v2180, %v2212
  %v2280 = vsub.f32 %v2182, %v2212
  %v2281 = vadd.f32 %v2261, 1e-05
  %v2282 = vadd.f32 %v2262, 1e-05
  %v2283 = vadd.f32 %v2263, 1e-05
  %v2284 = vadd.f32 %v2264, 1e-05
  %v2285 = vrsqrt.pop %v2281
  %v2286 = vrsqrt.pop %v2282
  %v2287 = vrsqrt.pop %v2283
  %v2288 = vrsqrt.pop %v2284
  %v2289 = vmul.f32 %v2265, %v2285
  %v2290 = vmul.f32 %v2266, %v2285
  %v2291 = vmul.f32 %v2267, %v2285
  %v2292 = vmul.f32 %v2268, %v2285
  %v2293 = vmul.f32 %v2269, %v2286
  %v2294 = vmul.f32 %v2270, %v2286
  %v2295 = vmul.f32 %v2271, %v2286
  %v2296 = vmul.f32 %v2272, %v2286
  %v2297 = vmul.f32 %v2273, %v2287
  %v2298 = vmul.f32 %v2274, %v2287
  %v2299 = vmul.f32 %v2275, %v2287
  %v2300 = vmul.f32 %v2276, %v2287
  %v2301 = vmul.f32 %v2277, %v2288
  %v2302 = vmul.f32 %v2278, %v2288
  %v2303 = vmul.f32 %v2279, %v2288
  %v2304 = vmul.f32 %v2280, %v2288
  %v2305 = vmax.f32 %v2289, 0.0
  %v2306 = vmax.f32 %v2290, 0.0
  %v2307 = vmax.f32 %v2291, 0.0
  %v2308 = vmax.f32 %v2292, 0.0
  %v2309 = vmax.f32 %v2293, 0.0
  %v2310 = vmax.f32 %v2294, 0.0
  %v2311 = vmax.f32 %v2295, 0.0
  %v2312 = vmax.f32 %v2296, 0.0
  %v2313 = vmax.f32 %v2297, 0.0
  %v2314 = vmax.f32 %v2298, 0.0
  %v2315 = vmax.f32 %v2299, 0.0
  %v2316 = vmax.f32 %v2300, 0.0
  %v2317 = vmax.f32 %v2301, 0.0
  %v2318 = vmax.f32 %v2302, 0.0
  %v2319 = vmax.f32 %v2303, 0.0
  %v2320 = vmax.f32 %v2304, 0.0
  %v2321 = vmax.f32 %v2305, %v2309
  %v2322 = vmax.f32 %v2321, %v2313
  %v2323 = vsel %vm2199, %v2317, -inf
  %v2324 = vmax.f32 %v2322, %v2323
  %v2325 = vrot.slane %v2324, 4
  %v2326 = vmax.f32 %v2324, %v2325
  %v2327 = vrot.slane %v2326, 2
  %v2328 = vmax.f32 %v2326, %v2327
  %v2329 = vrot.slane %v2328, 1
  %v2330 = vmax.f32 %v2328, %v2329
  %v2331 = vmax.f32 %v2306, %v2310
  %v2332 = vmax.f32 %v2331, %v2314
  %v2333 = vsel %vm2199, %v2318, -inf
  %v2334 = vmax.f32 %v2332, %v2333
  %v2335 = vrot.slane %v2334, 4
  %v2336 = vmax.f32 %v2334, %v2335
  %v2337 = vrot.slane %v2336, 2
  %v2338 = vmax.f32 %v2336, %v2337
  %v2339 = vrot.slane %v2338, 1
  %v2340 = vmax.f32 %v2338, %v2339
  %v2341 = vmax.f32 %v2307, %v2311
  %v2342 = vmax.f32 %v2341, %v2315
  %v2343 = vsel %vm2199, %v2319, -inf
  %v2344 = vmax.f32 %v2342, %v2343
  %v2345 = vrot.slane %v2344, 4
  %v2346 = vmax.f32 %v2344, %v2345
  %v2347 = vrot.slane %v2346, 2
  %v2348 = vmax.f32 %v2346, %v2347
  %v2349 = vrot.slane %v2348, 1
  %v2350 = vmax.f32 %v2348, %v2349
  %v2351 = vmax.f32 %v2308, %v2312
  %v2352 = vmax.f32 %v2351, %v2316
  %v2353 = vsel %vm2199, %v2320, -inf
  %v2354 = vmax.f32 %v2352, %v2353
  %v2355 = vrot.slane %v2354, 4
  %v2356 = vmax.f32 %v2354, %v2355
  %v2357 = vrot.slane %v2356, 2
  %v2358 = vmax.f32 %v2356, %v2357
  %v2359 = vrot.slane %v2358, 1
  %v2360 = vmax.f32 %v2358, %v2359
  %v2361 = vsub.f32 %v2305, %v2330
  %v2362 = vsub.f32 %v2306, %v2340
  %v2363 = vsub.f32 %v2307, %v2350
  %v2364 = vsub.f32 %v2308, %v2360
  %v2365 = vsub.f32 %v2309, %v2330
  %v2366 = vsub.f32 %v2310, %v2340
  %v2367 = vsub.f32 %v2311, %v2350
  %v2368 = vsub.f32 %v2312, %v2360
  %v2369 = vsub.f32 %v2313, %v2330
  %v2370 = vsub.f32 %v2314, %v2340
  %v2371 = vsub.f32 %v2315, %v2350
  %v2372 = vsub.f32 %v2316, %v2360
  %v2373 = vsub.f32 %v2317, %v2330
  %v2374 = vsub.f32 %v2318, %v2340
  %v2375 = vsub.f32 %v2319, %v2350
  %v2376 = vsub.f32 %v2320, %v2360
  %v2377 = vmul.f32 %v2361, 1.442695
  %v2378 = vpow.pop %v2377
  %v2379 = vmul.f32 %v2362, 1.442695
  %v2380 = vpow.pop %v2379
  %v2381 = vmul.f32 %v2363, 1.442695
  %v2382 = vpow.pop %v2381
  %v2383 = vmul.f32 %v2364, 1.442695
  %v2384 = vpow.pop %v2383
  %v2385 = vmul.f32 %v2365, 1.442695
  %v2386 = vpow.pop %v2385
  %v2387 = vmul.f32 %v2366, 1.442695
  %v2388 = vpow.pop %v2387
  %v2389 = vmul.f32 %v2367, 1.442695
  %v2390 = vpow.pop %v2389
  %v2391 = vmul.f32 %v2368, 1.442695
  %v2392 = vpow.pop %v2391
  %v2393 = vmul.f32 %v2369, 1.442695
  %v2394 = vpow.pop %v2393
  %v2395 = vmul.f32 %v2370, 1.442695
  %v2396 = vpow.pop %v2395
  %v2397 = vmul.f32 %v2371, 1.442695
  %v2398 = vpow.pop %v2397
  %v2399 = vmul.f32 %v2372, 1.442695
  %v2400 = vpow.pop %v2399
  %v2401 = vmul.f32 %v2373, 1.442695
  %v2402 = vpow.pop %v2401
  %v2403 = vmul.f32 %v2374, 1.442695
  %v2404 = vpow.pop %v2403
  %v2405 = vmul.f32 %v2375, 1.442695
  %v2406 = vpow.pop %v2405
  %v2407 = vmul.f32 %v2376, 1.442695
  %v2408 = vpow.pop %v2407
  %v2409 = vadd.f32 %v2378, %v2386
  %v2410 = vadd.f32 %v2409, %v2394
  %v2411 = vsel %vm2199, %v2402, 0.0
  %v2412 = vadd.f32 %v2410, %v2411
  %v2413 = vrot.slane %v2412, 4
  %v2414 = vadd.f32 %v2412, %v2413
  %v2415 = vrot.slane %v2414, 2
  %v2416 = vadd.f32 %v2414, %v2415
  %v2417 = vrot.slane %v2416, 1
  %v2418 = vadd.f32 %v2416, %v2417
  %v2419 = vadd.f32 %v2380, %v2388
  %v2420 = vadd.f32 %v2419, %v2396
  %v2421 = vsel %vm2199, %v2404, 0.0
  %v2422 = vadd.f32 %v2420, %v2421
  %v2423 = vrot.slane %v2422, 4
  %v2424 = vadd.f32 %v2422, %v2423
  %v2425 = vrot.slane %v2424, 2
  %v2426 = vadd.f32 %v2424, %v2425
  %v2427 = vrot.slane %v2426, 1
  %v2428 = vadd.f32 %v2426, %v2427
  %v2429 = vadd.f32 %v2382, %v2390
  %v2430 = vadd.f32 %v2429, %v2398
  %v2431 = vsel %vm2199, %v2406, 0.0
  %v2432 = vadd.f32 %v2430, %v2431
  %v2433 = vrot.slane %v2432, 4
  %v2434 = vadd.f32 %v2432, %v2433
  %v2435 = vrot.slane %v2434, 2
  %v2436 = vadd.f32 %v2434, %v2435
  %v2437 = vrot.slane %v2436, 1
  %v2438 = vadd.f32 %v2436, %v2437
  %v2439 = vadd.f32 %v2384, %v2392
  %v2440 = vadd.f32 %v2439, %v2400
  %v2441 = vsel %vm2199, %v2408, 0.0
  %v2442 = vadd.f32 %v2440, %v2441
  %v2443 = vrot.slane %v2442, 4
  %v2444 = vadd.f32 %v2442, %v2443
  %v2445 = vrot.slane %v2444, 2
  %v2446 = vadd.f32 %v2444, %v2445
  %v2447 = vrot.slane %v2446, 1
  %v2448 = vadd.f32 %v2446, %v2447
  %v2449 = vrcp.pop %v2418
  %v2450 = vmul.f32 1.0, %v2449
  %v2451 = vrcp.pop %v2428
  %v2452 = vmul.f32 1.0, %v2451
  %v2453 = vrcp.pop %v2438
  %v2454 = vmul.f32 1.0, %v2453
  %v2455 = vrcp.pop %v2448
  %v2456 = vmul.f32 1.0, %v2455
  %v2457 = vmul.f32 %v2378, %v2450
  %v2458 = vmul.f32 %v2380, %v2452
  %v2459 = vmul.f32 %v2382, %v2454
  %v2460 = vmul.f32 %v2384, %v2456
  %v2461 = vmul.f32 %v2386, %v2450
  %v2462 = vmul.f32 %v2388, %v2452
  %v2463 = vmul.f32 %v2390, %v2454
  %v2464 = vmul.f32 %v2392, %v2456
  %v2465 = vmul.f32 %v2394, %v2450
  %v2466 = vmul.f32 %v2396, %v2452
  %v2467 = vmul.f32 %v2398, %v2454
  %v2468 = vmul.f32 %v2400, %v2456
  %v2469 = vmul.f32 %v2402, %v2450
  %v2470 = vmul.f32 %v2404, %v2452
  %v2471 = vmul.f32 %v2406, %v2454
  %v2472 = vmul.f32 %v2408, %v2456
  %2473 = vst [vmem:[%s7] sm:$0xff] %v2457
  %2474 = vst [vmem:[%s7 + $0x8] sm:$0xff] %v2458
  %2475 = vst [vmem:[%s7 + $0x10] sm:$0xff] %v2461
  %2476 = vst [vmem:[%s7 + $0x18] sm:$0xff] %v2462
  %2477 = vst [vmem:[%s7 + $0x20] sm:$0xff] %v2465
  %2478 = vst [vmem:[%s7 + $0x28] sm:$0xff] %v2466
  %2479 = vst [vmem:[%s7 + $0x30] sm:$0x1] %v2469
  %2480 = vst [vmem:[%s7 + $0x38] sm:$0x1] %v2470
  %s2481 = scalar_lea.vmem %s7, 64
  %2482 = vst [vmem:[%s2481] sm:$0xff] %v2459
  %2483 = vst [vmem:[%s2481 + $0x8] sm:$0xff] %v2460
  %2484 = vst [vmem:[%s2481 + $0x10] sm:$0xff] %v2463
  %2485 = vst [vmem:[%s2481 + $0x18] sm:$0xff] %v2464
  %2486 = vst [vmem:[%s2481 + $0x20] sm:$0xff] %v2467
  %2487 = vst [vmem:[%s2481 + $0x28] sm:$0xff] %v2468
  %2488 = vst [vmem:[%s2481 + $0x30] sm:$0x1] %v2471
  %2489 = vst [vmem:[%s2481 + $0x38] sm:$0x1] %v2472
  // Predicated region
  $region30: #{base_forward.1} parent=0 // pred_check
    _
  $region31: #{base_forward.1} parent=0 // pred_check_branch
    %2491 = sbr.rel (0) target = $region33
  $region32: #{base_forward.1} parent=0 // pred_region
    _
  $region33: #{base_forward.1} parent=0 // pred_fallthru
    _
  // Predicated region
  $region34: #{base_forward.1} parent=0 // pred_check
    _
  $region35: #{base_forward.1} parent=0 // pred_check_branch
    %2493 = sbr.rel (0) target = $region37
  $region36: #{base_forward.1} parent=0 // pred_region
    _
  $region37: #{base_forward.1} parent=0 // pred_fallthru
    _

</llo_original>
